<compile_context>
chip_gen: v5e
topology: v5e:2x2
jax: 0.10.0
libtpu: 0.0.40
codegen_flags: <defaults>
</compile_context>

<pallas_src>
import math
import functools

import jax
import jax.numpy as jnp
from jax import lax
from jax.experimental import pallas as pl
from jax.experimental.pallas import tpu as pltpu

EPS = 1e-8
EPS2 = EPS * EPS


def _ffn_residual_kernel(x_ref, g_pre_ref, w_in_ref, g_hid_ref, w_out_ref, o_ref):
    TB, C, M = x_ref.shape
    H = w_in_ref.shape[0]

    x = x_ref[...]                                                     # (TB, C, M) f32

    # --- (1) pre CoordNorm: fused rsqrt, gamma folded into the tiny per-(b,c) scale ---
    ss = jnp.sum(x * x, axis=-1, keepdims=True)                        # (TB, C, 1)
    xn = x * (g_pre_ref[...] * lax.rsqrt(jnp.maximum(ss, EPS2)))       # (TB, C, M)

    # --- (2) project in: batched MXU contraction over channels, no relayout ---
    w_in_b = jnp.broadcast_to(w_in_ref[...], (TB, H, C))               # (TB, H, C)
    h = jnp.einsum("bhc,bcm->bhm", w_in_b, xn,
                   preferred_element_type=jnp.float32)                 # (TB, H, M)

    # --- (3) hidden CoordNorm: one lane reduction over the coordinate axis ---
    ssh = jnp.sum(h * h, axis=-1, keepdims=True)                       # (TB, H, 1)
    hn = h * (g_hid_ref[...] * lax.rsqrt(jnp.maximum(ssh, EPS2)))      # (TB, H, M)

    # --- nonlinearity (GELU, tanh approximation) on the lane-dense slab ---
    hg = jax.nn.gelu(hn, approximate=True)                             # (TB, H, M)

    # --- (4) project out + (5) residual; single full lane-dense block store ---
    w_out_b = jnp.broadcast_to(w_out_ref[...], (TB, C, H))             # (TB, C, H)
    out = jnp.einsum("bch,bhm->bcm", w_out_b, hg,
                     preferred_element_type=jnp.float32)               # (TB, C, M)
    o_ref[...] = (out + x).astype(o_ref.dtype)


@functools.partial(jax.jit, static_argnames=("block_b",))
def feed_forward_residual_block(features, gamma_pre, w_in, gamma_hid, w_out, *, block_b=128):
    """features: (B, C, M) float32. Returns (B, C, M)."""
    B, C, M = features.shape
    H = w_in.shape[0]
    assert w_in.shape == (H, C)
    assert w_out.shape == (C, H)
    assert gamma_pre.shape == (C, 1)
    assert gamma_hid.shape == (H, 1)

    # Batch tile: big enough to amortise per-grid-step overhead (~512 KiB input block at
    # C=8, M=128, TB=128), small enough to stay well inside VMEM on v7x (64 MiB) and v5e/v6e.
    TB = min(block_b, B)
    Bp = ((B + TB - 1) // TB) * TB
    x = features
    if Bp != B:
        x = jnp.pad(features, ((0, Bp - B), (0, 0), (0, 0)))           # zero rows stay finite

    grid = (Bp // TB,)
    x_spec = pl.BlockSpec((TB, C, M), lambda b: (b, 0, 0))
    rep2d = lambda shape: pl.BlockSpec(shape, lambda b: (0, 0))        # replicated params

    flops = 4 * Bp * C * H * M                         # two dense projections
    transcendentals = Bp * H * M + Bp * (C + H)        # tanh (GELU) + rsqrt's
    bytes_accessed = 4 * (2 * Bp * C * M + H * C + C * H + C + H)

    out = pl.pallas_call(
        _ffn_residual_kernel,
        out_shape=jax.ShapeDtypeStruct((Bp, C, M), features.dtype),
        grid_spec=pltpu.PrefetchScalarGridSpec(
            num_scalar_prefetch=0,
            grid=grid,
            in_specs=[
                x_spec,
                rep2d((C, 1)),   # gamma_pre
                rep2d((H, C)),   # w_in  (project_in)
                rep2d((H, 1)),   # gamma_hid
                rep2d((C, H)),   # w_out (project_out)
            ],
            out_specs=x_spec,
        ),
        compiler_params=pltpu.CompilerParams(
            dimension_semantics=("parallel",),
            vmem_limit_bytes=48 * 1024 * 1024,
        ),
        cost_estimate=pl.CostEstimate(
            flops=flops,
            transcendentals=transcendentals,
            bytes_accessed=bytes_accessed,
        ),
    )(x, gamma_pre, w_in, gamma_hid, w_out)

    return out[:B] if Bp != B else out


def _reference(features, gamma_pre, w_in, gamma_hid, w_out):
    """Pure-JAX reference (faithful to the assumed module semantics)."""
    nrm = jnp.sqrt(jnp.sum(features * features, axis=-1, keepdims=True))
    xn = features / jnp.maximum(nrm, EPS) * gamma_pre[None]
    h = jnp.einsum("hc,bcm->bhm", w_in, xn)
    nrm_h = jnp.sqrt(jnp.sum(h * h, axis=-1, keepdims=True))
    hn = h / jnp.maximum(nrm_h, EPS) * gamma_hid[None]
    hg = jax.nn.gelu(hn, approximate=True)
    return jnp.einsum("ch,bhm->bcm", w_out, hg) + features


if __name__ == "__main__":
    # Small demo: dim_in=8, mult=4 -> dim_hidden=32, coordinate axis M=128 (lane-aligned).
    # B=48 with block_b=32 exercises both multi-tile grids (grid=2) and batch padding.
    B, C, M = 48, 8, 128
    mult = 4
    H = C * mult

    key = jax.random.PRNGKey(0)
    k_x, k_win, k_wout, k_gp, k_gh = jax.random.split(key, 5)

    features = jax.random.normal(k_x, (B, C, M), dtype=jnp.float32)

    # Parameter init mirroring the PyTorch __init__ (CoordNorm scales perturbed from ones
    # so the learned-scale path is actually exercised).
    w_in = jax.random.normal(k_win, (H, C), dtype=jnp.float32) * (1.0 / math.sqrt(C))
    w_out = jax.random.normal(k_wout, (C, H), dtype=jnp.float32) * (1.0 / math.sqrt(H))
    gamma_pre = 1.0 + 0.1 * jax.random.normal(k_gp, (C, 1), dtype=jnp.float32)
    gamma_hid = 1.0 + 0.1 * jax.random.normal(k_gh, (H, 1), dtype=jnp.float32)

    out = feed_forward_residual_block(features, gamma_pre, w_in, gamma_hid, w_out, block_b=32)
    out = jax.block_until_ready(out)

    ref = _reference(features, gamma_pre, w_in, gamma_hid, w_out)
    assert out.shape == (B, C, M)
    max_err = float(jnp.max(jnp.abs(out - ref)))
    assert jnp.allclose(out, ref, atol=1e-4, rtol=1e-4), f"mismatch vs JAX reference (max abs err {max_err})"

    print("KERNEL_OK")
</pallas_src>

<mosaic_0001>
module attributes {stable_mosaic.version = 11 : i64} {
  func.func @_ffn_residual_kernel(%arg0: i32, %arg1: memref<32x8x128xf32, #tpu.memory_space<vmem>>, %arg2: memref<8x1xf32, #tpu.memory_space<vmem>>, %arg3: memref<32x8xf32, #tpu.memory_space<vmem>>, %arg4: memref<32x1xf32, #tpu.memory_space<vmem>>, %arg5: memref<8x32xf32, #tpu.memory_space<vmem>>, %arg6: memref<32x8x128xf32, #tpu.memory_space<vmem>>) attributes {dimension_semantics = [#tpu.dimension_semantics<parallel>], iteration_bounds = array<i64: 2>, scalar_prefetch = 0 : i64, scratch_operands = 0 : i64, tpu.core_type = #tpu.core_type<tc>, window_params = [{transform_indices = @transform_0, window_bounds = array<i64: 32, 8, 128>}, {pipeline_mode = #tpu.pipeline_mode<synchronous>, transform_indices = @transform_1, window_bounds = array<i64: 8, 1>}, {pipeline_mode = #tpu.pipeline_mode<synchronous>, transform_indices = @transform_2, window_bounds = array<i64: 32, 8>}, {pipeline_mode = #tpu.pipeline_mode<synchronous>, transform_indices = @transform_3, window_bounds = array<i64: 32, 1>}, {pipeline_mode = #tpu.pipeline_mode<synchronous>, transform_indices = @transform_4, window_bounds = array<i64: 8, 32>}, {transform_indices = @transform_5, window_bounds = array<i64: 32, 8, 128>}]} {
    %c0 = arith.constant 0 : index
    %c0_0 = arith.constant 0 : index
    %c0_1 = arith.constant 0 : index
    %0 = vector.load %arg1[%c0, %c0_0, %c0_1] : memref<32x8x128xf32, #tpu.memory_space<vmem>>, vector<32x8x128xf32>
    %1 = arith.mulf %0, %0 : vector<32x8x128xf32>
    %cst = arith.constant dense<0.000000e+00> : vector<32x8xf32>
    %2 = vector.multi_reduction <add>, %1, %cst [2] : vector<32x8x128xf32> to vector<32x8xf32>
    %3 = vector.shape_cast %2 : vector<32x8xf32> to vector<32x8x1xf32>
    %c0_2 = arith.constant 0 : index
    %c0_3 = arith.constant 0 : index
    %4 = vector.load %arg2[%c0_2, %c0_3] : memref<8x1xf32, #tpu.memory_space<vmem>>, vector<8x1xf32>
    %cst_4 = arith.constant 1.000000e-16 : f32
    %5 = vector.broadcast %cst_4 : f32 to vector<32x8x1xf32>
    %6 = arith.maximumf %3, %5 : vector<32x8x1xf32>
    %7 = math.rsqrt %6 : vector<32x8x1xf32>
    %8 = vector.shape_cast %4 : vector<8x1xf32> to vector<1x8x1xf32>
    %9 = vector.broadcast %8 : vector<1x8x1xf32> to vector<32x8x1xf32>
    %10 = arith.mulf %9, %7 : vector<32x8x1xf32>
    %11 = vector.broadcast %10 : vector<32x8x1xf32> to vector<32x8x128xf32>
    %12 = arith.mulf %0, %11 : vector<32x8x128xf32>
    %c0_5 = arith.constant 0 : index
    %c0_6 = arith.constant 0 : index
    %13 = vector.load %arg3[%c0_5, %c0_6] : memref<32x8xf32, #tpu.memory_space<vmem>>, vector<32x8xf32>
    %14 = vector.shape_cast %13 : vector<32x8xf32> to vector<1x32x8xf32>
    %15 = vector.broadcast %14 : vector<1x32x8xf32> to vector<32x32x8xf32>
    "tpu.trace_start"() <{level = 10 : i32, message = "bhc,bcm->bhm"}> : () -> ()
    %cst_7 = arith.constant dense<0.000000e+00> : vector<32x32x128xf32>
    %16 = tpu.matmul %15, %12, %cst_7 {dimension_numbers = #tpu.dot_dimension_numbers<[2], [1], [1], [2], [0, 0, 0, 1, 1, 2], [0], [0]>} : vector<32x32x8xf32>, vector<32x8x128xf32>, vector<32x32x128xf32> -> vector<32x32x128xf32>
    "tpu.trace_stop"() : () -> ()
    %17 = arith.mulf %16, %16 : vector<32x32x128xf32>
    %cst_8 = arith.constant dense<0.000000e+00> : vector<32x32xf32>
    %18 = vector.multi_reduction <add>, %17, %cst_8 [2] : vector<32x32x128xf32> to vector<32x32xf32>
    %19 = vector.shape_cast %18 : vector<32x32xf32> to vector<32x32x1xf32>
    %c0_9 = arith.constant 0 : index
    %c0_10 = arith.constant 0 : index
    %20 = vector.load %arg4[%c0_9, %c0_10] : memref<32x1xf32, #tpu.memory_space<vmem>>, vector<32x1xf32>
    %cst_11 = arith.constant 1.000000e-16 : f32
    %21 = vector.broadcast %cst_11 : f32 to vector<32x32x1xf32>
    %22 = arith.maximumf %19, %21 : vector<32x32x1xf32>
    %23 = math.rsqrt %22 : vector<32x32x1xf32>
    %24 = vector.shape_cast %20 : vector<32x1xf32> to vector<1x32x1xf32>
    %25 = vector.broadcast %24 : vector<1x32x1xf32> to vector<32x32x1xf32>
    %26 = arith.mulf %25, %23 : vector<32x32x1xf32>
    %27 = vector.broadcast %26 : vector<32x32x1xf32> to vector<32x32x128xf32>
    %28 = arith.mulf %16, %27 : vector<32x32x128xf32>
    %29 = arith.mulf %28, %28 : vector<32x32x128xf32>
    %30 = arith.mulf %28, %29 : vector<32x32x128xf32>
    %cst_12 = arith.constant 4.471500e-02 : f32
    %31 = vector.broadcast %cst_12 : f32 to vector<32x32x128xf32>
    %32 = arith.mulf %31, %30 : vector<32x32x128xf32>
    %33 = arith.addf %28, %32 : vector<32x32x128xf32>
    %cst_13 = arith.constant 0.797884583 : f32
    %34 = vector.broadcast %cst_13 : f32 to vector<32x32x128xf32>
    %35 = arith.mulf %34, %33 : vector<32x32x128xf32>
    %36 = math.tanh %35 : vector<32x32x128xf32>
    %cst_14 = arith.constant 1.000000e+00 : f32
    %37 = vector.broadcast %cst_14 : f32 to vector<32x32x128xf32>
    %38 = arith.addf %37, %36 : vector<32x32x128xf32>
    %cst_15 = arith.constant 5.000000e-01 : f32
    %39 = vector.broadcast %cst_15 : f32 to vector<32x32x128xf32>
    %40 = arith.mulf %39, %38 : vector<32x32x128xf32>
    %41 = arith.mulf %28, %40 : vector<32x32x128xf32>
    %c0_16 = arith.constant 0 : index
    %c0_17 = arith.constant 0 : index
    %42 = vector.load %arg5[%c0_16, %c0_17] : memref<8x32xf32, #tpu.memory_space<vmem>>, vector<8x32xf32>
    %43 = vector.shape_cast %42 : vector<8x32xf32> to vector<1x8x32xf32>
    %44 = vector.broadcast %43 : vector<1x8x32xf32> to vector<32x8x32xf32>
    "tpu.trace_start"() <{level = 10 : i32, message = "bch,bhm->bcm"}> : () -> ()
    %cst_18 = arith.constant dense<0.000000e+00> : vector<32x8x128xf32>
    %45 = tpu.matmul %44, %41, %cst_18 {dimension_numbers = #tpu.dot_dimension_numbers<[2], [1], [1], [2], [0, 0, 0, 1, 1, 2], [0], [0]>} : vector<32x8x32xf32>, vector<32x32x128xf32>, vector<32x8x128xf32> -> vector<32x8x128xf32>
    "tpu.trace_stop"() : () -> ()
    %46 = arith.addf %45, %0 : vector<32x8x128xf32>
    %c0_19 = arith.constant 0 : index
    %c0_20 = arith.constant 0 : index
    %c0_21 = arith.constant 0 : index
    %47 = vector.load %arg6[%c0_19, %c0_20, %c0_21] : memref<32x8x128xf32, #tpu.memory_space<vmem>>, vector<32x8x128xf32>
    tpu.vector_store %arg6[%c0_19, %c0_20, %c0_21], %46 {strides = array<i32>} : memref<32x8x128xf32, #tpu.memory_space<vmem>>, vector<32x8x128xf32>,
    return
  }
  func.func @transform_0(%arg0: i32) -> (i32, i32, i32) {
    %c0_i32 = arith.constant 0 : i32
    %c0_i32_0 = arith.constant 0 : i32
    %c0_i32_1 = arith.constant 0 : i32
    return %arg0, %c0_i32, %c0_i32_0 : i32, i32, i32
  }
  func.func @transform_1(%arg0: i32) -> (i32, i32) {
    %c0_i32 = arith.constant 0 : i32
    %c0_i32_0 = arith.constant 0 : i32
    %c0_i32_1 = arith.constant 0 : i32
    return %c0_i32, %c0_i32_0 : i32, i32
  }
  func.func @transform_2(%arg0: i32) -> (i32, i32) {
    %c0_i32 = arith.constant 0 : i32
    %c0_i32_0 = arith.constant 0 : i32
    %c0_i32_1 = arith.constant 0 : i32
    return %c0_i32, %c0_i32_0 : i32, i32
  }
  func.func @transform_3(%arg0: i32) -> (i32, i32) {
    %c0_i32 = arith.constant 0 : i32
    %c0_i32_0 = arith.constant 0 : i32
    %c0_i32_1 = arith.constant 0 : i32
    return %c0_i32, %c0_i32_0 : i32, i32
  }
  func.func @transform_4(%arg0: i32) -> (i32, i32) {
    %c0_i32 = arith.constant 0 : i32
    %c0_i32_0 = arith.constant 0 : i32
    %c0_i32_1 = arith.constant 0 : i32
    return %c0_i32, %c0_i32_0 : i32, i32
  }
  func.func @transform_5(%arg0: i32) -> (i32, i32, i32) {
    %c0_i32 = arith.constant 0 : i32
    %c0_i32_0 = arith.constant 0 : i32
    %c0_i32_1 = arith.constant 0 : i32
    return %arg0, %c0_i32, %c0_i32_0 : i32, i32, i32
  }
}

</mosaic_0001>

<llo_original>
// kernel: feed_forward_residual_block.1
$region0: #{feed_forward_residual_block.1}
  #allocation0 [shape = 'u32[]', space=smem, size = 0x4, offset = 0x4, fixed_abs, tag = 'smem constant byte address 0x4 - core index']
  #allocation1 [shape = 'u32[72,128]{1,0:T(1,128)}', space=vmem, size = 0x9000, scoped, tag = 'internal scratch']
  %s0 = inlined_call_operand.vmem [shape: f32[64,8,128], index: 0, kind: input, shape index: {}]
  %s1 = inlined_call_operand.vmem [shape: f32[8,1], index: 1, kind: input, shape index: {}]
  %s2 = inlined_call_operand.vmem [shape: f32[32,8], index: 2, kind: input, shape index: {}]
  %s3 = inlined_call_operand.vmem [shape: f32[32,1], index: 3, kind: input, shape index: {}]
  %s4 = inlined_call_operand.vmem [shape: f32[8,32], index: 4, kind: input, shape index: {}]
  %s5 = inlined_call_operand.vmem [shape: f32[64,8,128], index: 5, kind: output, shape index: {}]
  %s6 = sld [smem:[#allocation0]]
  $region53: #{feed_forward_residual_block.1} parent=0
    _
  %s8 = ssub.s32 1, %s6
  %s9 = scalar_select 0, %s8, %s6
  loop: start=0, step=1, limit=4
  $region2: #{feed_forward_residual_block.1} parent=0 // loop_pre_header
    _
  $region3: #{feed_forward_residual_block.1} parent=0 // loop_header
    %s11 = sphi 0, %s15
    %p12 = scmp.ge.s32.totalorder %s11, 4
    %s21 = sphi 0, %s23
    %s24 = sphi 0, %s21
    %s25 = sphi 0, %s24
    %s41 = sphi 0, %s25
    %s45 = sphi 0, %s45
    %s47 = sphi 0, %s45
    %s48 = sphi 0, %s47
    %s62 = sphi 0, %s48
    %s66 = sphi 0, %s66
    %s68 = sphi 0, %s66
    %s69 = sphi 0, %s68
    %s83 = sphi 0, %s69
    %s87 = sphi 0, %s87
    %s89 = sphi 0, %s87
    %s90 = sphi 0, %s89
    %s104 = sphi 0, %s90
    %s108 = sphi 0, %s108
    %s110 = sphi 0, %s108
    %s111 = sphi 0, %s110
    %s125 = sphi 0, %s111
    %s131 = sphi 0, %s133
    %s134 = sphi 0, %s131
    %s135 = sphi 0, %s134
    %s151 = sphi 0, %s135
  $region4: #{feed_forward_residual_block.1} parent=0 // loop_header_branch
    %14 = sbr.rel (%p12) target = $region8
  $region5: #{feed_forward_residual_block.1} parent=0 // loop_body
    %s16 = ssub.s32 %s11, 1
    %s17 = ssub.s32 %s11, 2
    %s18 = sadd.s32 %s11, 1
    %s19 = ssub.s32 %s11, %s18
    %p20 = scmp.eq.s32.totalorder %s19, 0
    %s22 = sadd.s32 %s21, 1
    %s23 = scalar_select %p20, %s21, %s22
    %p26 = pneg %p20
    %p27 = scmp.eq.s32.totalorder %s11, 1
    %p28 = por %p26, %p27
    %p29 = scmp.ne.s32.totalorder %s21, %s24
    %p30 = scmp.eq.s32.totalorder %s11, 0
    %p31 = por %p29, %p30
    %p32 = scmp.ne.s32.totalorder %s21, %s24
    %p33 = scmp.eq.s32.totalorder %s16, 1
    %p34 = por %p32, %p33
    %p35 = scmp.ne.s32.totalorder %s24, %s25
    %p36 = scmp.eq.s32.totalorder %s16, 0
    %p37 = por %p35, %p36
    %p38 = scmp.ne.s32.totalorder %s24, %s25
    %p39 = scmp.eq.s32.totalorder %s17, 1
    %p40 = por %p38, %p39
    %p42 = scmp.ne.s32.totalorder %s25, %s41
    %p43 = scmp.eq.s32.totalorder %s17, 0
    %p44 = por %p42, %p43
    %s46 = sadd.s32 %s45, 1
    %p49 = scmp.eq.s32.totalorder %s11, 1
    %p50 = scmp.ne.s32.totalorder %s45, %s47
    %p51 = scmp.eq.s32.totalorder %s11, 0
    %p52 = por %p50, %p51
    %p53 = scmp.ne.s32.totalorder %s45, %s47
    %p54 = scmp.eq.s32.totalorder %s16, 1
    %p55 = por %p53, %p54
    %p56 = scmp.ne.s32.totalorder %s47, %s48
    %p57 = scmp.eq.s32.totalorder %s16, 0
    %p58 = por %p56, %p57
    %p59 = scmp.ne.s32.totalorder %s47, %s48
    %p60 = scmp.eq.s32.totalorder %s17, 1
    %p61 = por %p59, %p60
    %p63 = scmp.ne.s32.totalorder %s48, %s62
    %p64 = scmp.eq.s32.totalorder %s17, 0
    %p65 = por %p63, %p64
    %s67 = sadd.s32 %s66, 1
    %p70 = scmp.eq.s32.totalorder %s11, 1
    %p71 = scmp.ne.s32.totalorder %s66, %s68
    %p72 = scmp.eq.s32.totalorder %s11, 0
    %p73 = por %p71, %p72
    %p74 = scmp.ne.s32.totalorder %s66, %s68
    %p75 = scmp.eq.s32.totalorder %s16, 1
    %p76 = por %p74, %p75
    %p77 = scmp.ne.s32.totalorder %s68, %s69
    %p78 = scmp.eq.s32.totalorder %s16, 0
    %p79 = por %p77, %p78
    %p80 = scmp.ne.s32.totalorder %s68, %s69
    %p81 = scmp.eq.s32.totalorder %s17, 1
    %p82 = por %p80, %p81
    %p84 = scmp.ne.s32.totalorder %s69, %s83
    %p85 = scmp.eq.s32.totalorder %s17, 0
    %p86 = por %p84, %p85
    %s88 = sadd.s32 %s87, 1
    %p91 = scmp.eq.s32.totalorder %s11, 1
    %p92 = scmp.ne.s32.totalorder %s87, %s89
    %p93 = scmp.eq.s32.totalorder %s11, 0
    %p94 = por %p92, %p93
    %p95 = scmp.ne.s32.totalorder %s87, %s89
    %p96 = scmp.eq.s32.totalorder %s16, 1
    %p97 = por %p95, %p96
    %p98 = scmp.ne.s32.totalorder %s89, %s90
    %p99 = scmp.eq.s32.totalorder %s16, 0
    %p100 = por %p98, %p99
    %p101 = scmp.ne.s32.totalorder %s89, %s90
    %p102 = scmp.eq.s32.totalorder %s17, 1
    %p103 = por %p101, %p102
    %p105 = scmp.ne.s32.totalorder %s90, %s104
    %p106 = scmp.eq.s32.totalorder %s17, 0
    %p107 = por %p105, %p106
    %s109 = sadd.s32 %s108, 1
    %p112 = scmp.eq.s32.totalorder %s11, 1
    %p113 = scmp.ne.s32.totalorder %s108, %s110
    %p114 = scmp.eq.s32.totalorder %s11, 0
    %p115 = por %p113, %p114
    %p116 = scmp.ne.s32.totalorder %s108, %s110
    %p117 = scmp.eq.s32.totalorder %s16, 1
    %p118 = por %p116, %p117
    %p119 = scmp.ne.s32.totalorder %s110, %s111
    %p120 = scmp.eq.s32.totalorder %s16, 0
    %p121 = por %p119, %p120
    %p122 = scmp.ne.s32.totalorder %s110, %s111
    %p123 = scmp.eq.s32.totalorder %s17, 1
    %p124 = por %p122, %p123
    %p126 = scmp.ne.s32.totalorder %s111, %s125
    %p127 = scmp.eq.s32.totalorder %s17, 0
    %p128 = por %p126, %p127
    %s129 = ssub.s32 %s11, %s18
    %p130 = scmp.eq.s32.totalorder %s129, 0
    %s132 = sadd.s32 %s131, 1
    %s133 = scalar_select %p130, %s131, %s132
    %p136 = pneg %p130
    %p137 = scmp.eq.s32.totalorder %s11, 1
    %p138 = por %p136, %p137
    %p139 = scmp.ne.s32.totalorder %s131, %s134
    %p140 = scmp.eq.s32.totalorder %s11, 0
    %p141 = por %p139, %p140
    %p142 = scmp.ne.s32.totalorder %s131, %s134
    %p143 = scmp.eq.s32.totalorder %s16, 1
    %p144 = por %p142, %p143
    %p145 = scmp.ne.s32.totalorder %s134, %s135
    %p146 = scmp.eq.s32.totalorder %s16, 0
    %p147 = por %p145, %p146
    %p148 = scmp.ne.s32.totalorder %s134, %s135
    %p149 = scmp.eq.s32.totalorder %s17, 1
    %p150 = por %p148, %p149
    %p152 = scmp.ne.s32.totalorder %s135, %s151
    %p153 = scmp.eq.s32.totalorder %s17, 0
    %p154 = por %p152, %p153
    %p155 = scmp.le.s32.totalorder 1, %s11
    %p156 = scmp.lt.s32.totalorder %s11, 3
    %p157 = pnand %p155, %p156
    %p158 = pneg %p157
    // Predicated region
    $region9: #{feed_forward_residual_block.1} parent=5 // pred_check
      _
    $region10: #{feed_forward_residual_block.1} parent=5 // pred_check_branch
      %160 = sbr.rel (%p157) target = $region12
    $region11: #{feed_forward_residual_block.1} parent=5 // pred_region
      %s161 = ssub.s32 %s11, 1
      // Predicated region
      $region13: #{feed_forward_residual_block.1} parent=11 // pred_check
        %p162 = pneg %p58
      $region14: #{feed_forward_residual_block.1} parent=11 // pred_check_branch
        %164 = sbr.rel (%p162) target = $region16
      $region15: #{feed_forward_residual_block.1} parent=11 // pred_region
        _
      $region16: #{feed_forward_residual_block.1} parent=11 // pred_fallthru
        _
      // Predicated region
      $region17: #{feed_forward_residual_block.1} parent=11 // pred_check
        %p165 = pneg %p79
      $region18: #{feed_forward_residual_block.1} parent=11 // pred_check_branch
        %167 = sbr.rel (%p165) target = $region20
      $region19: #{feed_forward_residual_block.1} parent=11 // pred_region
        _
      $region20: #{feed_forward_residual_block.1} parent=11 // pred_fallthru
        _
      // Predicated region
      $region21: #{feed_forward_residual_block.1} parent=11 // pred_check
        %p168 = pneg %p100
      $region22: #{feed_forward_residual_block.1} parent=11 // pred_check_branch
        %170 = sbr.rel (%p168) target = $region24
      $region23: #{feed_forward_residual_block.1} parent=11 // pred_region
        _
      $region24: #{feed_forward_residual_block.1} parent=11 // pred_fallthru
        _
      // Predicated region
      $region25: #{feed_forward_residual_block.1} parent=11 // pred_check
        %p171 = pneg %p121
      $region26: #{feed_forward_residual_block.1} parent=11 // pred_check_branch
        %173 = sbr.rel (%p171) target = $region28
      $region27: #{feed_forward_residual_block.1} parent=11 // pred_region
        _
      $region28: #{feed_forward_residual_block.1} parent=11 // pred_fallthru
        _
    $region12: #{feed_forward_residual_block.1} parent=5 // pred_fallthru
      _
    %p174 = scmp.lt.s32.totalorder %s11, 2
    // Predicated region
    $region29: #{feed_forward_residual_block.1} parent=5 // pred_check
      %p175 = pneg %p174
    $region30: #{feed_forward_residual_block.1} parent=5 // pred_check_branch
      %177 = sbr.rel (%p175) target = $region32
    $region31: #{feed_forward_residual_block.1} parent=5 // pred_region
      // Predicated region
      $region33: #{feed_forward_residual_block.1} parent=31 // pred_check
        %p178 = pneg %p31
      $region34: #{feed_forward_residual_block.1} parent=31 // pred_check_branch
        %180 = sbr.rel (%p178) target = $region36
      $region35: #{feed_forward_residual_block.1} parent=31 // pred_region
        %s181 = smul.u32 32, %s11
        %p182 = scmp.lt.s32.totalorder %s181, 63
        %s183 = scalar_select %p182, %s181, 63
        %s184 = smul.addr %s183, 8
        %s185 = scalar_lea.vmem %s0, %s184
        %s186 = smul.u32 32, %s11
      $region36: #{feed_forward_residual_block.1} parent=31 // pred_fallthru
        _
    $region32: #{feed_forward_residual_block.1} parent=5 // pred_fallthru
      _
    %p187 = scmp.le.s32.totalorder 1, %s11
    %p188 = scmp.lt.s32.totalorder %s11, 3
    %p189 = pnand %p187, %p188
    %p190 = pneg %p189
    // Predicated region
    $region37: #{feed_forward_residual_block.1} parent=5 // pred_check
      _
    $region38: #{feed_forward_residual_block.1} parent=5 // pred_check_branch
      %192 = sbr.rel (%p189) target = $region40
    $region39: #{feed_forward_residual_block.1} parent=5 // pred_region
      %s193 = ssub.s32 %s11, 1
      %s194 = smul.u32 32, %s16
      %p195 = scmp.lt.s32.totalorder %s194, 63
      %s196 = scalar_select %p195, %s194, 63
      %s197 = smul.addr %s196, 8
      %s198 = scalar_lea.vmem %s0, %s197
      %p199 = pneg %p37
      %p200 = pneg %p34
      %p201 = pneg %p58
      %p202 = pneg %p55
      %p203 = pneg %p79
      %p204 = pneg %p76
      %p205 = pneg %p100
      %p206 = pneg %p97
      %p207 = pneg %p121
      %p208 = pneg %p118
      %p209 = pneg %p147
      %p210 = pneg %p144
      %s211 = smul.u32 32, %s16
      %p212 = scmp.lt.s32.totalorder %s211, 63
      %s213 = scalar_select %p212, %s211, 63
      %s214 = smul.addr %s213, 8
      %s215 = scalar_lea.vmem %s5, %s214
      %s216 = smul.u32 32, %s16
      %p217 = scmp.lt.s32.totalorder %s216, 63
      %s218 = scalar_select %p217, %s216, 63
      %s219 = smul.addr %s218, 8
      %s220 = scalar_lea.vmem %s0, %s219
      %s221 = smul.u32 32, %s16
      %s222 = smul.u32 32, %s16
      %p223 = scmp.lt.s32.totalorder %s222, 63
      %s224 = scalar_select %p223, %s222, 63
      %s225 = smul.addr %s224, 8
      %s226 = scalar_lea.vmem %s5, %s225
      %s227 = smul.u32 32, %s16
      %v228 = vld [vmem:[%s220] sm:$0xff]
      %v229 = vld [vmem:[%s220 + $0x8] sm:$0xff]
      %v230 = vld [vmem:[%s220 + $0x10] sm:$0xff]
      %v231 = vld [vmem:[%s220 + $0x18] sm:$0xff]
      %v232 = vld [vmem:[%s220 + $0x20] sm:$0xff]
      %v233 = vld [vmem:[%s220 + $0x28] sm:$0xff]
      %v234 = vld [vmem:[%s220 + $0x30] sm:$0xff]
      %v235 = vld [vmem:[%s220 + $0x38] sm:$0xff]
      %v236 = vld [vmem:[%s220 + $0x40] sm:$0xff]
      %v237 = vld [vmem:[%s220 + $0x48] sm:$0xff]
      %v238 = vld [vmem:[%s220 + $0x50] sm:$0xff]
      %v239 = vld [vmem:[%s220 + $0x58] sm:$0xff]
      %v240 = vld [vmem:[%s220 + $0x60] sm:$0xff]
      %v241 = vld [vmem:[%s220 + $0x68] sm:$0xff]
      %v242 = vld [vmem:[%s220 + $0x70] sm:$0xff]
      %v243 = vld [vmem:[%s220 + $0x78] sm:$0xff]
      %v244 = vld [vmem:[%s220 + $0x80] sm:$0xff]
      %v245 = vld [vmem:[%s220 + $0x88] sm:$0xff]
      %v246 = vld [vmem:[%s220 + $0x90] sm:$0xff]
      %v247 = vld [vmem:[%s220 + $0x98] sm:$0xff]
      %v248 = vld [vmem:[%s220 + $0xa0] sm:$0xff]
      %v249 = vld [vmem:[%s220 + $0xa8] sm:$0xff]
      %v250 = vld [vmem:[%s220 + $0xb0] sm:$0xff]
      %v251 = vld [vmem:[%s220 + $0xb8] sm:$0xff]
      %v252 = vld [vmem:[%s220 + $0xc0] sm:$0xff]
      %v253 = vld [vmem:[%s220 + $0xc8] sm:$0xff]
      %v254 = vld [vmem:[%s220 + $0xd0] sm:$0xff]
      %v255 = vld [vmem:[%s220 + $0xd8] sm:$0xff]
      %v256 = vld [vmem:[%s220 + $0xe0] sm:$0xff]
      %v257 = vld [vmem:[%s220 + $0xe8] sm:$0xff]
      %v258 = vld [vmem:[%s220 + $0xf0] sm:$0xff]
      %v259 = vld [vmem:[%s220 + $0xf8] sm:$0xff]
      %v260 = vmul.f32 %v228, %v228
      %v261 = vmul.f32 %v229, %v229
      %v262 = vmul.f32 %v230, %v230
      %v263 = vmul.f32 %v231, %v231
      %v264 = vmul.f32 %v232, %v232
      %v265 = vmul.f32 %v233, %v233
      %v266 = vmul.f32 %v234, %v234
      %v267 = vmul.f32 %v235, %v235
      %v268 = vmul.f32 %v236, %v236
      %v269 = vmul.f32 %v237, %v237
      %v270 = vmul.f32 %v238, %v238
      %v271 = vmul.f32 %v239, %v239
      %v272 = vmul.f32 %v240, %v240
      %v273 = vmul.f32 %v241, %v241
      %v274 = vmul.f32 %v242, %v242
      %v275 = vmul.f32 %v243, %v243
      %v276 = vmul.f32 %v244, %v244
      %v277 = vmul.f32 %v245, %v245
      %v278 = vmul.f32 %v246, %v246
      %v279 = vmul.f32 %v247, %v247
      %v280 = vmul.f32 %v248, %v248
      %v281 = vmul.f32 %v249, %v249
      %v282 = vmul.f32 %v250, %v250
      %v283 = vmul.f32 %v251, %v251
      %v284 = vmul.f32 %v252, %v252
      %v285 = vmul.f32 %v253, %v253
      %v286 = vmul.f32 %v254, %v254
      %v287 = vmul.f32 %v255, %v255
      %v288 = vmul.f32 %v256, %v256
      %v289 = vmul.f32 %v257, %v257
      %v290 = vmul.f32 %v258, %v258
      %v291 = vmul.f32 %v259, %v259
      %292 = vadd.xlane.f32.xlu0 %v260
      %v293 = vpop.xlane.xlu0 %292
      %294 = vadd.xlane.f32.xlu0 %v261
      %v295 = vpop.xlane.xlu0 %294
      %296 = vadd.xlane.f32.xlu0 %v262
      %v297 = vpop.xlane.xlu0 %296
      %298 = vadd.xlane.f32.xlu0 %v263
      %v299 = vpop.xlane.xlu0 %298
      %300 = vadd.xlane.f32.xlu0 %v264
      %v301 = vpop.xlane.xlu0 %300
      %302 = vadd.xlane.f32.xlu0 %v265
      %v303 = vpop.xlane.xlu0 %302
      %304 = vadd.xlane.f32.xlu0 %v266
      %v305 = vpop.xlane.xlu0 %304
      %306 = vadd.xlane.f32.xlu0 %v267
      %v307 = vpop.xlane.xlu0 %306
      %308 = vadd.xlane.f32.xlu0 %v268
      %v309 = vpop.xlane.xlu0 %308
      %310 = vadd.xlane.f32.xlu0 %v269
      %v311 = vpop.xlane.xlu0 %310
      %312 = vadd.xlane.f32.xlu0 %v270
      %v313 = vpop.xlane.xlu0 %312
      %314 = vadd.xlane.f32.xlu0 %v271
      %v315 = vpop.xlane.xlu0 %314
      %316 = vadd.xlane.f32.xlu0 %v272
      %v317 = vpop.xlane.xlu0 %316
      %318 = vadd.xlane.f32.xlu0 %v273
      %v319 = vpop.xlane.xlu0 %318
      %320 = vadd.xlane.f32.xlu0 %v274
      %v321 = vpop.xlane.xlu0 %320
      %322 = vadd.xlane.f32.xlu0 %v275
      %v323 = vpop.xlane.xlu0 %322
      %324 = vadd.xlane.f32.xlu0 %v276
      %v325 = vpop.xlane.xlu0 %324
      %326 = vadd.xlane.f32.xlu0 %v277
      %v327 = vpop.xlane.xlu0 %326
      %328 = vadd.xlane.f32.xlu0 %v278
      %v329 = vpop.xlane.xlu0 %328
      %330 = vadd.xlane.f32.xlu0 %v279
      %v331 = vpop.xlane.xlu0 %330
      %332 = vadd.xlane.f32.xlu0 %v280
      %v333 = vpop.xlane.xlu0 %332
      %334 = vadd.xlane.f32.xlu0 %v281
      %v335 = vpop.xlane.xlu0 %334
      %336 = vadd.xlane.f32.xlu0 %v282
      %v337 = vpop.xlane.xlu0 %336
      %338 = vadd.xlane.f32.xlu0 %v283
      %v339 = vpop.xlane.xlu0 %338
      %340 = vadd.xlane.f32.xlu0 %v284
      %v341 = vpop.xlane.xlu0 %340
      %342 = vadd.xlane.f32.xlu0 %v285
      %v343 = vpop.xlane.xlu0 %342
      %344 = vadd.xlane.f32.xlu0 %v286
      %v345 = vpop.xlane.xlu0 %344
      %346 = vadd.xlane.f32.xlu0 %v287
      %v347 = vpop.xlane.xlu0 %346
      %348 = vadd.xlane.f32.xlu0 %v288
      %v349 = vpop.xlane.xlu0 %348
      %350 = vadd.xlane.f32.xlu0 %v289
      %v351 = vpop.xlane.xlu0 %350
      %352 = vadd.xlane.f32.xlu0 %v290
      %v353 = vpop.xlane.xlu0 %352
      %354 = vadd.xlane.f32.xlu0 %v291
      %v355 = vpop.xlane.xlu0 %354
      %v356 = vld [vmem:[%s1] sm:$0xff]
      %v357 = vmax.f32 %v293, 1e-16
      %v358 = vmax.f32 %v295, 1e-16
      %v359 = vmax.f32 %v297, 1e-16
      %v360 = vmax.f32 %v299, 1e-16
      %v361 = vmax.f32 %v301, 1e-16
      %v362 = vmax.f32 %v303, 1e-16
      %v363 = vmax.f32 %v305, 1e-16
      %v364 = vmax.f32 %v307, 1e-16
      %v365 = vmax.f32 %v309, 1e-16
      %v366 = vmax.f32 %v311, 1e-16
      %v367 = vmax.f32 %v313, 1e-16
      %v368 = vmax.f32 %v315, 1e-16
      %v369 = vmax.f32 %v317, 1e-16
      %v370 = vmax.f32 %v319, 1e-16
      %v371 = vmax.f32 %v321, 1e-16
      %v372 = vmax.f32 %v323, 1e-16
      %v373 = vmax.f32 %v325, 1e-16
      %v374 = vmax.f32 %v327, 1e-16
      %v375 = vmax.f32 %v329, 1e-16
      %v376 = vmax.f32 %v331, 1e-16
      %v377 = vmax.f32 %v333, 1e-16
      %v378 = vmax.f32 %v335, 1e-16
      %v379 = vmax.f32 %v337, 1e-16
      %v380 = vmax.f32 %v339, 1e-16
      %v381 = vmax.f32 %v341, 1e-16
      %v382 = vmax.f32 %v343, 1e-16
      %v383 = vmax.f32 %v345, 1e-16
      %v384 = vmax.f32 %v347, 1e-16
      %v385 = vmax.f32 %v349, 1e-16
      %v386 = vmax.f32 %v351, 1e-16
      %v387 = vmax.f32 %v353, 1e-16
      %v388 = vmax.f32 %v355, 1e-16
      %v389 = vrsqrt.pop %v357
      %v390 = vmul.f32 %v389, %v357
      %v391 = vmul.f32 %v390, %v389
      %v392 = vmul.f32 0.5, %v391
      %v393 = vsub.f32 1.5, %v392
      %v394 = vmul.f32 %v389, %v393
      %vm395 = vweird.f32 %v357
      %vm396 = vweird.f32 %v389
      %vm397 = vmor %vm395, %vm396
      %v398 = vsel %vm397, %v389, %v394
      %v399 = vrsqrt.pop %v358
      %v400 = vmul.f32 %v399, %v358
      %v401 = vmul.f32 %v400, %v399
      %v402 = vmul.f32 0.5, %v401
      %v403 = vsub.f32 1.5, %v402
      %v404 = vmul.f32 %v399, %v403
      %vm405 = vweird.f32 %v358
      %vm406 = vweird.f32 %v399
      %vm407 = vmor %vm405, %vm406
      %v408 = vsel %vm407, %v399, %v404
      %v409 = vrsqrt.pop %v359
      %v410 = vmul.f32 %v409, %v359
      %v411 = vmul.f32 %v410, %v409
      %v412 = vmul.f32 0.5, %v411
      %v413 = vsub.f32 1.5, %v412
      %v414 = vmul.f32 %v409, %v413
      %vm415 = vweird.f32 %v359
      %vm416 = vweird.f32 %v409
      %vm417 = vmor %vm415, %vm416
      %v418 = vsel %vm417, %v409, %v414
      %v419 = vrsqrt.pop %v360
      %v420 = vmul.f32 %v419, %v360
      %v421 = vmul.f32 %v420, %v419
      %v422 = vmul.f32 0.5, %v421
      %v423 = vsub.f32 1.5, %v422
      %v424 = vmul.f32 %v419, %v423
      %vm425 = vweird.f32 %v360
      %vm426 = vweird.f32 %v419
      %vm427 = vmor %vm425, %vm426
      %v428 = vsel %vm427, %v419, %v424
      %v429 = vrsqrt.pop %v361
      %v430 = vmul.f32 %v429, %v361
      %v431 = vmul.f32 %v430, %v429
      %v432 = vmul.f32 0.5, %v431
      %v433 = vsub.f32 1.5, %v432
      %v434 = vmul.f32 %v429, %v433
      %vm435 = vweird.f32 %v361
      %vm436 = vweird.f32 %v429
      %vm437 = vmor %vm435, %vm436
      %v438 = vsel %vm437, %v429, %v434
      %v439 = vrsqrt.pop %v362
      %v440 = vmul.f32 %v439, %v362
      %v441 = vmul.f32 %v440, %v439
      %v442 = vmul.f32 0.5, %v441
      %v443 = vsub.f32 1.5, %v442
      %v444 = vmul.f32 %v439, %v443
      %vm445 = vweird.f32 %v362
      %vm446 = vweird.f32 %v439
      %vm447 = vmor %vm445, %vm446
      %v448 = vsel %vm447, %v439, %v444
      %v449 = vrsqrt.pop %v363
      %v450 = vmul.f32 %v449, %v363
      %v451 = vmul.f32 %v450, %v449
      %v452 = vmul.f32 0.5, %v451
      %v453 = vsub.f32 1.5, %v452
      %v454 = vmul.f32 %v449, %v453
      %vm455 = vweird.f32 %v363
      %vm456 = vweird.f32 %v449
      %vm457 = vmor %vm455, %vm456
      %v458 = vsel %vm457, %v449, %v454
      %v459 = vrsqrt.pop %v364
      %v460 = vmul.f32 %v459, %v364
      %v461 = vmul.f32 %v460, %v459
      %v462 = vmul.f32 0.5, %v461
      %v463 = vsub.f32 1.5, %v462
      %v464 = vmul.f32 %v459, %v463
      %vm465 = vweird.f32 %v364
      %vm466 = vweird.f32 %v459
      %vm467 = vmor %vm465, %vm466
      %v468 = vsel %vm467, %v459, %v464
      %v469 = vrsqrt.pop %v365
      %v470 = vmul.f32 %v469, %v365
      %v471 = vmul.f32 %v470, %v469
      %v472 = vmul.f32 0.5, %v471
      %v473 = vsub.f32 1.5, %v472
      %v474 = vmul.f32 %v469, %v473
      %vm475 = vweird.f32 %v365
      %vm476 = vweird.f32 %v469
      %vm477 = vmor %vm475, %vm476
      %v478 = vsel %vm477, %v469, %v474
      %v479 = vrsqrt.pop %v366
      %v480 = vmul.f32 %v479, %v366
      %v481 = vmul.f32 %v480, %v479
      %v482 = vmul.f32 0.5, %v481
      %v483 = vsub.f32 1.5, %v482
      %v484 = vmul.f32 %v479, %v483
      %vm485 = vweird.f32 %v366
      %vm486 = vweird.f32 %v479
      %vm487 = vmor %vm485, %vm486
      %v488 = vsel %vm487, %v479, %v484
      %v489 = vrsqrt.pop %v367
      %v490 = vmul.f32 %v489, %v367
      %v491 = vmul.f32 %v490, %v489
      %v492 = vmul.f32 0.5, %v491
      %v493 = vsub.f32 1.5, %v492
      %v494 = vmul.f32 %v489, %v493
      %vm495 = vweird.f32 %v367
      %vm496 = vweird.f32 %v489
      %vm497 = vmor %vm495, %vm496
      %v498 = vsel %vm497, %v489, %v494
      %v499 = vrsqrt.pop %v368
      %v500 = vmul.f32 %v499, %v368
      %v501 = vmul.f32 %v500, %v499
      %v502 = vmul.f32 0.5, %v501
      %v503 = vsub.f32 1.5, %v502
      %v504 = vmul.f32 %v499, %v503
      %vm505 = vweird.f32 %v368
      %vm506 = vweird.f32 %v499
      %vm507 = vmor %vm505, %vm506
      %v508 = vsel %vm507, %v499, %v504
      %v509 = vrsqrt.pop %v369
      %v510 = vmul.f32 %v509, %v369
      %v511 = vmul.f32 %v510, %v509
      %v512 = vmul.f32 0.5, %v511
      %v513 = vsub.f32 1.5, %v512
      %v514 = vmul.f32 %v509, %v513
      %vm515 = vweird.f32 %v369
      %vm516 = vweird.f32 %v509
      %vm517 = vmor %vm515, %vm516
      %v518 = vsel %vm517, %v509, %v514
      %v519 = vrsqrt.pop %v370
      %v520 = vmul.f32 %v519, %v370
      %v521 = vmul.f32 %v520, %v519
      %v522 = vmul.f32 0.5, %v521
      %v523 = vsub.f32 1.5, %v522
      %v524 = vmul.f32 %v519, %v523
      %vm525 = vweird.f32 %v370
      %vm526 = vweird.f32 %v519
      %vm527 = vmor %vm525, %vm526
      %v528 = vsel %vm527, %v519, %v524
      %v529 = vrsqrt.pop %v371
      %v530 = vmul.f32 %v529, %v371
      %v531 = vmul.f32 %v530, %v529
      %v532 = vmul.f32 0.5, %v531
      %v533 = vsub.f32 1.5, %v532
      %v534 = vmul.f32 %v529, %v533
      %vm535 = vweird.f32 %v371
      %vm536 = vweird.f32 %v529
      %vm537 = vmor %vm535, %vm536
      %v538 = vsel %vm537, %v529, %v534
      %v539 = vrsqrt.pop %v372
      %v540 = vmul.f32 %v539, %v372
      %v541 = vmul.f32 %v540, %v539
      %v542 = vmul.f32 0.5, %v541
      %v543 = vsub.f32 1.5, %v542
      %v544 = vmul.f32 %v539, %v543
      %vm545 = vweird.f32 %v372
      %vm546 = vweird.f32 %v539
      %vm547 = vmor %vm545, %vm546
      %v548 = vsel %vm547, %v539, %v544
      %v549 = vrsqrt.pop %v373
      %v550 = vmul.f32 %v549, %v373
      %v551 = vmul.f32 %v550, %v549
      %v552 = vmul.f32 0.5, %v551
      %v553 = vsub.f32 1.5, %v552
      %v554 = vmul.f32 %v549, %v553
      %vm555 = vweird.f32 %v373
      %vm556 = vweird.f32 %v549
      %vm557 = vmor %vm555, %vm556
      %v558 = vsel %vm557, %v549, %v554
      %v559 = vrsqrt.pop %v374
      %v560 = vmul.f32 %v559, %v374
      %v561 = vmul.f32 %v560, %v559
      %v562 = vmul.f32 0.5, %v561
      %v563 = vsub.f32 1.5, %v562
      %v564 = vmul.f32 %v559, %v563
      %vm565 = vweird.f32 %v374
      %vm566 = vweird.f32 %v559
      %vm567 = vmor %vm565, %vm566
      %v568 = vsel %vm567, %v559, %v564
      %v569 = vrsqrt.pop %v375
      %v570 = vmul.f32 %v569, %v375
      %v571 = vmul.f32 %v570, %v569
      %v572 = vmul.f32 0.5, %v571
      %v573 = vsub.f32 1.5, %v572
      %v574 = vmul.f32 %v569, %v573
      %vm575 = vweird.f32 %v375
      %vm576 = vweird.f32 %v569
      %vm577 = vmor %vm575, %vm576
      %v578 = vsel %vm577, %v569, %v574
      %v579 = vrsqrt.pop %v376
      %v580 = vmul.f32 %v579, %v376
      %v581 = vmul.f32 %v580, %v579
      %v582 = vmul.f32 0.5, %v581
      %v583 = vsub.f32 1.5, %v582
      %v584 = vmul.f32 %v579, %v583
      %vm585 = vweird.f32 %v376
      %vm586 = vweird.f32 %v579
      %vm587 = vmor %vm585, %vm586
      %v588 = vsel %vm587, %v579, %v584
      %v589 = vrsqrt.pop %v377
      %v590 = vmul.f32 %v589, %v377
      %v591 = vmul.f32 %v590, %v589
      %v592 = vmul.f32 0.5, %v591
      %v593 = vsub.f32 1.5, %v592
      %v594 = vmul.f32 %v589, %v593
      %vm595 = vweird.f32 %v377
      %vm596 = vweird.f32 %v589
      %vm597 = vmor %vm595, %vm596
      %v598 = vsel %vm597, %v589, %v594
      %v599 = vrsqrt.pop %v378
      %v600 = vmul.f32 %v599, %v378
      %v601 = vmul.f32 %v600, %v599
      %v602 = vmul.f32 0.5, %v601
      %v603 = vsub.f32 1.5, %v602
      %v604 = vmul.f32 %v599, %v603
      %vm605 = vweird.f32 %v378
      %vm606 = vweird.f32 %v599
      %vm607 = vmor %vm605, %vm606
      %v608 = vsel %vm607, %v599, %v604
      %v609 = vrsqrt.pop %v379
      %v610 = vmul.f32 %v609, %v379
      %v611 = vmul.f32 %v610, %v609
      %v612 = vmul.f32 0.5, %v611
      %v613 = vsub.f32 1.5, %v612
      %v614 = vmul.f32 %v609, %v613
      %vm615 = vweird.f32 %v379
      %vm616 = vweird.f32 %v609
      %vm617 = vmor %vm615, %vm616
      %v618 = vsel %vm617, %v609, %v614
      %v619 = vrsqrt.pop %v380
      %v620 = vmul.f32 %v619, %v380
      %v621 = vmul.f32 %v620, %v619
      %v622 = vmul.f32 0.5, %v621
      %v623 = vsub.f32 1.5, %v622
      %v624 = vmul.f32 %v619, %v623
      %vm625 = vweird.f32 %v380
      %vm626 = vweird.f32 %v619
      %vm627 = vmor %vm625, %vm626
      %v628 = vsel %vm627, %v619, %v624
      %v629 = vrsqrt.pop %v381
      %v630 = vmul.f32 %v629, %v381
      %v631 = vmul.f32 %v630, %v629
      %v632 = vmul.f32 0.5, %v631
      %v633 = vsub.f32 1.5, %v632
      %v634 = vmul.f32 %v629, %v633
      %vm635 = vweird.f32 %v381
      %vm636 = vweird.f32 %v629
      %vm637 = vmor %vm635, %vm636
      %v638 = vsel %vm637, %v629, %v634
      %v639 = vrsqrt.pop %v382
      %v640 = vmul.f32 %v639, %v382
      %v641 = vmul.f32 %v640, %v639
      %v642 = vmul.f32 0.5, %v641
      %v643 = vsub.f32 1.5, %v642
      %v644 = vmul.f32 %v639, %v643
      %vm645 = vweird.f32 %v382
      %vm646 = vweird.f32 %v639
      %vm647 = vmor %vm645, %vm646
      %v648 = vsel %vm647, %v639, %v644
      %v649 = vrsqrt.pop %v383
      %v650 = vmul.f32 %v649, %v383
      %v651 = vmul.f32 %v650, %v649
      %v652 = vmul.f32 0.5, %v651
      %v653 = vsub.f32 1.5, %v652
      %v654 = vmul.f32 %v649, %v653
      %vm655 = vweird.f32 %v383
      %vm656 = vweird.f32 %v649
      %vm657 = vmor %vm655, %vm656
      %v658 = vsel %vm657, %v649, %v654
      %v659 = vrsqrt.pop %v384
      %v660 = vmul.f32 %v659, %v384
      %v661 = vmul.f32 %v660, %v659
      %v662 = vmul.f32 0.5, %v661
      %v663 = vsub.f32 1.5, %v662
      %v664 = vmul.f32 %v659, %v663
      %vm665 = vweird.f32 %v384
      %vm666 = vweird.f32 %v659
      %vm667 = vmor %vm665, %vm666
      %v668 = vsel %vm667, %v659, %v664
      %v669 = vrsqrt.pop %v385
      %v670 = vmul.f32 %v669, %v385
      %v671 = vmul.f32 %v670, %v669
      %v672 = vmul.f32 0.5, %v671
      %v673 = vsub.f32 1.5, %v672
      %v674 = vmul.f32 %v669, %v673
      %vm675 = vweird.f32 %v385
      %vm676 = vweird.f32 %v669
      %vm677 = vmor %vm675, %vm676
      %v678 = vsel %vm677, %v669, %v674
      %v679 = vrsqrt.pop %v386
      %v680 = vmul.f32 %v679, %v386
      %v681 = vmul.f32 %v680, %v679
      %v682 = vmul.f32 0.5, %v681
      %v683 = vsub.f32 1.5, %v682
      %v684 = vmul.f32 %v679, %v683
      %vm685 = vweird.f32 %v386
      %vm686 = vweird.f32 %v679
      %vm687 = vmor %vm685, %vm686
      %v688 = vsel %vm687, %v679, %v684
      %v689 = vrsqrt.pop %v387
      %v690 = vmul.f32 %v689, %v387
      %v691 = vmul.f32 %v690, %v689
      %v692 = vmul.f32 0.5, %v691
      %v693 = vsub.f32 1.5, %v692
      %v694 = vmul.f32 %v689, %v693
      %vm695 = vweird.f32 %v387
      %vm696 = vweird.f32 %v689
      %vm697 = vmor %vm695, %vm696
      %v698 = vsel %vm697, %v689, %v694
      %v699 = vrsqrt.pop %v388
      %v700 = vmul.f32 %v699, %v388
      %v701 = vmul.f32 %v700, %v699
      %v702 = vmul.f32 0.5, %v701
      %v703 = vsub.f32 1.5, %v702
      %v704 = vmul.f32 %v699, %v703
      %vm705 = vweird.f32 %v388
      %vm706 = vweird.f32 %v699
      %vm707 = vmor %vm705, %vm706
      %v708 = vsel %vm707, %v699, %v704
      %v709 = vmul.f32 %v356, %v398
      %v710 = vmul.f32 %v356, %v408
      %v711 = vmul.f32 %v356, %v418
      %v712 = vmul.f32 %v356, %v428
      %v713 = vmul.f32 %v356, %v438
      %v714 = vmul.f32 %v356, %v448
      %v715 = vmul.f32 %v356, %v458
      %v716 = vmul.f32 %v356, %v468
      %v717 = vmul.f32 %v356, %v478
      %v718 = vmul.f32 %v356, %v488
      %v719 = vmul.f32 %v356, %v498
      %v720 = vmul.f32 %v356, %v508
      %v721 = vmul.f32 %v356, %v518
      %v722 = vmul.f32 %v356, %v528
      %v723 = vmul.f32 %v356, %v538
      %v724 = vmul.f32 %v356, %v548
      %v725 = vmul.f32 %v356, %v558
      %v726 = vmul.f32 %v356, %v568
      %v727 = vmul.f32 %v356, %v578
      %v728 = vmul.f32 %v356, %v588
      %v729 = vmul.f32 %v356, %v598
      %v730 = vmul.f32 %v356, %v608
      %v731 = vmul.f32 %v356, %v618
      %v732 = vmul.f32 %v356, %v628
      %v733 = vmul.f32 %v356, %v638
      %v734 = vmul.f32 %v356, %v648
      %v735 = vmul.f32 %v356, %v658
      %v736 = vmul.f32 %v356, %v668
      %v737 = vmul.f32 %v356, %v678
      %v738 = vmul.f32 %v356, %v688
      %v739 = vmul.f32 %v356, %v698
      %v740 = vmul.f32 %v356, %v708
      %742 = vset.pattern.permute.xlu0 0
      %743 = vperm.xlu0 %742, %v709
      %v744 = vpop.permute.xlu0 %743
      %747 = vset.pattern.permute.xlu0 0
      %748 = vperm.xlu0 %747, %v710
      %v749 = vpop.permute.xlu0 %748
      %752 = vset.pattern.permute.xlu0 0
      %753 = vperm.xlu0 %752, %v711
      %v754 = vpop.permute.xlu0 %753
      %757 = vset.pattern.permute.xlu0 0
      %758 = vperm.xlu0 %757, %v712
      %v759 = vpop.permute.xlu0 %758
      %762 = vset.pattern.permute.xlu0 0
      %763 = vperm.xlu0 %762, %v713
      %v764 = vpop.permute.xlu0 %763
      %767 = vset.pattern.permute.xlu0 0
      %768 = vperm.xlu0 %767, %v714
      %v769 = vpop.permute.xlu0 %768
      %772 = vset.pattern.permute.xlu0 0
      %773 = vperm.xlu0 %772, %v715
      %v774 = vpop.permute.xlu0 %773
      %777 = vset.pattern.permute.xlu0 0
      %778 = vperm.xlu0 %777, %v716
      %v779 = vpop.permute.xlu0 %778
      %782 = vset.pattern.permute.xlu0 0
      %783 = vperm.xlu0 %782, %v717
      %v784 = vpop.permute.xlu0 %783
      %787 = vset.pattern.permute.xlu0 0
      %788 = vperm.xlu0 %787, %v718
      %v789 = vpop.permute.xlu0 %788
      %792 = vset.pattern.permute.xlu0 0
      %793 = vperm.xlu0 %792, %v719
      %v794 = vpop.permute.xlu0 %793
      %797 = vset.pattern.permute.xlu0 0
      %798 = vperm.xlu0 %797, %v720
      %v799 = vpop.permute.xlu0 %798
      %802 = vset.pattern.permute.xlu0 0
      %803 = vperm.xlu0 %802, %v721
      %v804 = vpop.permute.xlu0 %803
      %807 = vset.pattern.permute.xlu0 0
      %808 = vperm.xlu0 %807, %v722
      %v809 = vpop.permute.xlu0 %808
      %812 = vset.pattern.permute.xlu0 0
      %813 = vperm.xlu0 %812, %v723
      %v814 = vpop.permute.xlu0 %813
      %817 = vset.pattern.permute.xlu0 0
      %818 = vperm.xlu0 %817, %v724
      %v819 = vpop.permute.xlu0 %818
      %822 = vset.pattern.permute.xlu0 0
      %823 = vperm.xlu0 %822, %v725
      %v824 = vpop.permute.xlu0 %823
      %827 = vset.pattern.permute.xlu0 0
      %828 = vperm.xlu0 %827, %v726
      %v829 = vpop.permute.xlu0 %828
      %832 = vset.pattern.permute.xlu0 0
      %833 = vperm.xlu0 %832, %v727
      %v834 = vpop.permute.xlu0 %833
      %837 = vset.pattern.permute.xlu0 0
      %838 = vperm.xlu0 %837, %v728
      %v839 = vpop.permute.xlu0 %838
      %842 = vset.pattern.permute.xlu0 0
      %843 = vperm.xlu0 %842, %v729
      %v844 = vpop.permute.xlu0 %843
      %847 = vset.pattern.permute.xlu0 0
      %848 = vperm.xlu0 %847, %v730
      %v849 = vpop.permute.xlu0 %848
      %852 = vset.pattern.permute.xlu0 0
      %853 = vperm.xlu0 %852, %v731
      %v854 = vpop.permute.xlu0 %853
      %857 = vset.pattern.permute.xlu0 0
      %858 = vperm.xlu0 %857, %v732
      %v859 = vpop.permute.xlu0 %858
      %862 = vset.pattern.permute.xlu0 0
      %863 = vperm.xlu0 %862, %v733
      %v864 = vpop.permute.xlu0 %863
      %867 = vset.pattern.permute.xlu0 0
      %868 = vperm.xlu0 %867, %v734
      %v869 = vpop.permute.xlu0 %868
      %872 = vset.pattern.permute.xlu0 0
      %873 = vperm.xlu0 %872, %v735
      %v874 = vpop.permute.xlu0 %873
      %877 = vset.pattern.permute.xlu0 0
      %878 = vperm.xlu0 %877, %v736
      %v879 = vpop.permute.xlu0 %878
      %882 = vset.pattern.permute.xlu0 0
      %883 = vperm.xlu0 %882, %v737
      %v884 = vpop.permute.xlu0 %883
      %887 = vset.pattern.permute.xlu0 0
      %888 = vperm.xlu0 %887, %v738
      %v889 = vpop.permute.xlu0 %888
      %892 = vset.pattern.permute.xlu0 0
      %893 = vperm.xlu0 %892, %v739
      %v894 = vpop.permute.xlu0 %893
      %897 = vset.pattern.permute.xlu0 0
      %898 = vperm.xlu0 %897, %v740
      %v899 = vpop.permute.xlu0 %898
      %v901 = vmul.f32 %v228, %v744
      %v902 = vmul.f32 %v229, %v749
      %v903 = vmul.f32 %v230, %v754
      %v904 = vmul.f32 %v231, %v759
      %v905 = vmul.f32 %v232, %v764
      %v906 = vmul.f32 %v233, %v769
      %v907 = vmul.f32 %v234, %v774
      %v908 = vmul.f32 %v235, %v779
      %v909 = vmul.f32 %v236, %v784
      %v910 = vmul.f32 %v237, %v789
      %v911 = vmul.f32 %v238, %v794
      %v912 = vmul.f32 %v239, %v799
      %v913 = vmul.f32 %v240, %v804
      %v914 = vmul.f32 %v241, %v809
      %v915 = vmul.f32 %v242, %v814
      %v916 = vmul.f32 %v243, %v819
      %v917 = vmul.f32 %v244, %v824
      %v918 = vmul.f32 %v245, %v829
      %v919 = vmul.f32 %v246, %v834
      %v920 = vmul.f32 %v247, %v839
      %v921 = vmul.f32 %v248, %v844
      %v922 = vmul.f32 %v249, %v849
      %v923 = vmul.f32 %v250, %v854
      %v924 = vmul.f32 %v251, %v859
      %v925 = vmul.f32 %v252, %v864
      %v926 = vmul.f32 %v253, %v869
      %v927 = vmul.f32 %v254, %v874
      %v928 = vmul.f32 %v255, %v879
      %v929 = vmul.f32 %v256, %v884
      %v930 = vmul.f32 %v257, %v889
      %v931 = vmul.f32 %v258, %v894
      %v932 = vmul.f32 %v259, %v899
      %v933 = vld [vmem:[%s2] sm:$0xff]
      %v934 = vld [vmem:[%s2 + $0x8] sm:$0xff]
      %v935 = vld [vmem:[%s2 + $0x10] sm:$0xff]
      %v936 = vld [vmem:[%s2 + $0x18] sm:$0xff]
      %vm937 = vcmask 64512
      %v939 = vsel %vm937, %v933, 0
      %v942 = vsel %vm937, %v934, 0
      %v945 = vsel %vm937, %v935, 0
      %v948 = vsel %vm937, %v936, 0
      %950 = vmatpush.msra.mxu0 0.0
      %951 = vmatpush.msra.mxu0 0.0
      %952 = vmatpush.msra.mxu0 0.0
      %953 = vmatpush.msra.mxu0 0.0
      %954 = vmatpush.msra.mxu0 0.0
      %955 = vmatpush.msra.mxu0 0.0
      %956 = vmatpush.msra.mxu0 0.0
      %957 = vmatpush.msra.mxu0 0.0
      %958 = vmatpush.msra.mxu0 0.0
      %959 = vmatpush.msra.mxu0 0.0
      %960 = vmatpush.msra.mxu0 0.0
      %961 = vmatpush.msra.mxu0 0.0
      %962 = vmatpush.msra.mxu0 0.0
      %963 = vmatpush.msra.mxu0 0.0
      %964 = vmatpush.msra.mxu0 0.0
      %965 = vmatpush.msra.mxu0 %v901
      %966 = vmatmul.f32.gmra.mxu0 %v939
      %v967 = vpop.f32.mrf.mxu0
      %v968 = vadd.f32 0.0, %v967
      %969 = vmatmul.f32.gmra.mxu0 %v942
      %v970 = vpop.f32.mrf.mxu0
      %v971 = vadd.f32 0.0, %v970
      %972 = vmatmul.f32.gmra.mxu0 %v945
      %v973 = vpop.f32.mrf.mxu0
      %v974 = vadd.f32 0.0, %v973
      %975 = vmatmul.f32.gmra.mxu0 %v948
      %v976 = vpop.f32.mrf.mxu0
      %v977 = vadd.f32 0.0, %v976
      %978 = vdwg.mxu0
      %979 = vmatpush.msra.mxu0 0.0
      %980 = vmatpush.msra.mxu0 0.0
      %981 = vmatpush.msra.mxu0 0.0
      %982 = vmatpush.msra.mxu0 0.0
      %983 = vmatpush.msra.mxu0 0.0
      %984 = vmatpush.msra.mxu0 0.0
      %985 = vmatpush.msra.mxu0 0.0
      %986 = vmatpush.msra.mxu0 0.0
      %987 = vmatpush.msra.mxu0 0.0
      %988 = vmatpush.msra.mxu0 0.0
      %989 = vmatpush.msra.mxu0 0.0
      %990 = vmatpush.msra.mxu0 0.0
      %991 = vmatpush.msra.mxu0 0.0
      %992 = vmatpush.msra.mxu0 0.0
      %993 = vmatpush.msra.mxu0 0.0
      %994 = vmatpush.msra.mxu0 %v902
      %995 = vmatmul.f32.gmra.mxu0 %v939
      %v996 = vpop.f32.mrf.mxu0
      %v997 = vadd.f32 0.0, %v996
      %998 = vmatmul.f32.gmra.mxu0 %v942
      %v999 = vpop.f32.mrf.mxu0
      %v1000 = vadd.f32 0.0, %v999
      %1001 = vmatmul.f32.gmra.mxu0 %v945
      %v1002 = vpop.f32.mrf.mxu0
      %v1003 = vadd.f32 0.0, %v1002
      %1004 = vmatmul.f32.gmra.mxu0 %v948
      %v1005 = vpop.f32.mrf.mxu0
      %v1006 = vadd.f32 0.0, %v1005
      %1007 = vdwg.mxu0
      %1008 = vmatpush.msra.mxu0 0.0
      %1009 = vmatpush.msra.mxu0 0.0
      %1010 = vmatpush.msra.mxu0 0.0
      %1011 = vmatpush.msra.mxu0 0.0
      %1012 = vmatpush.msra.mxu0 0.0
      %1013 = vmatpush.msra.mxu0 0.0
      %1014 = vmatpush.msra.mxu0 0.0
      %1015 = vmatpush.msra.mxu0 0.0
      %1016 = vmatpush.msra.mxu0 0.0
      %1017 = vmatpush.msra.mxu0 0.0
      %1018 = vmatpush.msra.mxu0 0.0
      %1019 = vmatpush.msra.mxu0 0.0
      %1020 = vmatpush.msra.mxu0 0.0
      %1021 = vmatpush.msra.mxu0 0.0
      %1022 = vmatpush.msra.mxu0 0.0
      %1023 = vmatpush.msra.mxu0 %v903
      %1024 = vmatmul.f32.gmra.mxu0 %v939
      %v1025 = vpop.f32.mrf.mxu0
      %v1026 = vadd.f32 0.0, %v1025
      %1027 = vmatmul.f32.gmra.mxu0 %v942
      %v1028 = vpop.f32.mrf.mxu0
      %v1029 = vadd.f32 0.0, %v1028
      %1030 = vmatmul.f32.gmra.mxu0 %v945
      %v1031 = vpop.f32.mrf.mxu0
      %v1032 = vadd.f32 0.0, %v1031
      %1033 = vmatmul.f32.gmra.mxu0 %v948
      %v1034 = vpop.f32.mrf.mxu0
      %v1035 = vadd.f32 0.0, %v1034
      %1036 = vdwg.mxu0
      %1037 = vmatpush.msra.mxu0 0.0
      %1038 = vmatpush.msra.mxu0 0.0
      %1039 = vmatpush.msra.mxu0 0.0
      %1040 = vmatpush.msra.mxu0 0.0
      %1041 = vmatpush.msra.mxu0 0.0
      %1042 = vmatpush.msra.mxu0 0.0
      %1043 = vmatpush.msra.mxu0 0.0
      %1044 = vmatpush.msra.mxu0 0.0
      %1045 = vmatpush.msra.mxu0 0.0
      %1046 = vmatpush.msra.mxu0 0.0
      %1047 = vmatpush.msra.mxu0 0.0
      %1048 = vmatpush.msra.mxu0 0.0
      %1049 = vmatpush.msra.mxu0 0.0
      %1050 = vmatpush.msra.mxu0 0.0
      %1051 = vmatpush.msra.mxu0 0.0
      %1052 = vmatpush.msra.mxu0 %v904
      %1053 = vmatmul.f32.gmra.mxu0 %v939
      %v1054 = vpop.f32.mrf.mxu0
      %v1055 = vadd.f32 0.0, %v1054
      %1056 = vmatmul.f32.gmra.mxu0 %v942
      %v1057 = vpop.f32.mrf.mxu0
      %v1058 = vadd.f32 0.0, %v1057
      %1059 = vmatmul.f32.gmra.mxu0 %v945
      %v1060 = vpop.f32.mrf.mxu0
      %v1061 = vadd.f32 0.0, %v1060
      %1062 = vmatmul.f32.gmra.mxu0 %v948
      %v1063 = vpop.f32.mrf.mxu0
      %v1064 = vadd.f32 0.0, %v1063
      %1065 = vdwg.mxu0
      %1066 = vmatpush.msra.mxu0 0.0
      %1067 = vmatpush.msra.mxu0 0.0
      %1068 = vmatpush.msra.mxu0 0.0
      %1069 = vmatpush.msra.mxu0 0.0
      %1070 = vmatpush.msra.mxu0 0.0
      %1071 = vmatpush.msra.mxu0 0.0
      %1072 = vmatpush.msra.mxu0 0.0
      %1073 = vmatpush.msra.mxu0 0.0
      %1074 = vmatpush.msra.mxu0 0.0
      %1075 = vmatpush.msra.mxu0 0.0
      %1076 = vmatpush.msra.mxu0 0.0
      %1077 = vmatpush.msra.mxu0 0.0
      %1078 = vmatpush.msra.mxu0 0.0
      %1079 = vmatpush.msra.mxu0 0.0
      %1080 = vmatpush.msra.mxu0 0.0
      %1081 = vmatpush.msra.mxu0 %v905
      %1082 = vmatmul.f32.gmra.mxu0 %v939
      %v1083 = vpop.f32.mrf.mxu0
      %v1084 = vadd.f32 0.0, %v1083
      %1085 = vmatmul.f32.gmra.mxu0 %v942
      %v1086 = vpop.f32.mrf.mxu0
      %v1087 = vadd.f32 0.0, %v1086
      %1088 = vmatmul.f32.gmra.mxu0 %v945
      %v1089 = vpop.f32.mrf.mxu0
      %v1090 = vadd.f32 0.0, %v1089
      %1091 = vmatmul.f32.gmra.mxu0 %v948
      %v1092 = vpop.f32.mrf.mxu0
      %v1093 = vadd.f32 0.0, %v1092
      %1094 = vdwg.mxu0
      %1095 = vmatpush.msra.mxu0 0.0
      %1096 = vmatpush.msra.mxu0 0.0
      %1097 = vmatpush.msra.mxu0 0.0
      %1098 = vmatpush.msra.mxu0 0.0
      %1099 = vmatpush.msra.mxu0 0.0
      %1100 = vmatpush.msra.mxu0 0.0
      %1101 = vmatpush.msra.mxu0 0.0
      %1102 = vmatpush.msra.mxu0 0.0
      %1103 = vmatpush.msra.mxu0 0.0
      %1104 = vmatpush.msra.mxu0 0.0
      %1105 = vmatpush.msra.mxu0 0.0
      %1106 = vmatpush.msra.mxu0 0.0
      %1107 = vmatpush.msra.mxu0 0.0
      %1108 = vmatpush.msra.mxu0 0.0
      %1109 = vmatpush.msra.mxu0 0.0
      %1110 = vmatpush.msra.mxu0 %v906
      %1111 = vmatmul.f32.gmra.mxu0 %v939
      %v1112 = vpop.f32.mrf.mxu0
      %v1113 = vadd.f32 0.0, %v1112
      %1114 = vmatmul.f32.gmra.mxu0 %v942
      %v1115 = vpop.f32.mrf.mxu0
      %v1116 = vadd.f32 0.0, %v1115
      %1117 = vmatmul.f32.gmra.mxu0 %v945
      %v1118 = vpop.f32.mrf.mxu0
      %v1119 = vadd.f32 0.0, %v1118
      %1120 = vmatmul.f32.gmra.mxu0 %v948
      %v1121 = vpop.f32.mrf.mxu0
      %v1122 = vadd.f32 0.0, %v1121
      %1123 = vdwg.mxu0
      %1124 = vmatpush.msra.mxu0 0.0
      %1125 = vmatpush.msra.mxu0 0.0
      %1126 = vmatpush.msra.mxu0 0.0
      %1127 = vmatpush.msra.mxu0 0.0
      %1128 = vmatpush.msra.mxu0 0.0
      %1129 = vmatpush.msra.mxu0 0.0
      %1130 = vmatpush.msra.mxu0 0.0
      %1131 = vmatpush.msra.mxu0 0.0
      %1132 = vmatpush.msra.mxu0 0.0
      %1133 = vmatpush.msra.mxu0 0.0
      %1134 = vmatpush.msra.mxu0 0.0
      %1135 = vmatpush.msra.mxu0 0.0
      %1136 = vmatpush.msra.mxu0 0.0
      %1137 = vmatpush.msra.mxu0 0.0
      %1138 = vmatpush.msra.mxu0 0.0
      %1139 = vmatpush.msra.mxu0 %v907
      %1140 = vmatmul.f32.gmra.mxu0 %v939
      %v1141 = vpop.f32.mrf.mxu0
      %v1142 = vadd.f32 0.0, %v1141
      %1143 = vmatmul.f32.gmra.mxu0 %v942
      %v1144 = vpop.f32.mrf.mxu0
      %v1145 = vadd.f32 0.0, %v1144
      %1146 = vmatmul.f32.gmra.mxu0 %v945
      %v1147 = vpop.f32.mrf.mxu0
      %v1148 = vadd.f32 0.0, %v1147
      %1149 = vmatmul.f32.gmra.mxu0 %v948
      %v1150 = vpop.f32.mrf.mxu0
      %v1151 = vadd.f32 0.0, %v1150
      %1152 = vdwg.mxu0
      %1153 = vmatpush.msra.mxu0 0.0
      %1154 = vmatpush.msra.mxu0 0.0
      %1155 = vmatpush.msra.mxu0 0.0
      %1156 = vmatpush.msra.mxu0 0.0
      %1157 = vmatpush.msra.mxu0 0.0
      %1158 = vmatpush.msra.mxu0 0.0
      %1159 = vmatpush.msra.mxu0 0.0
      %1160 = vmatpush.msra.mxu0 0.0
      %1161 = vmatpush.msra.mxu0 0.0
      %1162 = vmatpush.msra.mxu0 0.0
      %1163 = vmatpush.msra.mxu0 0.0
      %1164 = vmatpush.msra.mxu0 0.0
      %1165 = vmatpush.msra.mxu0 0.0
      %1166 = vmatpush.msra.mxu0 0.0
      %1167 = vmatpush.msra.mxu0 0.0
      %1168 = vmatpush.msra.mxu0 %v908
      %1169 = vmatmul.f32.gmra.mxu0 %v939
      %v1170 = vpop.f32.mrf.mxu0
      %v1171 = vadd.f32 0.0, %v1170
      %1172 = vmatmul.f32.gmra.mxu0 %v942
      %v1173 = vpop.f32.mrf.mxu0
      %v1174 = vadd.f32 0.0, %v1173
      %1175 = vmatmul.f32.gmra.mxu0 %v945
      %v1176 = vpop.f32.mrf.mxu0
      %v1177 = vadd.f32 0.0, %v1176
      %1178 = vmatmul.f32.gmra.mxu0 %v948
      %v1179 = vpop.f32.mrf.mxu0
      %v1180 = vadd.f32 0.0, %v1179
      %1181 = vdwg.mxu0
      %1182 = vmatpush.msra.mxu0 0.0
      %1183 = vmatpush.msra.mxu0 0.0
      %1184 = vmatpush.msra.mxu0 0.0
      %1185 = vmatpush.msra.mxu0 0.0
      %1186 = vmatpush.msra.mxu0 0.0
      %1187 = vmatpush.msra.mxu0 0.0
      %1188 = vmatpush.msra.mxu0 0.0
      %1189 = vmatpush.msra.mxu0 0.0
      %1190 = vmatpush.msra.mxu0 0.0
      %1191 = vmatpush.msra.mxu0 0.0
      %1192 = vmatpush.msra.mxu0 0.0
      %1193 = vmatpush.msra.mxu0 0.0
      %1194 = vmatpush.msra.mxu0 0.0
      %1195 = vmatpush.msra.mxu0 0.0
      %1196 = vmatpush.msra.mxu0 0.0
      %1197 = vmatpush.msra.mxu0 %v909
      %1198 = vmatmul.f32.gmra.mxu0 %v939
      %v1199 = vpop.f32.mrf.mxu0
      %v1200 = vadd.f32 0.0, %v1199
      %1201 = vmatmul.f32.gmra.mxu0 %v942
      %v1202 = vpop.f32.mrf.mxu0
      %v1203 = vadd.f32 0.0, %v1202
      %1204 = vmatmul.f32.gmra.mxu0 %v945
      %v1205 = vpop.f32.mrf.mxu0
      %v1206 = vadd.f32 0.0, %v1205
      %1207 = vmatmul.f32.gmra.mxu0 %v948
      %v1208 = vpop.f32.mrf.mxu0
      %v1209 = vadd.f32 0.0, %v1208
      %1210 = vdwg.mxu0
      %1211 = vmatpush.msra.mxu0 0.0
      %1212 = vmatpush.msra.mxu0 0.0
      %1213 = vmatpush.msra.mxu0 0.0
      %1214 = vmatpush.msra.mxu0 0.0
      %1215 = vmatpush.msra.mxu0 0.0
      %1216 = vmatpush.msra.mxu0 0.0
      %1217 = vmatpush.msra.mxu0 0.0
      %1218 = vmatpush.msra.mxu0 0.0
      %1219 = vmatpush.msra.mxu0 0.0
      %1220 = vmatpush.msra.mxu0 0.0
      %1221 = vmatpush.msra.mxu0 0.0
      %1222 = vmatpush.msra.mxu0 0.0
      %1223 = vmatpush.msra.mxu0 0.0
      %1224 = vmatpush.msra.mxu0 0.0
      %1225 = vmatpush.msra.mxu0 0.0
      %1226 = vmatpush.msra.mxu0 %v910
      %1227 = vmatmul.f32.gmra.mxu0 %v939
      %v1228 = vpop.f32.mrf.mxu0
      %v1229 = vadd.f32 0.0, %v1228
      %1230 = vmatmul.f32.gmra.mxu0 %v942
      %v1231 = vpop.f32.mrf.mxu0
      %v1232 = vadd.f32 0.0, %v1231
      %1233 = vmatmul.f32.gmra.mxu0 %v945
      %v1234 = vpop.f32.mrf.mxu0
      %v1235 = vadd.f32 0.0, %v1234
      %1236 = vmatmul.f32.gmra.mxu0 %v948
      %v1237 = vpop.f32.mrf.mxu0
      %v1238 = vadd.f32 0.0, %v1237
      %1239 = vdwg.mxu0
      %1240 = vmatpush.msra.mxu0 0.0
      %1241 = vmatpush.msra.mxu0 0.0
      %1242 = vmatpush.msra.mxu0 0.0
      %1243 = vmatpush.msra.mxu0 0.0
      %1244 = vmatpush.msra.mxu0 0.0
      %1245 = vmatpush.msra.mxu0 0.0
      %1246 = vmatpush.msra.mxu0 0.0
      %1247 = vmatpush.msra.mxu0 0.0
      %1248 = vmatpush.msra.mxu0 0.0
      %1249 = vmatpush.msra.mxu0 0.0
      %1250 = vmatpush.msra.mxu0 0.0
      %1251 = vmatpush.msra.mxu0 0.0
      %1252 = vmatpush.msra.mxu0 0.0
      %1253 = vmatpush.msra.mxu0 0.0
      %1254 = vmatpush.msra.mxu0 0.0
      %1255 = vmatpush.msra.mxu0 %v911
      %1256 = vmatmul.f32.gmra.mxu0 %v939
      %v1257 = vpop.f32.mrf.mxu0
      %v1258 = vadd.f32 0.0, %v1257
      %1259 = vmatmul.f32.gmra.mxu0 %v942
      %v1260 = vpop.f32.mrf.mxu0
      %v1261 = vadd.f32 0.0, %v1260
      %1262 = vmatmul.f32.gmra.mxu0 %v945
      %v1263 = vpop.f32.mrf.mxu0
      %v1264 = vadd.f32 0.0, %v1263
      %1265 = vmatmul.f32.gmra.mxu0 %v948
      %v1266 = vpop.f32.mrf.mxu0
      %v1267 = vadd.f32 0.0, %v1266
      %1268 = vdwg.mxu0
      %1269 = vmatpush.msra.mxu0 0.0
      %1270 = vmatpush.msra.mxu0 0.0
      %1271 = vmatpush.msra.mxu0 0.0
      %1272 = vmatpush.msra.mxu0 0.0
      %1273 = vmatpush.msra.mxu0 0.0
      %1274 = vmatpush.msra.mxu0 0.0
      %1275 = vmatpush.msra.mxu0 0.0
      %1276 = vmatpush.msra.mxu0 0.0
      %1277 = vmatpush.msra.mxu0 0.0
      %1278 = vmatpush.msra.mxu0 0.0
      %1279 = vmatpush.msra.mxu0 0.0
      %1280 = vmatpush.msra.mxu0 0.0
      %1281 = vmatpush.msra.mxu0 0.0
      %1282 = vmatpush.msra.mxu0 0.0
      %1283 = vmatpush.msra.mxu0 0.0
      %1284 = vmatpush.msra.mxu0 %v912
      %1285 = vmatmul.f32.gmra.mxu0 %v939
      %v1286 = vpop.f32.mrf.mxu0
      %v1287 = vadd.f32 0.0, %v1286
      %1288 = vmatmul.f32.gmra.mxu0 %v942
      %v1289 = vpop.f32.mrf.mxu0
      %v1290 = vadd.f32 0.0, %v1289
      %1291 = vmatmul.f32.gmra.mxu0 %v945
      %v1292 = vpop.f32.mrf.mxu0
      %v1293 = vadd.f32 0.0, %v1292
      %1294 = vmatmul.f32.gmra.mxu0 %v948
      %v1295 = vpop.f32.mrf.mxu0
      %v1296 = vadd.f32 0.0, %v1295
      %1297 = vdwg.mxu0
      %1298 = vmatpush.msra.mxu0 0.0
      %1299 = vmatpush.msra.mxu0 0.0
      %1300 = vmatpush.msra.mxu0 0.0
      %1301 = vmatpush.msra.mxu0 0.0
      %1302 = vmatpush.msra.mxu0 0.0
      %1303 = vmatpush.msra.mxu0 0.0
      %1304 = vmatpush.msra.mxu0 0.0
      %1305 = vmatpush.msra.mxu0 0.0
      %1306 = vmatpush.msra.mxu0 0.0
      %1307 = vmatpush.msra.mxu0 0.0
      %1308 = vmatpush.msra.mxu0 0.0
      %1309 = vmatpush.msra.mxu0 0.0
      %1310 = vmatpush.msra.mxu0 0.0
      %1311 = vmatpush.msra.mxu0 0.0
      %1312 = vmatpush.msra.mxu0 0.0
      %1313 = vmatpush.msra.mxu0 %v913
      %1314 = vmatmul.f32.gmra.mxu0 %v939
      %v1315 = vpop.f32.mrf.mxu0
      %v1316 = vadd.f32 0.0, %v1315
      %1317 = vmatmul.f32.gmra.mxu0 %v942
      %v1318 = vpop.f32.mrf.mxu0
      %v1319 = vadd.f32 0.0, %v1318
      %1320 = vmatmul.f32.gmra.mxu0 %v945
      %v1321 = vpop.f32.mrf.mxu0
      %v1322 = vadd.f32 0.0, %v1321
      %1323 = vmatmul.f32.gmra.mxu0 %v948
      %v1324 = vpop.f32.mrf.mxu0
      %v1325 = vadd.f32 0.0, %v1324
      %1326 = vdwg.mxu0
      %1327 = vmatpush.msra.mxu0 0.0
      %1328 = vmatpush.msra.mxu0 0.0
      %1329 = vmatpush.msra.mxu0 0.0
      %1330 = vmatpush.msra.mxu0 0.0
      %1331 = vmatpush.msra.mxu0 0.0
      %1332 = vmatpush.msra.mxu0 0.0
      %1333 = vmatpush.msra.mxu0 0.0
      %1334 = vmatpush.msra.mxu0 0.0
      %1335 = vmatpush.msra.mxu0 0.0
      %1336 = vmatpush.msra.mxu0 0.0
      %1337 = vmatpush.msra.mxu0 0.0
      %1338 = vmatpush.msra.mxu0 0.0
      %1339 = vmatpush.msra.mxu0 0.0
      %1340 = vmatpush.msra.mxu0 0.0
      %1341 = vmatpush.msra.mxu0 0.0
      %1342 = vmatpush.msra.mxu0 %v914
      %1343 = vmatmul.f32.gmra.mxu0 %v939
      %v1344 = vpop.f32.mrf.mxu0
      %v1345 = vadd.f32 0.0, %v1344
      %1346 = vmatmul.f32.gmra.mxu0 %v942
      %v1347 = vpop.f32.mrf.mxu0
      %v1348 = vadd.f32 0.0, %v1347
      %1349 = vmatmul.f32.gmra.mxu0 %v945
      %v1350 = vpop.f32.mrf.mxu0
      %v1351 = vadd.f32 0.0, %v1350
      %1352 = vmatmul.f32.gmra.mxu0 %v948
      %v1353 = vpop.f32.mrf.mxu0
      %v1354 = vadd.f32 0.0, %v1353
      %1355 = vdwg.mxu0
      %1356 = vmatpush.msra.mxu0 0.0
      %1357 = vmatpush.msra.mxu0 0.0
      %1358 = vmatpush.msra.mxu0 0.0
      %1359 = vmatpush.msra.mxu0 0.0
      %1360 = vmatpush.msra.mxu0 0.0
      %1361 = vmatpush.msra.mxu0 0.0
      %1362 = vmatpush.msra.mxu0 0.0
      %1363 = vmatpush.msra.mxu0 0.0
      %1364 = vmatpush.msra.mxu0 0.0
      %1365 = vmatpush.msra.mxu0 0.0
      %1366 = vmatpush.msra.mxu0 0.0
      %1367 = vmatpush.msra.mxu0 0.0
      %1368 = vmatpush.msra.mxu0 0.0
      %1369 = vmatpush.msra.mxu0 0.0
      %1370 = vmatpush.msra.mxu0 0.0
      %1371 = vmatpush.msra.mxu0 %v915
      %1372 = vmatmul.f32.gmra.mxu0 %v939
      %v1373 = vpop.f32.mrf.mxu0
      %v1374 = vadd.f32 0.0, %v1373
      %1375 = vmatmul.f32.gmra.mxu0 %v942
      %v1376 = vpop.f32.mrf.mxu0
      %v1377 = vadd.f32 0.0, %v1376
      %1378 = vmatmul.f32.gmra.mxu0 %v945
      %v1379 = vpop.f32.mrf.mxu0
      %v1380 = vadd.f32 0.0, %v1379
      %1381 = vmatmul.f32.gmra.mxu0 %v948
      %v1382 = vpop.f32.mrf.mxu0
      %v1383 = vadd.f32 0.0, %v1382
      %1384 = vdwg.mxu0
      %1385 = vmatpush.msra.mxu0 0.0
      %1386 = vmatpush.msra.mxu0 0.0
      %1387 = vmatpush.msra.mxu0 0.0
      %1388 = vmatpush.msra.mxu0 0.0
      %1389 = vmatpush.msra.mxu0 0.0
      %1390 = vmatpush.msra.mxu0 0.0
      %1391 = vmatpush.msra.mxu0 0.0
      %1392 = vmatpush.msra.mxu0 0.0
      %1393 = vmatpush.msra.mxu0 0.0
      %1394 = vmatpush.msra.mxu0 0.0
      %1395 = vmatpush.msra.mxu0 0.0
      %1396 = vmatpush.msra.mxu0 0.0
      %1397 = vmatpush.msra.mxu0 0.0
      %1398 = vmatpush.msra.mxu0 0.0
      %1399 = vmatpush.msra.mxu0 0.0
      %1400 = vmatpush.msra.mxu0 %v916
      %1401 = vmatmul.f32.gmra.mxu0 %v939
      %v1402 = vpop.f32.mrf.mxu0
      %v1403 = vadd.f32 0.0, %v1402
      %1404 = vmatmul.f32.gmra.mxu0 %v942
      %v1405 = vpop.f32.mrf.mxu0
      %v1406 = vadd.f32 0.0, %v1405
      %1407 = vmatmul.f32.gmra.mxu0 %v945
      %v1408 = vpop.f32.mrf.mxu0
      %v1409 = vadd.f32 0.0, %v1408
      %1410 = vmatmul.f32.gmra.mxu0 %v948
      %v1411 = vpop.f32.mrf.mxu0
      %v1412 = vadd.f32 0.0, %v1411
      %1413 = vdwg.mxu0
      %1414 = vmatpush.msra.mxu0 0.0
      %1415 = vmatpush.msra.mxu0 0.0
      %1416 = vmatpush.msra.mxu0 0.0
      %1417 = vmatpush.msra.mxu0 0.0
      %1418 = vmatpush.msra.mxu0 0.0
      %1419 = vmatpush.msra.mxu0 0.0
      %1420 = vmatpush.msra.mxu0 0.0
      %1421 = vmatpush.msra.mxu0 0.0
      %1422 = vmatpush.msra.mxu0 0.0
      %1423 = vmatpush.msra.mxu0 0.0
      %1424 = vmatpush.msra.mxu0 0.0
      %1425 = vmatpush.msra.mxu0 0.0
      %1426 = vmatpush.msra.mxu0 0.0
      %1427 = vmatpush.msra.mxu0 0.0
      %1428 = vmatpush.msra.mxu0 0.0
      %1429 = vmatpush.msra.mxu0 %v917
      %1430 = vmatmul.f32.gmra.mxu0 %v939
      %v1431 = vpop.f32.mrf.mxu0
      %v1432 = vadd.f32 0.0, %v1431
      %1433 = vmatmul.f32.gmra.mxu0 %v942
      %v1434 = vpop.f32.mrf.mxu0
      %v1435 = vadd.f32 0.0, %v1434
      %1436 = vmatmul.f32.gmra.mxu0 %v945
      %v1437 = vpop.f32.mrf.mxu0
      %v1438 = vadd.f32 0.0, %v1437
      %1439 = vmatmul.f32.gmra.mxu0 %v948
      %v1440 = vpop.f32.mrf.mxu0
      %v1441 = vadd.f32 0.0, %v1440
      %1442 = vdwg.mxu0
      %1443 = vmatpush.msra.mxu0 0.0
      %1444 = vmatpush.msra.mxu0 0.0
      %1445 = vmatpush.msra.mxu0 0.0
      %1446 = vmatpush.msra.mxu0 0.0
      %1447 = vmatpush.msra.mxu0 0.0
      %1448 = vmatpush.msra.mxu0 0.0
      %1449 = vmatpush.msra.mxu0 0.0
      %1450 = vmatpush.msra.mxu0 0.0
      %1451 = vmatpush.msra.mxu0 0.0
      %1452 = vmatpush.msra.mxu0 0.0
      %1453 = vmatpush.msra.mxu0 0.0
      %1454 = vmatpush.msra.mxu0 0.0
      %1455 = vmatpush.msra.mxu0 0.0
      %1456 = vmatpush.msra.mxu0 0.0
      %1457 = vmatpush.msra.mxu0 0.0
      %1458 = vmatpush.msra.mxu0 %v918
      %1459 = vmatmul.f32.gmra.mxu0 %v939
      %v1460 = vpop.f32.mrf.mxu0
      %v1461 = vadd.f32 0.0, %v1460
      %1462 = vmatmul.f32.gmra.mxu0 %v942
      %v1463 = vpop.f32.mrf.mxu0
      %v1464 = vadd.f32 0.0, %v1463
      %1465 = vmatmul.f32.gmra.mxu0 %v945
      %v1466 = vpop.f32.mrf.mxu0
      %v1467 = vadd.f32 0.0, %v1466
      %1468 = vmatmul.f32.gmra.mxu0 %v948
      %v1469 = vpop.f32.mrf.mxu0
      %v1470 = vadd.f32 0.0, %v1469
      %1471 = vdwg.mxu0
      %1472 = vmatpush.msra.mxu0 0.0
      %1473 = vmatpush.msra.mxu0 0.0
      %1474 = vmatpush.msra.mxu0 0.0
      %1475 = vmatpush.msra.mxu0 0.0
      %1476 = vmatpush.msra.mxu0 0.0
      %1477 = vmatpush.msra.mxu0 0.0
      %1478 = vmatpush.msra.mxu0 0.0
      %1479 = vmatpush.msra.mxu0 0.0
      %1480 = vmatpush.msra.mxu0 0.0
      %1481 = vmatpush.msra.mxu0 0.0
      %1482 = vmatpush.msra.mxu0 0.0
      %1483 = vmatpush.msra.mxu0 0.0
      %1484 = vmatpush.msra.mxu0 0.0
      %1485 = vmatpush.msra.mxu0 0.0
      %1486 = vmatpush.msra.mxu0 0.0
      %1487 = vmatpush.msra.mxu0 %v919
      %1488 = vmatmul.f32.gmra.mxu0 %v939
      %v1489 = vpop.f32.mrf.mxu0
      %v1490 = vadd.f32 0.0, %v1489
      %1491 = vmatmul.f32.gmra.mxu0 %v942
      %v1492 = vpop.f32.mrf.mxu0
      %v1493 = vadd.f32 0.0, %v1492
      %1494 = vmatmul.f32.gmra.mxu0 %v945
      %v1495 = vpop.f32.mrf.mxu0
      %v1496 = vadd.f32 0.0, %v1495
      %1497 = vmatmul.f32.gmra.mxu0 %v948
      %v1498 = vpop.f32.mrf.mxu0
      %v1499 = vadd.f32 0.0, %v1498
      %1500 = vdwg.mxu0
      %1501 = vmatpush.msra.mxu0 0.0
      %1502 = vmatpush.msra.mxu0 0.0
      %1503 = vmatpush.msra.mxu0 0.0
      %1504 = vmatpush.msra.mxu0 0.0
      %1505 = vmatpush.msra.mxu0 0.0
      %1506 = vmatpush.msra.mxu0 0.0
      %1507 = vmatpush.msra.mxu0 0.0
      %1508 = vmatpush.msra.mxu0 0.0
      %1509 = vmatpush.msra.mxu0 0.0
      %1510 = vmatpush.msra.mxu0 0.0
      %1511 = vmatpush.msra.mxu0 0.0
      %1512 = vmatpush.msra.mxu0 0.0
      %1513 = vmatpush.msra.mxu0 0.0
      %1514 = vmatpush.msra.mxu0 0.0
      %1515 = vmatpush.msra.mxu0 0.0
      %1516 = vmatpush.msra.mxu0 %v920
      %1517 = vmatmul.f32.gmra.mxu0 %v939
      %v1518 = vpop.f32.mrf.mxu0
      %v1519 = vadd.f32 0.0, %v1518
      %1520 = vmatmul.f32.gmra.mxu0 %v942
      %v1521 = vpop.f32.mrf.mxu0
      %v1522 = vadd.f32 0.0, %v1521
      %1523 = vmatmul.f32.gmra.mxu0 %v945
      %v1524 = vpop.f32.mrf.mxu0
      %v1525 = vadd.f32 0.0, %v1524
      %1526 = vmatmul.f32.gmra.mxu0 %v948
      %v1527 = vpop.f32.mrf.mxu0
      %v1528 = vadd.f32 0.0, %v1527
      %1529 = vdwg.mxu0
      %1530 = vmatpush.msra.mxu0 0.0
      %1531 = vmatpush.msra.mxu0 0.0
      %1532 = vmatpush.msra.mxu0 0.0
      %1533 = vmatpush.msra.mxu0 0.0
      %1534 = vmatpush.msra.mxu0 0.0
      %1535 = vmatpush.msra.mxu0 0.0
      %1536 = vmatpush.msra.mxu0 0.0
      %1537 = vmatpush.msra.mxu0 0.0
      %1538 = vmatpush.msra.mxu0 0.0
      %1539 = vmatpush.msra.mxu0 0.0
      %1540 = vmatpush.msra.mxu0 0.0
      %1541 = vmatpush.msra.mxu0 0.0
      %1542 = vmatpush.msra.mxu0 0.0
      %1543 = vmatpush.msra.mxu0 0.0
      %1544 = vmatpush.msra.mxu0 0.0
      %1545 = vmatpush.msra.mxu0 %v921
      %1546 = vmatmul.f32.gmra.mxu0 %v939
      %v1547 = vpop.f32.mrf.mxu0
      %v1548 = vadd.f32 0.0, %v1547
      %1549 = vmatmul.f32.gmra.mxu0 %v942
      %v1550 = vpop.f32.mrf.mxu0
      %v1551 = vadd.f32 0.0, %v1550
      %1552 = vmatmul.f32.gmra.mxu0 %v945
      %v1553 = vpop.f32.mrf.mxu0
      %v1554 = vadd.f32 0.0, %v1553
      %1555 = vmatmul.f32.gmra.mxu0 %v948
      %v1556 = vpop.f32.mrf.mxu0
      %v1557 = vadd.f32 0.0, %v1556
      %1558 = vdwg.mxu0
      %1559 = vmatpush.msra.mxu0 0.0
      %1560 = vmatpush.msra.mxu0 0.0
      %1561 = vmatpush.msra.mxu0 0.0
      %1562 = vmatpush.msra.mxu0 0.0
      %1563 = vmatpush.msra.mxu0 0.0
      %1564 = vmatpush.msra.mxu0 0.0
      %1565 = vmatpush.msra.mxu0 0.0
      %1566 = vmatpush.msra.mxu0 0.0
      %1567 = vmatpush.msra.mxu0 0.0
      %1568 = vmatpush.msra.mxu0 0.0
      %1569 = vmatpush.msra.mxu0 0.0
      %1570 = vmatpush.msra.mxu0 0.0
      %1571 = vmatpush.msra.mxu0 0.0
      %1572 = vmatpush.msra.mxu0 0.0
      %1573 = vmatpush.msra.mxu0 0.0
      %1574 = vmatpush.msra.mxu0 %v922
      %1575 = vmatmul.f32.gmra.mxu0 %v939
      %v1576 = vpop.f32.mrf.mxu0
      %v1577 = vadd.f32 0.0, %v1576
      %1578 = vmatmul.f32.gmra.mxu0 %v942
      %v1579 = vpop.f32.mrf.mxu0
      %v1580 = vadd.f32 0.0, %v1579
      %1581 = vmatmul.f32.gmra.mxu0 %v945
      %v1582 = vpop.f32.mrf.mxu0
      %v1583 = vadd.f32 0.0, %v1582
      %1584 = vmatmul.f32.gmra.mxu0 %v948
      %v1585 = vpop.f32.mrf.mxu0
      %v1586 = vadd.f32 0.0, %v1585
      %1587 = vdwg.mxu0
      %1588 = vmatpush.msra.mxu0 0.0
      %1589 = vmatpush.msra.mxu0 0.0
      %1590 = vmatpush.msra.mxu0 0.0
      %1591 = vmatpush.msra.mxu0 0.0
      %1592 = vmatpush.msra.mxu0 0.0
      %1593 = vmatpush.msra.mxu0 0.0
      %1594 = vmatpush.msra.mxu0 0.0
      %1595 = vmatpush.msra.mxu0 0.0
      %1596 = vmatpush.msra.mxu0 0.0
      %1597 = vmatpush.msra.mxu0 0.0
      %1598 = vmatpush.msra.mxu0 0.0
      %1599 = vmatpush.msra.mxu0 0.0
      %1600 = vmatpush.msra.mxu0 0.0
      %1601 = vmatpush.msra.mxu0 0.0
      %1602 = vmatpush.msra.mxu0 0.0
      %1603 = vmatpush.msra.mxu0 %v923
      %1604 = vmatmul.f32.gmra.mxu0 %v939
      %v1605 = vpop.f32.mrf.mxu0
      %v1606 = vadd.f32 0.0, %v1605
      %1607 = vmatmul.f32.gmra.mxu0 %v942
      %v1608 = vpop.f32.mrf.mxu0
      %v1609 = vadd.f32 0.0, %v1608
      %1610 = vmatmul.f32.gmra.mxu0 %v945
      %v1611 = vpop.f32.mrf.mxu0
      %v1612 = vadd.f32 0.0, %v1611
      %1613 = vmatmul.f32.gmra.mxu0 %v948
      %v1614 = vpop.f32.mrf.mxu0
      %v1615 = vadd.f32 0.0, %v1614
      %1616 = vdwg.mxu0
      %1617 = vmatpush.msra.mxu0 0.0
      %1618 = vmatpush.msra.mxu0 0.0
      %1619 = vmatpush.msra.mxu0 0.0
      %1620 = vmatpush.msra.mxu0 0.0
      %1621 = vmatpush.msra.mxu0 0.0
      %1622 = vmatpush.msra.mxu0 0.0
      %1623 = vmatpush.msra.mxu0 0.0
      %1624 = vmatpush.msra.mxu0 0.0
      %1625 = vmatpush.msra.mxu0 0.0
      %1626 = vmatpush.msra.mxu0 0.0
      %1627 = vmatpush.msra.mxu0 0.0
      %1628 = vmatpush.msra.mxu0 0.0
      %1629 = vmatpush.msra.mxu0 0.0
      %1630 = vmatpush.msra.mxu0 0.0
      %1631 = vmatpush.msra.mxu0 0.0
      %1632 = vmatpush.msra.mxu0 %v924
      %1633 = vmatmul.f32.gmra.mxu0 %v939
      %v1634 = vpop.f32.mrf.mxu0
      %v1635 = vadd.f32 0.0, %v1634
      %1636 = vmatmul.f32.gmra.mxu0 %v942
      %v1637 = vpop.f32.mrf.mxu0
      %v1638 = vadd.f32 0.0, %v1637
      %1639 = vmatmul.f32.gmra.mxu0 %v945
      %v1640 = vpop.f32.mrf.mxu0
      %v1641 = vadd.f32 0.0, %v1640
      %1642 = vmatmul.f32.gmra.mxu0 %v948
      %v1643 = vpop.f32.mrf.mxu0
      %v1644 = vadd.f32 0.0, %v1643
      %1645 = vdwg.mxu0
      %1646 = vmatpush.msra.mxu0 0.0
      %1647 = vmatpush.msra.mxu0 0.0
      %1648 = vmatpush.msra.mxu0 0.0
      %1649 = vmatpush.msra.mxu0 0.0
      %1650 = vmatpush.msra.mxu0 0.0
      %1651 = vmatpush.msra.mxu0 0.0
      %1652 = vmatpush.msra.mxu0 0.0
      %1653 = vmatpush.msra.mxu0 0.0
      %1654 = vmatpush.msra.mxu0 0.0
      %1655 = vmatpush.msra.mxu0 0.0
      %1656 = vmatpush.msra.mxu0 0.0
      %1657 = vmatpush.msra.mxu0 0.0
      %1658 = vmatpush.msra.mxu0 0.0
      %1659 = vmatpush.msra.mxu0 0.0
      %1660 = vmatpush.msra.mxu0 0.0
      %1661 = vmatpush.msra.mxu0 %v925
      %1662 = vmatmul.f32.gmra.mxu0 %v939
      %v1663 = vpop.f32.mrf.mxu0
      %v1664 = vadd.f32 0.0, %v1663
      %1665 = vmatmul.f32.gmra.mxu0 %v942
      %v1666 = vpop.f32.mrf.mxu0
      %v1667 = vadd.f32 0.0, %v1666
      %1668 = vmatmul.f32.gmra.mxu0 %v945
      %v1669 = vpop.f32.mrf.mxu0
      %v1670 = vadd.f32 0.0, %v1669
      %1671 = vmatmul.f32.gmra.mxu0 %v948
      %v1672 = vpop.f32.mrf.mxu0
      %v1673 = vadd.f32 0.0, %v1672
      %1674 = vdwg.mxu0
      %1675 = vmatpush.msra.mxu0 0.0
      %1676 = vmatpush.msra.mxu0 0.0
      %1677 = vmatpush.msra.mxu0 0.0
      %1678 = vmatpush.msra.mxu0 0.0
      %1679 = vmatpush.msra.mxu0 0.0
      %1680 = vmatpush.msra.mxu0 0.0
      %1681 = vmatpush.msra.mxu0 0.0
      %1682 = vmatpush.msra.mxu0 0.0
      %1683 = vmatpush.msra.mxu0 0.0
      %1684 = vmatpush.msra.mxu0 0.0
      %1685 = vmatpush.msra.mxu0 0.0
      %1686 = vmatpush.msra.mxu0 0.0
      %1687 = vmatpush.msra.mxu0 0.0
      %1688 = vmatpush.msra.mxu0 0.0
      %1689 = vmatpush.msra.mxu0 0.0
      %1690 = vmatpush.msra.mxu0 %v926
      %1691 = vmatmul.f32.gmra.mxu0 %v939
      %v1692 = vpop.f32.mrf.mxu0
      %v1693 = vadd.f32 0.0, %v1692
      %1694 = vmatmul.f32.gmra.mxu0 %v942
      %v1695 = vpop.f32.mrf.mxu0
      %v1696 = vadd.f32 0.0, %v1695
      %1697 = vmatmul.f32.gmra.mxu0 %v945
      %v1698 = vpop.f32.mrf.mxu0
      %v1699 = vadd.f32 0.0, %v1698
      %1700 = vmatmul.f32.gmra.mxu0 %v948
      %v1701 = vpop.f32.mrf.mxu0
      %v1702 = vadd.f32 0.0, %v1701
      %1703 = vdwg.mxu0
      %1704 = vmatpush.msra.mxu0 0.0
      %1705 = vmatpush.msra.mxu0 0.0
      %1706 = vmatpush.msra.mxu0 0.0
      %1707 = vmatpush.msra.mxu0 0.0
      %1708 = vmatpush.msra.mxu0 0.0
      %1709 = vmatpush.msra.mxu0 0.0
      %1710 = vmatpush.msra.mxu0 0.0
      %1711 = vmatpush.msra.mxu0 0.0
      %1712 = vmatpush.msra.mxu0 0.0
      %1713 = vmatpush.msra.mxu0 0.0
      %1714 = vmatpush.msra.mxu0 0.0
      %1715 = vmatpush.msra.mxu0 0.0
      %1716 = vmatpush.msra.mxu0 0.0
      %1717 = vmatpush.msra.mxu0 0.0
      %1718 = vmatpush.msra.mxu0 0.0
      %1719 = vmatpush.msra.mxu0 %v927
      %1720 = vmatmul.f32.gmra.mxu0 %v939
      %v1721 = vpop.f32.mrf.mxu0
      %v1722 = vadd.f32 0.0, %v1721
      %1723 = vmatmul.f32.gmra.mxu0 %v942
      %v1724 = vpop.f32.mrf.mxu0
      %v1725 = vadd.f32 0.0, %v1724
      %1726 = vmatmul.f32.gmra.mxu0 %v945
      %v1727 = vpop.f32.mrf.mxu0
      %v1728 = vadd.f32 0.0, %v1727
      %1729 = vmatmul.f32.gmra.mxu0 %v948
      %v1730 = vpop.f32.mrf.mxu0
      %v1731 = vadd.f32 0.0, %v1730
      %1732 = vdwg.mxu0
      %1733 = vmatpush.msra.mxu0 0.0
      %1734 = vmatpush.msra.mxu0 0.0
      %1735 = vmatpush.msra.mxu0 0.0
      %1736 = vmatpush.msra.mxu0 0.0
      %1737 = vmatpush.msra.mxu0 0.0
      %1738 = vmatpush.msra.mxu0 0.0
      %1739 = vmatpush.msra.mxu0 0.0
      %1740 = vmatpush.msra.mxu0 0.0
      %1741 = vmatpush.msra.mxu0 0.0
      %1742 = vmatpush.msra.mxu0 0.0
      %1743 = vmatpush.msra.mxu0 0.0
      %1744 = vmatpush.msra.mxu0 0.0
      %1745 = vmatpush.msra.mxu0 0.0
      %1746 = vmatpush.msra.mxu0 0.0
      %1747 = vmatpush.msra.mxu0 0.0
      %1748 = vmatpush.msra.mxu0 %v928
      %1749 = vmatmul.f32.gmra.mxu0 %v939
      %v1750 = vpop.f32.mrf.mxu0
      %v1751 = vadd.f32 0.0, %v1750
      %1752 = vmatmul.f32.gmra.mxu0 %v942
      %v1753 = vpop.f32.mrf.mxu0
      %v1754 = vadd.f32 0.0, %v1753
      %1755 = vmatmul.f32.gmra.mxu0 %v945
      %v1756 = vpop.f32.mrf.mxu0
      %v1757 = vadd.f32 0.0, %v1756
      %1758 = vmatmul.f32.gmra.mxu0 %v948
      %v1759 = vpop.f32.mrf.mxu0
      %v1760 = vadd.f32 0.0, %v1759
      %1761 = vdwg.mxu0
      %1762 = vmatpush.msra.mxu0 0.0
      %1763 = vmatpush.msra.mxu0 0.0
      %1764 = vmatpush.msra.mxu0 0.0
      %1765 = vmatpush.msra.mxu0 0.0
      %1766 = vmatpush.msra.mxu0 0.0
      %1767 = vmatpush.msra.mxu0 0.0
      %1768 = vmatpush.msra.mxu0 0.0
      %1769 = vmatpush.msra.mxu0 0.0
      %1770 = vmatpush.msra.mxu0 0.0
      %1771 = vmatpush.msra.mxu0 0.0
      %1772 = vmatpush.msra.mxu0 0.0
      %1773 = vmatpush.msra.mxu0 0.0
      %1774 = vmatpush.msra.mxu0 0.0
      %1775 = vmatpush.msra.mxu0 0.0
      %1776 = vmatpush.msra.mxu0 0.0
      %1777 = vmatpush.msra.mxu0 %v929
      %1778 = vmatmul.f32.gmra.mxu0 %v939
      %v1779 = vpop.f32.mrf.mxu0
      %v1780 = vadd.f32 0.0, %v1779
      %1781 = vmatmul.f32.gmra.mxu0 %v942
      %v1782 = vpop.f32.mrf.mxu0
      %v1783 = vadd.f32 0.0, %v1782
      %1784 = vmatmul.f32.gmra.mxu0 %v945
      %v1785 = vpop.f32.mrf.mxu0
      %v1786 = vadd.f32 0.0, %v1785
      %1787 = vmatmul.f32.gmra.mxu0 %v948
      %v1788 = vpop.f32.mrf.mxu0
      %v1789 = vadd.f32 0.0, %v1788
      %1790 = vdwg.mxu0
      %1791 = vmatpush.msra.mxu0 0.0
      %1792 = vmatpush.msra.mxu0 0.0
      %1793 = vmatpush.msra.mxu0 0.0
      %1794 = vmatpush.msra.mxu0 0.0
      %1795 = vmatpush.msra.mxu0 0.0
      %1796 = vmatpush.msra.mxu0 0.0
      %1797 = vmatpush.msra.mxu0 0.0
      %1798 = vmatpush.msra.mxu0 0.0
      %1799 = vmatpush.msra.mxu0 0.0
      %1800 = vmatpush.msra.mxu0 0.0
      %1801 = vmatpush.msra.mxu0 0.0
      %1802 = vmatpush.msra.mxu0 0.0
      %1803 = vmatpush.msra.mxu0 0.0
      %1804 = vmatpush.msra.mxu0 0.0
      %1805 = vmatpush.msra.mxu0 0.0
      %1806 = vmatpush.msra.mxu0 %v930
      %1807 = vmatmul.f32.gmra.mxu0 %v939
      %v1808 = vpop.f32.mrf.mxu0
      %v1809 = vadd.f32 0.0, %v1808
      %1810 = vmatmul.f32.gmra.mxu0 %v942
      %v1811 = vpop.f32.mrf.mxu0
      %v1812 = vadd.f32 0.0, %v1811
      %1813 = vmatmul.f32.gmra.mxu0 %v945
      %v1814 = vpop.f32.mrf.mxu0
      %v1815 = vadd.f32 0.0, %v1814
      %1816 = vmatmul.f32.gmra.mxu0 %v948
      %v1817 = vpop.f32.mrf.mxu0
      %v1818 = vadd.f32 0.0, %v1817
      %1819 = vdwg.mxu0
      %1820 = vmatpush.msra.mxu0 0.0
      %1821 = vmatpush.msra.mxu0 0.0
      %1822 = vmatpush.msra.mxu0 0.0
      %1823 = vmatpush.msra.mxu0 0.0
      %1824 = vmatpush.msra.mxu0 0.0
      %1825 = vmatpush.msra.mxu0 0.0
      %1826 = vmatpush.msra.mxu0 0.0
      %1827 = vmatpush.msra.mxu0 0.0
      %1828 = vmatpush.msra.mxu0 0.0
      %1829 = vmatpush.msra.mxu0 0.0
      %1830 = vmatpush.msra.mxu0 0.0
      %1831 = vmatpush.msra.mxu0 0.0
      %1832 = vmatpush.msra.mxu0 0.0
      %1833 = vmatpush.msra.mxu0 0.0
      %1834 = vmatpush.msra.mxu0 0.0
      %1835 = vmatpush.msra.mxu0 %v931
      %1836 = vmatmul.f32.gmra.mxu0 %v939
      %v1837 = vpop.f32.mrf.mxu0
      %v1838 = vadd.f32 0.0, %v1837
      %1839 = vmatmul.f32.gmra.mxu0 %v942
      %v1840 = vpop.f32.mrf.mxu0
      %v1841 = vadd.f32 0.0, %v1840
      %1842 = vmatmul.f32.gmra.mxu0 %v945
      %v1843 = vpop.f32.mrf.mxu0
      %v1844 = vadd.f32 0.0, %v1843
      %1845 = vmatmul.f32.gmra.mxu0 %v948
      %v1846 = vpop.f32.mrf.mxu0
      %v1847 = vadd.f32 0.0, %v1846
      %1848 = vdwg.mxu0
      %1849 = vmatpush.msra.mxu0 0.0
      %1850 = vmatpush.msra.mxu0 0.0
      %1851 = vmatpush.msra.mxu0 0.0
      %1852 = vmatpush.msra.mxu0 0.0
      %1853 = vmatpush.msra.mxu0 0.0
      %1854 = vmatpush.msra.mxu0 0.0
      %1855 = vmatpush.msra.mxu0 0.0
      %1856 = vmatpush.msra.mxu0 0.0
      %1857 = vmatpush.msra.mxu0 0.0
      %1858 = vmatpush.msra.mxu0 0.0
      %1859 = vmatpush.msra.mxu0 0.0
      %1860 = vmatpush.msra.mxu0 0.0
      %1861 = vmatpush.msra.mxu0 0.0
      %1862 = vmatpush.msra.mxu0 0.0
      %1863 = vmatpush.msra.mxu0 0.0
      %1864 = vmatpush.msra.mxu0 %v932
      %1865 = vmatmul.f32.gmra.mxu0 %v939
      %v1866 = vpop.f32.mrf.mxu0
      %v1867 = vadd.f32 0.0, %v1866
      %1868 = vmatmul.f32.gmra.mxu0 %v942
      %v1869 = vpop.f32.mrf.mxu0
      %v1870 = vadd.f32 0.0, %v1869
      %1871 = vmatmul.f32.gmra.mxu0 %v945
      %v1872 = vpop.f32.mrf.mxu0
      %v1873 = vadd.f32 0.0, %v1872
      %1874 = vmatmul.f32.gmra.mxu0 %v948
      %v1875 = vpop.f32.mrf.mxu0
      %v1876 = vadd.f32 0.0, %v1875
      %1877 = vdwg.mxu0
      %v1878 = vmul.f32 %v968, %v968
      %v1879 = vmul.f32 %v971, %v971
      %v1880 = vmul.f32 %v974, %v974
      %v1881 = vmul.f32 %v977, %v977
      %v1882 = vmul.f32 %v997, %v997
      %v1883 = vmul.f32 %v1000, %v1000
      %v1884 = vmul.f32 %v1003, %v1003
      %v1885 = vmul.f32 %v1006, %v1006
      %v1886 = vmul.f32 %v1026, %v1026
      %v1887 = vmul.f32 %v1029, %v1029
      %v1888 = vmul.f32 %v1032, %v1032
      %v1889 = vmul.f32 %v1035, %v1035
      %v1890 = vmul.f32 %v1055, %v1055
      %v1891 = vmul.f32 %v1058, %v1058
      %v1892 = vmul.f32 %v1061, %v1061
      %v1893 = vmul.f32 %v1064, %v1064
      %v1894 = vmul.f32 %v1084, %v1084
      %v1895 = vmul.f32 %v1087, %v1087
      %v1896 = vmul.f32 %v1090, %v1090
      %v1897 = vmul.f32 %v1093, %v1093
      %v1898 = vmul.f32 %v1113, %v1113
      %v1899 = vmul.f32 %v1116, %v1116
      %v1900 = vmul.f32 %v1119, %v1119
      %v1901 = vmul.f32 %v1122, %v1122
      %v1902 = vmul.f32 %v1142, %v1142
      %v1903 = vmul.f32 %v1145, %v1145
      %v1904 = vmul.f32 %v1148, %v1148
      %v1905 = vmul.f32 %v1151, %v1151
      %v1906 = vmul.f32 %v1171, %v1171
      %v1907 = vmul.f32 %v1174, %v1174
      %v1908 = vmul.f32 %v1177, %v1177
      %v1909 = vmul.f32 %v1180, %v1180
      %v1910 = vmul.f32 %v1200, %v1200
      %v1911 = vmul.f32 %v1203, %v1203
      %v1912 = vmul.f32 %v1206, %v1206
      %v1913 = vmul.f32 %v1209, %v1209
      %v1914 = vmul.f32 %v1229, %v1229
      %v1915 = vmul.f32 %v1232, %v1232
      %v1916 = vmul.f32 %v1235, %v1235
      %v1917 = vmul.f32 %v1238, %v1238
      %v1918 = vmul.f32 %v1258, %v1258
      %v1919 = vmul.f32 %v1261, %v1261
      %v1920 = vmul.f32 %v1264, %v1264
      %v1921 = vmul.f32 %v1267, %v1267
      %v1922 = vmul.f32 %v1287, %v1287
      %v1923 = vmul.f32 %v1290, %v1290
      %v1924 = vmul.f32 %v1293, %v1293
      %v1925 = vmul.f32 %v1296, %v1296
      %v1926 = vmul.f32 %v1316, %v1316
      %v1927 = vmul.f32 %v1319, %v1319
      %v1928 = vmul.f32 %v1322, %v1322
      %v1929 = vmul.f32 %v1325, %v1325
      %v1930 = vmul.f32 %v1345, %v1345
      %v1931 = vmul.f32 %v1348, %v1348
      %v1932 = vmul.f32 %v1351, %v1351
      %v1933 = vmul.f32 %v1354, %v1354
      %v1934 = vmul.f32 %v1374, %v1374
      %v1935 = vmul.f32 %v1377, %v1377
      %v1936 = vmul.f32 %v1380, %v1380
      %v1937 = vmul.f32 %v1383, %v1383
      %v1938 = vmul.f32 %v1403, %v1403
      %v1939 = vmul.f32 %v1406, %v1406
      %v1940 = vmul.f32 %v1409, %v1409
      %v1941 = vmul.f32 %v1412, %v1412
      %v1942 = vmul.f32 %v1432, %v1432
      %v1943 = vmul.f32 %v1435, %v1435
      %v1944 = vmul.f32 %v1438, %v1438
      %v1945 = vmul.f32 %v1441, %v1441
      %v1946 = vmul.f32 %v1461, %v1461
      %v1947 = vmul.f32 %v1464, %v1464
      %v1948 = vmul.f32 %v1467, %v1467
      %v1949 = vmul.f32 %v1470, %v1470
      %v1950 = vmul.f32 %v1490, %v1490
      %v1951 = vmul.f32 %v1493, %v1493
      %v1952 = vmul.f32 %v1496, %v1496
      %v1953 = vmul.f32 %v1499, %v1499
      %v1954 = vmul.f32 %v1519, %v1519
      %v1955 = vmul.f32 %v1522, %v1522
      %v1956 = vmul.f32 %v1525, %v1525
      %v1957 = vmul.f32 %v1528, %v1528
      %v1958 = vmul.f32 %v1548, %v1548
      %v1959 = vmul.f32 %v1551, %v1551
      %v1960 = vmul.f32 %v1554, %v1554
      %v1961 = vmul.f32 %v1557, %v1557
      %v1962 = vmul.f32 %v1577, %v1577
      %v1963 = vmul.f32 %v1580, %v1580
      %v1964 = vmul.f32 %v1583, %v1583
      %v1965 = vmul.f32 %v1586, %v1586
      %v1966 = vmul.f32 %v1606, %v1606
      %v1967 = vmul.f32 %v1609, %v1609
      %v1968 = vmul.f32 %v1612, %v1612
      %v1969 = vmul.f32 %v1615, %v1615
      %v1970 = vmul.f32 %v1635, %v1635
      %v1971 = vmul.f32 %v1638, %v1638
      %v1972 = vmul.f32 %v1641, %v1641
      %v1973 = vmul.f32 %v1644, %v1644
      %v1974 = vmul.f32 %v1664, %v1664
      %v1975 = vmul.f32 %v1667, %v1667
      %v1976 = vmul.f32 %v1670, %v1670
      %v1977 = vmul.f32 %v1673, %v1673
      %v1978 = vmul.f32 %v1693, %v1693
      %v1979 = vmul.f32 %v1696, %v1696
      %v1980 = vmul.f32 %v1699, %v1699
      %v1981 = vmul.f32 %v1702, %v1702
      %v1982 = vmul.f32 %v1722, %v1722
      %v1983 = vmul.f32 %v1725, %v1725
      %v1984 = vmul.f32 %v1728, %v1728
      %v1985 = vmul.f32 %v1731, %v1731
      %v1986 = vmul.f32 %v1751, %v1751
      %v1987 = vmul.f32 %v1754, %v1754
      %v1988 = vmul.f32 %v1757, %v1757
      %v1989 = vmul.f32 %v1760, %v1760
      %v1990 = vmul.f32 %v1780, %v1780
      %v1991 = vmul.f32 %v1783, %v1783
      %v1992 = vmul.f32 %v1786, %v1786
      %v1993 = vmul.f32 %v1789, %v1789
      %v1994 = vmul.f32 %v1809, %v1809
      %v1995 = vmul.f32 %v1812, %v1812
      %v1996 = vmul.f32 %v1815, %v1815
      %v1997 = vmul.f32 %v1818, %v1818
      %v1998 = vmul.f32 %v1838, %v1838
      %v1999 = vmul.f32 %v1841, %v1841
      %v2000 = vmul.f32 %v1844, %v1844
      %v2001 = vmul.f32 %v1847, %v1847
      %v2002 = vmul.f32 %v1867, %v1867
      %v2003 = vmul.f32 %v1870, %v1870
      %v2004 = vmul.f32 %v1873, %v1873
      %v2005 = vmul.f32 %v1876, %v1876
      %2006 = vadd.xlane.f32.xlu0 %v1878
      %v2007 = vpop.xlane.xlu0 %2006
      %2008 = vadd.xlane.f32.xlu0 %v1879
      %v2009 = vpop.xlane.xlu0 %2008
      %2010 = vadd.xlane.f32.xlu0 %v1880
      %v2011 = vpop.xlane.xlu0 %2010
      %2012 = vadd.xlane.f32.xlu0 %v1881
      %v2013 = vpop.xlane.xlu0 %2012
      %2014 = vadd.xlane.f32.xlu0 %v1882
      %v2015 = vpop.xlane.xlu0 %2014
      %2016 = vadd.xlane.f32.xlu0 %v1883
      %v2017 = vpop.xlane.xlu0 %2016
      %2018 = vadd.xlane.f32.xlu0 %v1884
      %v2019 = vpop.xlane.xlu0 %2018
      %2020 = vadd.xlane.f32.xlu0 %v1885
      %v2021 = vpop.xlane.xlu0 %2020
      %2022 = vadd.xlane.f32.xlu0 %v1886
      %v2023 = vpop.xlane.xlu0 %2022
      %2024 = vadd.xlane.f32.xlu0 %v1887
      %v2025 = vpop.xlane.xlu0 %2024
      %2026 = vadd.xlane.f32.xlu0 %v1888
      %v2027 = vpop.xlane.xlu0 %2026
      %2028 = vadd.xlane.f32.xlu0 %v1889
      %v2029 = vpop.xlane.xlu0 %2028
      %2030 = vadd.xlane.f32.xlu0 %v1890
      %v2031 = vpop.xlane.xlu0 %2030
      %2032 = vadd.xlane.f32.xlu0 %v1891
      %v2033 = vpop.xlane.xlu0 %2032
      %2034 = vadd.xlane.f32.xlu0 %v1892
      %v2035 = vpop.xlane.xlu0 %2034
      %2036 = vadd.xlane.f32.xlu0 %v1893
      %v2037 = vpop.xlane.xlu0 %2036
      %2038 = vadd.xlane.f32.xlu0 %v1894
      %v2039 = vpop.xlane.xlu0 %2038
      %2040 = vadd.xlane.f32.xlu0 %v1895
      %v2041 = vpop.xlane.xlu0 %2040
      %2042 = vadd.xlane.f32.xlu0 %v1896
      %v2043 = vpop.xlane.xlu0 %2042
      %2044 = vadd.xlane.f32.xlu0 %v1897
      %v2045 = vpop.xlane.xlu0 %2044
      %2046 = vadd.xlane.f32.xlu0 %v1898
      %v2047 = vpop.xlane.xlu0 %2046
      %2048 = vadd.xlane.f32.xlu0 %v1899
      %v2049 = vpop.xlane.xlu0 %2048
      %2050 = vadd.xlane.f32.xlu0 %v1900
      %v2051 = vpop.xlane.xlu0 %2050
      %2052 = vadd.xlane.f32.xlu0 %v1901
      %v2053 = vpop.xlane.xlu0 %2052
      %2054 = vadd.xlane.f32.xlu0 %v1902
      %v2055 = vpop.xlane.xlu0 %2054
      %2056 = vadd.xlane.f32.xlu0 %v1903
      %v2057 = vpop.xlane.xlu0 %2056
      %2058 = vadd.xlane.f32.xlu0 %v1904
      %v2059 = vpop.xlane.xlu0 %2058
      %2060 = vadd.xlane.f32.xlu0 %v1905
      %v2061 = vpop.xlane.xlu0 %2060
      %2062 = vadd.xlane.f32.xlu0 %v1906
      %v2063 = vpop.xlane.xlu0 %2062
      %2064 = vadd.xlane.f32.xlu0 %v1907
      %v2065 = vpop.xlane.xlu0 %2064
      %2066 = vadd.xlane.f32.xlu0 %v1908
      %v2067 = vpop.xlane.xlu0 %2066
      %2068 = vadd.xlane.f32.xlu0 %v1909
      %v2069 = vpop.xlane.xlu0 %2068
      %2070 = vadd.xlane.f32.xlu0 %v1910
      %v2071 = vpop.xlane.xlu0 %2070
      %2072 = vadd.xlane.f32.xlu0 %v1911
      %v2073 = vpop.xlane.xlu0 %2072
      %2074 = vadd.xlane.f32.xlu0 %v1912
      %v2075 = vpop.xlane.xlu0 %2074
      %2076 = vadd.xlane.f32.xlu0 %v1913
      %v2077 = vpop.xlane.xlu0 %2076
      %2078 = vadd.xlane.f32.xlu0 %v1914
      %v2079 = vpop.xlane.xlu0 %2078
      %2080 = vadd.xlane.f32.xlu0 %v1915
      %v2081 = vpop.xlane.xlu0 %2080
      %2082 = vadd.xlane.f32.xlu0 %v1916
      %v2083 = vpop.xlane.xlu0 %2082
      %2084 = vadd.xlane.f32.xlu0 %v1917
      %v2085 = vpop.xlane.xlu0 %2084
      %2086 = vadd.xlane.f32.xlu0 %v1918
      %v2087 = vpop.xlane.xlu0 %2086
      %2088 = vadd.xlane.f32.xlu0 %v1919
      %v2089 = vpop.xlane.xlu0 %2088
      %2090 = vadd.xlane.f32.xlu0 %v1920
      %v2091 = vpop.xlane.xlu0 %2090
      %2092 = vadd.xlane.f32.xlu0 %v1921
      %v2093 = vpop.xlane.xlu0 %2092
      %2094 = vadd.xlane.f32.xlu0 %v1922
      %v2095 = vpop.xlane.xlu0 %2094
      %2096 = vadd.xlane.f32.xlu0 %v1923
      %v2097 = vpop.xlane.xlu0 %2096
      %2098 = vadd.xlane.f32.xlu0 %v1924
      %v2099 = vpop.xlane.xlu0 %2098
      %2100 = vadd.xlane.f32.xlu0 %v1925
      %v2101 = vpop.xlane.xlu0 %2100
      %2102 = vadd.xlane.f32.xlu0 %v1926
      %v2103 = vpop.xlane.xlu0 %2102
      %2104 = vadd.xlane.f32.xlu0 %v1927
      %v2105 = vpop.xlane.xlu0 %2104
      %2106 = vadd.xlane.f32.xlu0 %v1928
      %v2107 = vpop.xlane.xlu0 %2106
      %2108 = vadd.xlane.f32.xlu0 %v1929
      %v2109 = vpop.xlane.xlu0 %2108
      %2110 = vadd.xlane.f32.xlu0 %v1930
      %v2111 = vpop.xlane.xlu0 %2110
      %2112 = vadd.xlane.f32.xlu0 %v1931
      %v2113 = vpop.xlane.xlu0 %2112
      %2114 = vadd.xlane.f32.xlu0 %v1932
      %v2115 = vpop.xlane.xlu0 %2114
      %2116 = vadd.xlane.f32.xlu0 %v1933
      %v2117 = vpop.xlane.xlu0 %2116
      %2118 = vadd.xlane.f32.xlu0 %v1934
      %v2119 = vpop.xlane.xlu0 %2118
      %2120 = vadd.xlane.f32.xlu0 %v1935
      %v2121 = vpop.xlane.xlu0 %2120
      %2122 = vadd.xlane.f32.xlu0 %v1936
      %v2123 = vpop.xlane.xlu0 %2122
      %2124 = vadd.xlane.f32.xlu0 %v1937
      %v2125 = vpop.xlane.xlu0 %2124
      %2126 = vadd.xlane.f32.xlu0 %v1938
      %v2127 = vpop.xlane.xlu0 %2126
      %2128 = vadd.xlane.f32.xlu0 %v1939
      %v2129 = vpop.xlane.xlu0 %2128
      %2130 = vadd.xlane.f32.xlu0 %v1940
      %v2131 = vpop.xlane.xlu0 %2130
      %2132 = vadd.xlane.f32.xlu0 %v1941
      %v2133 = vpop.xlane.xlu0 %2132
      %2134 = vadd.xlane.f32.xlu0 %v1942
      %v2135 = vpop.xlane.xlu0 %2134
      %2136 = vadd.xlane.f32.xlu0 %v1943
      %v2137 = vpop.xlane.xlu0 %2136
      %2138 = vadd.xlane.f32.xlu0 %v1944
      %v2139 = vpop.xlane.xlu0 %2138
      %2140 = vadd.xlane.f32.xlu0 %v1945
      %v2141 = vpop.xlane.xlu0 %2140
      %2142 = vadd.xlane.f32.xlu0 %v1946
      %v2143 = vpop.xlane.xlu0 %2142
      %2144 = vadd.xlane.f32.xlu0 %v1947
      %v2145 = vpop.xlane.xlu0 %2144
      %2146 = vadd.xlane.f32.xlu0 %v1948
      %v2147 = vpop.xlane.xlu0 %2146
      %2148 = vadd.xlane.f32.xlu0 %v1949
      %v2149 = vpop.xlane.xlu0 %2148
      %2150 = vadd.xlane.f32.xlu0 %v1950
      %v2151 = vpop.xlane.xlu0 %2150
      %2152 = vadd.xlane.f32.xlu0 %v1951
      %v2153 = vpop.xlane.xlu0 %2152
      %2154 = vadd.xlane.f32.xlu0 %v1952
      %v2155 = vpop.xlane.xlu0 %2154
      %2156 = vadd.xlane.f32.xlu0 %v1953
      %v2157 = vpop.xlane.xlu0 %2156
      %2158 = vadd.xlane.f32.xlu0 %v1954
      %v2159 = vpop.xlane.xlu0 %2158
      %2160 = vadd.xlane.f32.xlu0 %v1955
      %v2161 = vpop.xlane.xlu0 %2160
      %2162 = vadd.xlane.f32.xlu0 %v1956
      %v2163 = vpop.xlane.xlu0 %2162
      %2164 = vadd.xlane.f32.xlu0 %v1957
      %v2165 = vpop.xlane.xlu0 %2164
      %2166 = vadd.xlane.f32.xlu0 %v1958
      %v2167 = vpop.xlane.xlu0 %2166
      %2168 = vadd.xlane.f32.xlu0 %v1959
      %v2169 = vpop.xlane.xlu0 %2168
      %2170 = vadd.xlane.f32.xlu0 %v1960
      %v2171 = vpop.xlane.xlu0 %2170
      %2172 = vadd.xlane.f32.xlu0 %v1961
      %v2173 = vpop.xlane.xlu0 %2172
      %2174 = vadd.xlane.f32.xlu0 %v1962
      %v2175 = vpop.xlane.xlu0 %2174
      %2176 = vadd.xlane.f32.xlu0 %v1963
      %v2177 = vpop.xlane.xlu0 %2176
      %2178 = vadd.xlane.f32.xlu0 %v1964
      %v2179 = vpop.xlane.xlu0 %2178
      %2180 = vadd.xlane.f32.xlu0 %v1965
      %v2181 = vpop.xlane.xlu0 %2180
      %2182 = vadd.xlane.f32.xlu0 %v1966
      %v2183 = vpop.xlane.xlu0 %2182
      %2184 = vadd.xlane.f32.xlu0 %v1967
      %v2185 = vpop.xlane.xlu0 %2184
      %2186 = vadd.xlane.f32.xlu0 %v1968
      %v2187 = vpop.xlane.xlu0 %2186
      %2188 = vadd.xlane.f32.xlu0 %v1969
      %v2189 = vpop.xlane.xlu0 %2188
      %2190 = vadd.xlane.f32.xlu0 %v1970
      %v2191 = vpop.xlane.xlu0 %2190
      %2192 = vadd.xlane.f32.xlu0 %v1971
      %v2193 = vpop.xlane.xlu0 %2192
      %2194 = vadd.xlane.f32.xlu0 %v1972
      %v2195 = vpop.xlane.xlu0 %2194
      %2196 = vadd.xlane.f32.xlu0 %v1973
      %v2197 = vpop.xlane.xlu0 %2196
      %2198 = vadd.xlane.f32.xlu0 %v1974
      %v2199 = vpop.xlane.xlu0 %2198
      %2200 = vadd.xlane.f32.xlu0 %v1975
      %v2201 = vpop.xlane.xlu0 %2200
      %2202 = vadd.xlane.f32.xlu0 %v1976
      %v2203 = vpop.xlane.xlu0 %2202
      %2204 = vadd.xlane.f32.xlu0 %v1977
      %v2205 = vpop.xlane.xlu0 %2204
      %2206 = vadd.xlane.f32.xlu0 %v1978
      %v2207 = vpop.xlane.xlu0 %2206
      %2208 = vadd.xlane.f32.xlu0 %v1979
      %v2209 = vpop.xlane.xlu0 %2208
      %2210 = vadd.xlane.f32.xlu0 %v1980
      %v2211 = vpop.xlane.xlu0 %2210
      %2212 = vadd.xlane.f32.xlu0 %v1981
      %v2213 = vpop.xlane.xlu0 %2212
      %2214 = vadd.xlane.f32.xlu0 %v1982
      %v2215 = vpop.xlane.xlu0 %2214
      %2216 = vadd.xlane.f32.xlu0 %v1983
      %v2217 = vpop.xlane.xlu0 %2216
      %2218 = vadd.xlane.f32.xlu0 %v1984
      %v2219 = vpop.xlane.xlu0 %2218
      %2220 = vadd.xlane.f32.xlu0 %v1985
      %v2221 = vpop.xlane.xlu0 %2220
      %2222 = vadd.xlane.f32.xlu0 %v1986
      %v2223 = vpop.xlane.xlu0 %2222
      %2224 = vadd.xlane.f32.xlu0 %v1987
      %v2225 = vpop.xlane.xlu0 %2224
      %2226 = vadd.xlane.f32.xlu0 %v1988
      %v2227 = vpop.xlane.xlu0 %2226
      %2228 = vadd.xlane.f32.xlu0 %v1989
      %v2229 = vpop.xlane.xlu0 %2228
      %2230 = vadd.xlane.f32.xlu0 %v1990
      %v2231 = vpop.xlane.xlu0 %2230
      %2232 = vadd.xlane.f32.xlu0 %v1991
      %v2233 = vpop.xlane.xlu0 %2232
      %2234 = vadd.xlane.f32.xlu0 %v1992
      %v2235 = vpop.xlane.xlu0 %2234
      %2236 = vadd.xlane.f32.xlu0 %v1993
      %v2237 = vpop.xlane.xlu0 %2236
      %2238 = vadd.xlane.f32.xlu0 %v1994
      %v2239 = vpop.xlane.xlu0 %2238
      %2240 = vadd.xlane.f32.xlu0 %v1995
      %v2241 = vpop.xlane.xlu0 %2240
      %2242 = vadd.xlane.f32.xlu0 %v1996
      %v2243 = vpop.xlane.xlu0 %2242
      %2244 = vadd.xlane.f32.xlu0 %v1997
      %v2245 = vpop.xlane.xlu0 %2244
      %2246 = vadd.xlane.f32.xlu0 %v1998
      %v2247 = vpop.xlane.xlu0 %2246
      %2248 = vadd.xlane.f32.xlu0 %v1999
      %v2249 = vpop.xlane.xlu0 %2248
      %2250 = vadd.xlane.f32.xlu0 %v2000
      %v2251 = vpop.xlane.xlu0 %2250
      %2252 = vadd.xlane.f32.xlu0 %v2001
      %v2253 = vpop.xlane.xlu0 %2252
      %2254 = vadd.xlane.f32.xlu0 %v2002
      %v2255 = vpop.xlane.xlu0 %2254
      %2256 = vadd.xlane.f32.xlu0 %v2003
      %v2257 = vpop.xlane.xlu0 %2256
      %2258 = vadd.xlane.f32.xlu0 %v2004
      %v2259 = vpop.xlane.xlu0 %2258
      %2260 = vadd.xlane.f32.xlu0 %v2005
      %v2261 = vpop.xlane.xlu0 %2260
      %v2262 = vld [vmem:[%s3] sm:$0xff]
      %v2263 = vld [vmem:[%s3 + $0x8] sm:$0xff]
      %v2264 = vld [vmem:[%s3 + $0x10] sm:$0xff]
      %v2265 = vld [vmem:[%s3 + $0x18] sm:$0xff]
      %v2266 = vmax.f32 %v2007, 1e-16
      %v2267 = vmax.f32 %v2009, 1e-16
      %v2268 = vmax.f32 %v2011, 1e-16
      %v2269 = vmax.f32 %v2013, 1e-16
      %v2270 = vmax.f32 %v2015, 1e-16
      %v2271 = vmax.f32 %v2017, 1e-16
      %v2272 = vmax.f32 %v2019, 1e-16
      %v2273 = vmax.f32 %v2021, 1e-16
      %v2274 = vmax.f32 %v2023, 1e-16
      %v2275 = vmax.f32 %v2025, 1e-16
      %v2276 = vmax.f32 %v2027, 1e-16
      %v2277 = vmax.f32 %v2029, 1e-16
      %v2278 = vmax.f32 %v2031, 1e-16
      %v2279 = vmax.f32 %v2033, 1e-16
      %v2280 = vmax.f32 %v2035, 1e-16
      %v2281 = vmax.f32 %v2037, 1e-16
      %v2282 = vmax.f32 %v2039, 1e-16
      %v2283 = vmax.f32 %v2041, 1e-16
      %v2284 = vmax.f32 %v2043, 1e-16
      %v2285 = vmax.f32 %v2045, 1e-16
      %v2286 = vmax.f32 %v2047, 1e-16
      %v2287 = vmax.f32 %v2049, 1e-16
      %v2288 = vmax.f32 %v2051, 1e-16
      %v2289 = vmax.f32 %v2053, 1e-16
      %v2290 = vmax.f32 %v2055, 1e-16
      %v2291 = vmax.f32 %v2057, 1e-16
      %v2292 = vmax.f32 %v2059, 1e-16
      %v2293 = vmax.f32 %v2061, 1e-16
      %v2294 = vmax.f32 %v2063, 1e-16
      %v2295 = vmax.f32 %v2065, 1e-16
      %v2296 = vmax.f32 %v2067, 1e-16
      %v2297 = vmax.f32 %v2069, 1e-16
      %v2298 = vmax.f32 %v2071, 1e-16
      %v2299 = vmax.f32 %v2073, 1e-16
      %v2300 = vmax.f32 %v2075, 1e-16
      %v2301 = vmax.f32 %v2077, 1e-16
      %v2302 = vmax.f32 %v2079, 1e-16
      %v2303 = vmax.f32 %v2081, 1e-16
      %v2304 = vmax.f32 %v2083, 1e-16
      %v2305 = vmax.f32 %v2085, 1e-16
      %v2306 = vmax.f32 %v2087, 1e-16
      %v2307 = vmax.f32 %v2089, 1e-16
      %v2308 = vmax.f32 %v2091, 1e-16
      %v2309 = vmax.f32 %v2093, 1e-16
      %v2310 = vmax.f32 %v2095, 1e-16
      %v2311 = vmax.f32 %v2097, 1e-16
      %v2312 = vmax.f32 %v2099, 1e-16
      %v2313 = vmax.f32 %v2101, 1e-16
      %v2314 = vmax.f32 %v2103, 1e-16
      %v2315 = vmax.f32 %v2105, 1e-16
      %v2316 = vmax.f32 %v2107, 1e-16
      %v2317 = vmax.f32 %v2109, 1e-16
      %v2318 = vmax.f32 %v2111, 1e-16
      %v2319 = vmax.f32 %v2113, 1e-16
      %v2320 = vmax.f32 %v2115, 1e-16
      %v2321 = vmax.f32 %v2117, 1e-16
      %v2322 = vmax.f32 %v2119, 1e-16
      %v2323 = vmax.f32 %v2121, 1e-16
      %v2324 = vmax.f32 %v2123, 1e-16
      %v2325 = vmax.f32 %v2125, 1e-16
      %v2326 = vmax.f32 %v2127, 1e-16
      %v2327 = vmax.f32 %v2129, 1e-16
      %v2328 = vmax.f32 %v2131, 1e-16
      %v2329 = vmax.f32 %v2133, 1e-16
      %v2330 = vmax.f32 %v2135, 1e-16
      %v2331 = vmax.f32 %v2137, 1e-16
      %v2332 = vmax.f32 %v2139, 1e-16
      %v2333 = vmax.f32 %v2141, 1e-16
      %v2334 = vmax.f32 %v2143, 1e-16
      %v2335 = vmax.f32 %v2145, 1e-16
      %v2336 = vmax.f32 %v2147, 1e-16
      %v2337 = vmax.f32 %v2149, 1e-16
      %v2338 = vmax.f32 %v2151, 1e-16
      %v2339 = vmax.f32 %v2153, 1e-16
      %v2340 = vmax.f32 %v2155, 1e-16
      %v2341 = vmax.f32 %v2157, 1e-16
      %v2342 = vmax.f32 %v2159, 1e-16
      %v2343 = vmax.f32 %v2161, 1e-16
      %v2344 = vmax.f32 %v2163, 1e-16
      %v2345 = vmax.f32 %v2165, 1e-16
      %v2346 = vmax.f32 %v2167, 1e-16
      %v2347 = vmax.f32 %v2169, 1e-16
      %v2348 = vmax.f32 %v2171, 1e-16
      %v2349 = vmax.f32 %v2173, 1e-16
      %v2350 = vmax.f32 %v2175, 1e-16
      %v2351 = vmax.f32 %v2177, 1e-16
      %v2352 = vmax.f32 %v2179, 1e-16
      %v2353 = vmax.f32 %v2181, 1e-16
      %v2354 = vmax.f32 %v2183, 1e-16
      %v2355 = vmax.f32 %v2185, 1e-16
      %v2356 = vmax.f32 %v2187, 1e-16
      %v2357 = vmax.f32 %v2189, 1e-16
      %v2358 = vmax.f32 %v2191, 1e-16
      %v2359 = vmax.f32 %v2193, 1e-16
      %v2360 = vmax.f32 %v2195, 1e-16
      %v2361 = vmax.f32 %v2197, 1e-16
      %v2362 = vmax.f32 %v2199, 1e-16
      %v2363 = vmax.f32 %v2201, 1e-16
      %v2364 = vmax.f32 %v2203, 1e-16
      %v2365 = vmax.f32 %v2205, 1e-16
      %v2366 = vmax.f32 %v2207, 1e-16
      %v2367 = vmax.f32 %v2209, 1e-16
      %v2368 = vmax.f32 %v2211, 1e-16
      %v2369 = vmax.f32 %v2213, 1e-16
      %v2370 = vmax.f32 %v2215, 1e-16
      %v2371 = vmax.f32 %v2217, 1e-16
      %v2372 = vmax.f32 %v2219, 1e-16
      %v2373 = vmax.f32 %v2221, 1e-16
      %v2374 = vmax.f32 %v2223, 1e-16
      %v2375 = vmax.f32 %v2225, 1e-16
      %v2376 = vmax.f32 %v2227, 1e-16
      %v2377 = vmax.f32 %v2229, 1e-16
      %v2378 = vmax.f32 %v2231, 1e-16
      %v2379 = vmax.f32 %v2233, 1e-16
      %v2380 = vmax.f32 %v2235, 1e-16
      %v2381 = vmax.f32 %v2237, 1e-16
      %v2382 = vmax.f32 %v2239, 1e-16
      %v2383 = vmax.f32 %v2241, 1e-16
      %v2384 = vmax.f32 %v2243, 1e-16
      %v2385 = vmax.f32 %v2245, 1e-16
      %v2386 = vmax.f32 %v2247, 1e-16
      %v2387 = vmax.f32 %v2249, 1e-16
      %v2388 = vmax.f32 %v2251, 1e-16
      %v2389 = vmax.f32 %v2253, 1e-16
      %v2390 = vmax.f32 %v2255, 1e-16
      %v2391 = vmax.f32 %v2257, 1e-16
      %v2392 = vmax.f32 %v2259, 1e-16
      %v2393 = vmax.f32 %v2261, 1e-16
      %v2394 = vrsqrt.pop %v2266
      %v2395 = vmul.f32 %v2394, %v2266
      %v2396 = vmul.f32 %v2395, %v2394
      %v2397 = vmul.f32 0.5, %v2396
      %v2398 = vsub.f32 1.5, %v2397
      %v2399 = vmul.f32 %v2394, %v2398
      %vm2400 = vweird.f32 %v2266
      %vm2401 = vweird.f32 %v2394
      %vm2402 = vmor %vm2400, %vm2401
      %v2403 = vsel %vm2402, %v2394, %v2399
      %v2404 = vrsqrt.pop %v2267
      %v2405 = vmul.f32 %v2404, %v2267
      %v2406 = vmul.f32 %v2405, %v2404
      %v2407 = vmul.f32 0.5, %v2406
      %v2408 = vsub.f32 1.5, %v2407
      %v2409 = vmul.f32 %v2404, %v2408
      %vm2410 = vweird.f32 %v2267
      %vm2411 = vweird.f32 %v2404
      %vm2412 = vmor %vm2410, %vm2411
      %v2413 = vsel %vm2412, %v2404, %v2409
      %v2414 = vrsqrt.pop %v2268
      %v2415 = vmul.f32 %v2414, %v2268
      %v2416 = vmul.f32 %v2415, %v2414
      %v2417 = vmul.f32 0.5, %v2416
      %v2418 = vsub.f32 1.5, %v2417
      %v2419 = vmul.f32 %v2414, %v2418
      %vm2420 = vweird.f32 %v2268
      %vm2421 = vweird.f32 %v2414
      %vm2422 = vmor %vm2420, %vm2421
      %v2423 = vsel %vm2422, %v2414, %v2419
      %v2424 = vrsqrt.pop %v2269
      %v2425 = vmul.f32 %v2424, %v2269
      %v2426 = vmul.f32 %v2425, %v2424
      %v2427 = vmul.f32 0.5, %v2426
      %v2428 = vsub.f32 1.5, %v2427
      %v2429 = vmul.f32 %v2424, %v2428
      %vm2430 = vweird.f32 %v2269
      %vm2431 = vweird.f32 %v2424
      %vm2432 = vmor %vm2430, %vm2431
      %v2433 = vsel %vm2432, %v2424, %v2429
      %v2434 = vrsqrt.pop %v2270
      %v2435 = vmul.f32 %v2434, %v2270
      %v2436 = vmul.f32 %v2435, %v2434
      %v2437 = vmul.f32 0.5, %v2436
      %v2438 = vsub.f32 1.5, %v2437
      %v2439 = vmul.f32 %v2434, %v2438
      %vm2440 = vweird.f32 %v2270
      %vm2441 = vweird.f32 %v2434
      %vm2442 = vmor %vm2440, %vm2441
      %v2443 = vsel %vm2442, %v2434, %v2439
      %v2444 = vrsqrt.pop %v2271
      %v2445 = vmul.f32 %v2444, %v2271
      %v2446 = vmul.f32 %v2445, %v2444
      %v2447 = vmul.f32 0.5, %v2446
      %v2448 = vsub.f32 1.5, %v2447
      %v2449 = vmul.f32 %v2444, %v2448
      %vm2450 = vweird.f32 %v2271
      %vm2451 = vweird.f32 %v2444
      %vm2452 = vmor %vm2450, %vm2451
      %v2453 = vsel %vm2452, %v2444, %v2449
      %v2454 = vrsqrt.pop %v2272
      %v2455 = vmul.f32 %v2454, %v2272
      %v2456 = vmul.f32 %v2455, %v2454
      %v2457 = vmul.f32 0.5, %v2456
      %v2458 = vsub.f32 1.5, %v2457
      %v2459 = vmul.f32 %v2454, %v2458
      %vm2460 = vweird.f32 %v2272
      %vm2461 = vweird.f32 %v2454
      %vm2462 = vmor %vm2460, %vm2461
      %v2463 = vsel %vm2462, %v2454, %v2459
      %v2464 = vrsqrt.pop %v2273
      %v2465 = vmul.f32 %v2464, %v2273
      %v2466 = vmul.f32 %v2465, %v2464
      %v2467 = vmul.f32 0.5, %v2466
      %v2468 = vsub.f32 1.5, %v2467
      %v2469 = vmul.f32 %v2464, %v2468
      %vm2470 = vweird.f32 %v2273
      %vm2471 = vweird.f32 %v2464
      %vm2472 = vmor %vm2470, %vm2471
      %v2473 = vsel %vm2472, %v2464, %v2469
      %v2474 = vrsqrt.pop %v2274
      %v2475 = vmul.f32 %v2474, %v2274
      %v2476 = vmul.f32 %v2475, %v2474
      %v2477 = vmul.f32 0.5, %v2476
      %v2478 = vsub.f32 1.5, %v2477
      %v2479 = vmul.f32 %v2474, %v2478
      %vm2480 = vweird.f32 %v2274
      %vm2481 = vweird.f32 %v2474
      %vm2482 = vmor %vm2480, %vm2481
      %v2483 = vsel %vm2482, %v2474, %v2479
      %v2484 = vrsqrt.pop %v2275
      %v2485 = vmul.f32 %v2484, %v2275
      %v2486 = vmul.f32 %v2485, %v2484
      %v2487 = vmul.f32 0.5, %v2486
      %v2488 = vsub.f32 1.5, %v2487
      %v2489 = vmul.f32 %v2484, %v2488
      %vm2490 = vweird.f32 %v2275
      %vm2491 = vweird.f32 %v2484
      %vm2492 = vmor %vm2490, %vm2491
      %v2493 = vsel %vm2492, %v2484, %v2489
      %v2494 = vrsqrt.pop %v2276
      %v2495 = vmul.f32 %v2494, %v2276
      %v2496 = vmul.f32 %v2495, %v2494
      %v2497 = vmul.f32 0.5, %v2496
      %v2498 = vsub.f32 1.5, %v2497
      %v2499 = vmul.f32 %v2494, %v2498
      %vm2500 = vweird.f32 %v2276
      %vm2501 = vweird.f32 %v2494
      %vm2502 = vmor %vm2500, %vm2501
      %v2503 = vsel %vm2502, %v2494, %v2499
      %v2504 = vrsqrt.pop %v2277
      %v2505 = vmul.f32 %v2504, %v2277
      %v2506 = vmul.f32 %v2505, %v2504
      %v2507 = vmul.f32 0.5, %v2506
      %v2508 = vsub.f32 1.5, %v2507
      %v2509 = vmul.f32 %v2504, %v2508
      %vm2510 = vweird.f32 %v2277
      %vm2511 = vweird.f32 %v2504
      %vm2512 = vmor %vm2510, %vm2511
      %v2513 = vsel %vm2512, %v2504, %v2509
      %v2514 = vrsqrt.pop %v2278
      %v2515 = vmul.f32 %v2514, %v2278
      %v2516 = vmul.f32 %v2515, %v2514
      %v2517 = vmul.f32 0.5, %v2516
      %v2518 = vsub.f32 1.5, %v2517
      %v2519 = vmul.f32 %v2514, %v2518
      %vm2520 = vweird.f32 %v2278
      %vm2521 = vweird.f32 %v2514
      %vm2522 = vmor %vm2520, %vm2521
      %v2523 = vsel %vm2522, %v2514, %v2519
      %v2524 = vrsqrt.pop %v2279
      %v2525 = vmul.f32 %v2524, %v2279
      %v2526 = vmul.f32 %v2525, %v2524
      %v2527 = vmul.f32 0.5, %v2526
      %v2528 = vsub.f32 1.5, %v2527
      %v2529 = vmul.f32 %v2524, %v2528
      %vm2530 = vweird.f32 %v2279
      %vm2531 = vweird.f32 %v2524
      %vm2532 = vmor %vm2530, %vm2531
      %v2533 = vsel %vm2532, %v2524, %v2529
      %v2534 = vrsqrt.pop %v2280
      %v2535 = vmul.f32 %v2534, %v2280
      %v2536 = vmul.f32 %v2535, %v2534
      %v2537 = vmul.f32 0.5, %v2536
      %v2538 = vsub.f32 1.5, %v2537
      %v2539 = vmul.f32 %v2534, %v2538
      %vm2540 = vweird.f32 %v2280
      %vm2541 = vweird.f32 %v2534
      %vm2542 = vmor %vm2540, %vm2541
      %v2543 = vsel %vm2542, %v2534, %v2539
      %v2544 = vrsqrt.pop %v2281
      %v2545 = vmul.f32 %v2544, %v2281
      %v2546 = vmul.f32 %v2545, %v2544
      %v2547 = vmul.f32 0.5, %v2546
      %v2548 = vsub.f32 1.5, %v2547
      %v2549 = vmul.f32 %v2544, %v2548
      %vm2550 = vweird.f32 %v2281
      %vm2551 = vweird.f32 %v2544
      %vm2552 = vmor %vm2550, %vm2551
      %v2553 = vsel %vm2552, %v2544, %v2549
      %v2554 = vrsqrt.pop %v2282
      %v2555 = vmul.f32 %v2554, %v2282
      %v2556 = vmul.f32 %v2555, %v2554
      %v2557 = vmul.f32 0.5, %v2556
      %v2558 = vsub.f32 1.5, %v2557
      %v2559 = vmul.f32 %v2554, %v2558
      %vm2560 = vweird.f32 %v2282
      %vm2561 = vweird.f32 %v2554
      %vm2562 = vmor %vm2560, %vm2561
      %v2563 = vsel %vm2562, %v2554, %v2559
      %v2564 = vrsqrt.pop %v2283
      %v2565 = vmul.f32 %v2564, %v2283
      %v2566 = vmul.f32 %v2565, %v2564
      %v2567 = vmul.f32 0.5, %v2566
      %v2568 = vsub.f32 1.5, %v2567
      %v2569 = vmul.f32 %v2564, %v2568
      %vm2570 = vweird.f32 %v2283
      %vm2571 = vweird.f32 %v2564
      %vm2572 = vmor %vm2570, %vm2571
      %v2573 = vsel %vm2572, %v2564, %v2569
      %v2574 = vrsqrt.pop %v2284
      %v2575 = vmul.f32 %v2574, %v2284
      %v2576 = vmul.f32 %v2575, %v2574
      %v2577 = vmul.f32 0.5, %v2576
      %v2578 = vsub.f32 1.5, %v2577
      %v2579 = vmul.f32 %v2574, %v2578
      %vm2580 = vweird.f32 %v2284
      %vm2581 = vweird.f32 %v2574
      %vm2582 = vmor %vm2580, %vm2581
      %v2583 = vsel %vm2582, %v2574, %v2579
      %v2584 = vrsqrt.pop %v2285
      %v2585 = vmul.f32 %v2584, %v2285
      %v2586 = vmul.f32 %v2585, %v2584
      %v2587 = vmul.f32 0.5, %v2586
      %v2588 = vsub.f32 1.5, %v2587
      %v2589 = vmul.f32 %v2584, %v2588
      %vm2590 = vweird.f32 %v2285
      %vm2591 = vweird.f32 %v2584
      %vm2592 = vmor %vm2590, %vm2591
      %v2593 = vsel %vm2592, %v2584, %v2589
      %v2594 = vrsqrt.pop %v2286
      %v2595 = vmul.f32 %v2594, %v2286
      %v2596 = vmul.f32 %v2595, %v2594
      %v2597 = vmul.f32 0.5, %v2596
      %v2598 = vsub.f32 1.5, %v2597
      %v2599 = vmul.f32 %v2594, %v2598
      %vm2600 = vweird.f32 %v2286
      %vm2601 = vweird.f32 %v2594
      %vm2602 = vmor %vm2600, %vm2601
      %v2603 = vsel %vm2602, %v2594, %v2599
      %v2604 = vrsqrt.pop %v2287
      %v2605 = vmul.f32 %v2604, %v2287
      %v2606 = vmul.f32 %v2605, %v2604
      %v2607 = vmul.f32 0.5, %v2606
      %v2608 = vsub.f32 1.5, %v2607
      %v2609 = vmul.f32 %v2604, %v2608
      %vm2610 = vweird.f32 %v2287
      %vm2611 = vweird.f32 %v2604
      %vm2612 = vmor %vm2610, %vm2611
      %v2613 = vsel %vm2612, %v2604, %v2609
      %v2614 = vrsqrt.pop %v2288
      %v2615 = vmul.f32 %v2614, %v2288
      %v2616 = vmul.f32 %v2615, %v2614
      %v2617 = vmul.f32 0.5, %v2616
      %v2618 = vsub.f32 1.5, %v2617
      %v2619 = vmul.f32 %v2614, %v2618
      %vm2620 = vweird.f32 %v2288
      %vm2621 = vweird.f32 %v2614
      %vm2622 = vmor %vm2620, %vm2621
      %v2623 = vsel %vm2622, %v2614, %v2619
      %v2624 = vrsqrt.pop %v2289
      %v2625 = vmul.f32 %v2624, %v2289
      %v2626 = vmul.f32 %v2625, %v2624
      %v2627 = vmul.f32 0.5, %v2626
      %v2628 = vsub.f32 1.5, %v2627
      %v2629 = vmul.f32 %v2624, %v2628
      %vm2630 = vweird.f32 %v2289
      %vm2631 = vweird.f32 %v2624
      %vm2632 = vmor %vm2630, %vm2631
      %v2633 = vsel %vm2632, %v2624, %v2629
      %v2634 = vrsqrt.pop %v2290
      %v2635 = vmul.f32 %v2634, %v2290
      %v2636 = vmul.f32 %v2635, %v2634
      %v2637 = vmul.f32 0.5, %v2636
      %v2638 = vsub.f32 1.5, %v2637
      %v2639 = vmul.f32 %v2634, %v2638
      %vm2640 = vweird.f32 %v2290
      %vm2641 = vweird.f32 %v2634
      %vm2642 = vmor %vm2640, %vm2641
      %v2643 = vsel %vm2642, %v2634, %v2639
      %v2644 = vrsqrt.pop %v2291
      %v2645 = vmul.f32 %v2644, %v2291
      %v2646 = vmul.f32 %v2645, %v2644
      %v2647 = vmul.f32 0.5, %v2646
      %v2648 = vsub.f32 1.5, %v2647
      %v2649 = vmul.f32 %v2644, %v2648
      %vm2650 = vweird.f32 %v2291
      %vm2651 = vweird.f32 %v2644
      %vm2652 = vmor %vm2650, %vm2651
      %v2653 = vsel %vm2652, %v2644, %v2649
      %v2654 = vrsqrt.pop %v2292
      %v2655 = vmul.f32 %v2654, %v2292
      %v2656 = vmul.f32 %v2655, %v2654
      %v2657 = vmul.f32 0.5, %v2656
      %v2658 = vsub.f32 1.5, %v2657
      %v2659 = vmul.f32 %v2654, %v2658
      %vm2660 = vweird.f32 %v2292
      %vm2661 = vweird.f32 %v2654
      %vm2662 = vmor %vm2660, %vm2661
      %v2663 = vsel %vm2662, %v2654, %v2659
      %v2664 = vrsqrt.pop %v2293
      %v2665 = vmul.f32 %v2664, %v2293
      %v2666 = vmul.f32 %v2665, %v2664
      %v2667 = vmul.f32 0.5, %v2666
      %v2668 = vsub.f32 1.5, %v2667
      %v2669 = vmul.f32 %v2664, %v2668
      %vm2670 = vweird.f32 %v2293
      %vm2671 = vweird.f32 %v2664
      %vm2672 = vmor %vm2670, %vm2671
      %v2673 = vsel %vm2672, %v2664, %v2669
      %v2674 = vrsqrt.pop %v2294
      %v2675 = vmul.f32 %v2674, %v2294
      %v2676 = vmul.f32 %v2675, %v2674
      %v2677 = vmul.f32 0.5, %v2676
      %v2678 = vsub.f32 1.5, %v2677
      %v2679 = vmul.f32 %v2674, %v2678
      %vm2680 = vweird.f32 %v2294
      %vm2681 = vweird.f32 %v2674
      %vm2682 = vmor %vm2680, %vm2681
      %v2683 = vsel %vm2682, %v2674, %v2679
      %v2684 = vrsqrt.pop %v2295
      %v2685 = vmul.f32 %v2684, %v2295
      %v2686 = vmul.f32 %v2685, %v2684
      %v2687 = vmul.f32 0.5, %v2686
      %v2688 = vsub.f32 1.5, %v2687
      %v2689 = vmul.f32 %v2684, %v2688
      %vm2690 = vweird.f32 %v2295
      %vm2691 = vweird.f32 %v2684
      %vm2692 = vmor %vm2690, %vm2691
      %v2693 = vsel %vm2692, %v2684, %v2689
      %v2694 = vrsqrt.pop %v2296
      %v2695 = vmul.f32 %v2694, %v2296
      %v2696 = vmul.f32 %v2695, %v2694
      %v2697 = vmul.f32 0.5, %v2696
      %v2698 = vsub.f32 1.5, %v2697
      %v2699 = vmul.f32 %v2694, %v2698
      %vm2700 = vweird.f32 %v2296
      %vm2701 = vweird.f32 %v2694
      %vm2702 = vmor %vm2700, %vm2701
      %v2703 = vsel %vm2702, %v2694, %v2699
      %v2704 = vrsqrt.pop %v2297
      %v2705 = vmul.f32 %v2704, %v2297
      %v2706 = vmul.f32 %v2705, %v2704
      %v2707 = vmul.f32 0.5, %v2706
      %v2708 = vsub.f32 1.5, %v2707
      %v2709 = vmul.f32 %v2704, %v2708
      %vm2710 = vweird.f32 %v2297
      %vm2711 = vweird.f32 %v2704
      %vm2712 = vmor %vm2710, %vm2711
      %v2713 = vsel %vm2712, %v2704, %v2709
      %v2714 = vrsqrt.pop %v2298
      %v2715 = vmul.f32 %v2714, %v2298
      %v2716 = vmul.f32 %v2715, %v2714
      %v2717 = vmul.f32 0.5, %v2716
      %v2718 = vsub.f32 1.5, %v2717
      %v2719 = vmul.f32 %v2714, %v2718
      %vm2720 = vweird.f32 %v2298
      %vm2721 = vweird.f32 %v2714
      %vm2722 = vmor %vm2720, %vm2721
      %v2723 = vsel %vm2722, %v2714, %v2719
      %v2724 = vrsqrt.pop %v2299
      %v2725 = vmul.f32 %v2724, %v2299
      %v2726 = vmul.f32 %v2725, %v2724
      %v2727 = vmul.f32 0.5, %v2726
      %v2728 = vsub.f32 1.5, %v2727
      %v2729 = vmul.f32 %v2724, %v2728
      %vm2730 = vweird.f32 %v2299
      %vm2731 = vweird.f32 %v2724
      %vm2732 = vmor %vm2730, %vm2731
      %v2733 = vsel %vm2732, %v2724, %v2729
      %v2734 = vrsqrt.pop %v2300
      %v2735 = vmul.f32 %v2734, %v2300
      %v2736 = vmul.f32 %v2735, %v2734
      %v2737 = vmul.f32 0.5, %v2736
      %v2738 = vsub.f32 1.5, %v2737
      %v2739 = vmul.f32 %v2734, %v2738
      %vm2740 = vweird.f32 %v2300
      %vm2741 = vweird.f32 %v2734
      %vm2742 = vmor %vm2740, %vm2741
      %v2743 = vsel %vm2742, %v2734, %v2739
      %v2744 = vrsqrt.pop %v2301
      %v2745 = vmul.f32 %v2744, %v2301
      %v2746 = vmul.f32 %v2745, %v2744
      %v2747 = vmul.f32 0.5, %v2746
      %v2748 = vsub.f32 1.5, %v2747
      %v2749 = vmul.f32 %v2744, %v2748
      %vm2750 = vweird.f32 %v2301
      %vm2751 = vweird.f32 %v2744
      %vm2752 = vmor %vm2750, %vm2751
      %v2753 = vsel %vm2752, %v2744, %v2749
      %v2754 = vrsqrt.pop %v2302
      %v2755 = vmul.f32 %v2754, %v2302
      %v2756 = vmul.f32 %v2755, %v2754
      %v2757 = vmul.f32 0.5, %v2756
      %v2758 = vsub.f32 1.5, %v2757
      %v2759 = vmul.f32 %v2754, %v2758
      %vm2760 = vweird.f32 %v2302
      %vm2761 = vweird.f32 %v2754
      %vm2762 = vmor %vm2760, %vm2761
      %v2763 = vsel %vm2762, %v2754, %v2759
      %v2764 = vrsqrt.pop %v2303
      %v2765 = vmul.f32 %v2764, %v2303
      %v2766 = vmul.f32 %v2765, %v2764
      %v2767 = vmul.f32 0.5, %v2766
      %v2768 = vsub.f32 1.5, %v2767
      %v2769 = vmul.f32 %v2764, %v2768
      %vm2770 = vweird.f32 %v2303
      %vm2771 = vweird.f32 %v2764
      %vm2772 = vmor %vm2770, %vm2771
      %v2773 = vsel %vm2772, %v2764, %v2769
      %v2774 = vrsqrt.pop %v2304
      %v2775 = vmul.f32 %v2774, %v2304
      %v2776 = vmul.f32 %v2775, %v2774
      %v2777 = vmul.f32 0.5, %v2776
      %v2778 = vsub.f32 1.5, %v2777
      %v2779 = vmul.f32 %v2774, %v2778
      %vm2780 = vweird.f32 %v2304
      %vm2781 = vweird.f32 %v2774
      %vm2782 = vmor %vm2780, %vm2781
      %v2783 = vsel %vm2782, %v2774, %v2779
      %v2784 = vrsqrt.pop %v2305
      %v2785 = vmul.f32 %v2784, %v2305
      %v2786 = vmul.f32 %v2785, %v2784
      %v2787 = vmul.f32 0.5, %v2786
      %v2788 = vsub.f32 1.5, %v2787
      %v2789 = vmul.f32 %v2784, %v2788
      %vm2790 = vweird.f32 %v2305
      %vm2791 = vweird.f32 %v2784
      %vm2792 = vmor %vm2790, %vm2791
      %v2793 = vsel %vm2792, %v2784, %v2789
      %v2794 = vrsqrt.pop %v2306
      %v2795 = vmul.f32 %v2794, %v2306
      %v2796 = vmul.f32 %v2795, %v2794
      %v2797 = vmul.f32 0.5, %v2796
      %v2798 = vsub.f32 1.5, %v2797
      %v2799 = vmul.f32 %v2794, %v2798
      %vm2800 = vweird.f32 %v2306
      %vm2801 = vweird.f32 %v2794
      %vm2802 = vmor %vm2800, %vm2801
      %v2803 = vsel %vm2802, %v2794, %v2799
      %v2804 = vrsqrt.pop %v2307
      %v2805 = vmul.f32 %v2804, %v2307
      %v2806 = vmul.f32 %v2805, %v2804
      %v2807 = vmul.f32 0.5, %v2806
      %v2808 = vsub.f32 1.5, %v2807
      %v2809 = vmul.f32 %v2804, %v2808
      %vm2810 = vweird.f32 %v2307
      %vm2811 = vweird.f32 %v2804
      %vm2812 = vmor %vm2810, %vm2811
      %v2813 = vsel %vm2812, %v2804, %v2809
      %v2814 = vrsqrt.pop %v2308
      %v2815 = vmul.f32 %v2814, %v2308
      %v2816 = vmul.f32 %v2815, %v2814
      %v2817 = vmul.f32 0.5, %v2816
      %v2818 = vsub.f32 1.5, %v2817
      %v2819 = vmul.f32 %v2814, %v2818
      %vm2820 = vweird.f32 %v2308
      %vm2821 = vweird.f32 %v2814
      %vm2822 = vmor %vm2820, %vm2821
      %v2823 = vsel %vm2822, %v2814, %v2819
      %v2824 = vrsqrt.pop %v2309
      %v2825 = vmul.f32 %v2824, %v2309
      %v2826 = vmul.f32 %v2825, %v2824
      %v2827 = vmul.f32 0.5, %v2826
      %v2828 = vsub.f32 1.5, %v2827
      %v2829 = vmul.f32 %v2824, %v2828
      %vm2830 = vweird.f32 %v2309
      %vm2831 = vweird.f32 %v2824
      %vm2832 = vmor %vm2830, %vm2831
      %v2833 = vsel %vm2832, %v2824, %v2829
      %v2834 = vrsqrt.pop %v2310
      %v2835 = vmul.f32 %v2834, %v2310
      %v2836 = vmul.f32 %v2835, %v2834
      %v2837 = vmul.f32 0.5, %v2836
      %v2838 = vsub.f32 1.5, %v2837
      %v2839 = vmul.f32 %v2834, %v2838
      %vm2840 = vweird.f32 %v2310
      %vm2841 = vweird.f32 %v2834
      %vm2842 = vmor %vm2840, %vm2841
      %v2843 = vsel %vm2842, %v2834, %v2839
      %v2844 = vrsqrt.pop %v2311
      %v2845 = vmul.f32 %v2844, %v2311
      %v2846 = vmul.f32 %v2845, %v2844
      %v2847 = vmul.f32 0.5, %v2846
      %v2848 = vsub.f32 1.5, %v2847
      %v2849 = vmul.f32 %v2844, %v2848
      %vm2850 = vweird.f32 %v2311
      %vm2851 = vweird.f32 %v2844
      %vm2852 = vmor %vm2850, %vm2851
      %v2853 = vsel %vm2852, %v2844, %v2849
      %v2854 = vrsqrt.pop %v2312
      %v2855 = vmul.f32 %v2854, %v2312
      %v2856 = vmul.f32 %v2855, %v2854
      %v2857 = vmul.f32 0.5, %v2856
      %v2858 = vsub.f32 1.5, %v2857
      %v2859 = vmul.f32 %v2854, %v2858
      %vm2860 = vweird.f32 %v2312
      %vm2861 = vweird.f32 %v2854
      %vm2862 = vmor %vm2860, %vm2861
      %v2863 = vsel %vm2862, %v2854, %v2859
      %v2864 = vrsqrt.pop %v2313
      %v2865 = vmul.f32 %v2864, %v2313
      %v2866 = vmul.f32 %v2865, %v2864
      %v2867 = vmul.f32 0.5, %v2866
      %v2868 = vsub.f32 1.5, %v2867
      %v2869 = vmul.f32 %v2864, %v2868
      %vm2870 = vweird.f32 %v2313
      %vm2871 = vweird.f32 %v2864
      %vm2872 = vmor %vm2870, %vm2871
      %v2873 = vsel %vm2872, %v2864, %v2869
      %v2874 = vrsqrt.pop %v2314
      %v2875 = vmul.f32 %v2874, %v2314
      %v2876 = vmul.f32 %v2875, %v2874
      %v2877 = vmul.f32 0.5, %v2876
      %v2878 = vsub.f32 1.5, %v2877
      %v2879 = vmul.f32 %v2874, %v2878
      %vm2880 = vweird.f32 %v2314
      %vm2881 = vweird.f32 %v2874
      %vm2882 = vmor %vm2880, %vm2881
      %v2883 = vsel %vm2882, %v2874, %v2879
      %v2884 = vrsqrt.pop %v2315
      %v2885 = vmul.f32 %v2884, %v2315
      %v2886 = vmul.f32 %v2885, %v2884
      %v2887 = vmul.f32 0.5, %v2886
      %v2888 = vsub.f32 1.5, %v2887
      %v2889 = vmul.f32 %v2884, %v2888
      %vm2890 = vweird.f32 %v2315
      %vm2891 = vweird.f32 %v2884
      %vm2892 = vmor %vm2890, %vm2891
      %v2893 = vsel %vm2892, %v2884, %v2889
      %v2894 = vrsqrt.pop %v2316
      %v2895 = vmul.f32 %v2894, %v2316
      %v2896 = vmul.f32 %v2895, %v2894
      %v2897 = vmul.f32 0.5, %v2896
      %v2898 = vsub.f32 1.5, %v2897
      %v2899 = vmul.f32 %v2894, %v2898
      %vm2900 = vweird.f32 %v2316
      %vm2901 = vweird.f32 %v2894
      %vm2902 = vmor %vm2900, %vm2901
      %v2903 = vsel %vm2902, %v2894, %v2899
      %v2904 = vrsqrt.pop %v2317
      %v2905 = vmul.f32 %v2904, %v2317
      %v2906 = vmul.f32 %v2905, %v2904
      %v2907 = vmul.f32 0.5, %v2906
      %v2908 = vsub.f32 1.5, %v2907
      %v2909 = vmul.f32 %v2904, %v2908
      %vm2910 = vweird.f32 %v2317
      %vm2911 = vweird.f32 %v2904
      %vm2912 = vmor %vm2910, %vm2911
      %v2913 = vsel %vm2912, %v2904, %v2909
      %v2914 = vrsqrt.pop %v2318
      %v2915 = vmul.f32 %v2914, %v2318
      %v2916 = vmul.f32 %v2915, %v2914
      %v2917 = vmul.f32 0.5, %v2916
      %v2918 = vsub.f32 1.5, %v2917
      %v2919 = vmul.f32 %v2914, %v2918
      %vm2920 = vweird.f32 %v2318
      %vm2921 = vweird.f32 %v2914
      %vm2922 = vmor %vm2920, %vm2921
      %v2923 = vsel %vm2922, %v2914, %v2919
      %v2924 = vrsqrt.pop %v2319
      %v2925 = vmul.f32 %v2924, %v2319
      %v2926 = vmul.f32 %v2925, %v2924
      %v2927 = vmul.f32 0.5, %v2926
      %v2928 = vsub.f32 1.5, %v2927
      %v2929 = vmul.f32 %v2924, %v2928
      %vm2930 = vweird.f32 %v2319
      %vm2931 = vweird.f32 %v2924
      %vm2932 = vmor %vm2930, %vm2931
      %v2933 = vsel %vm2932, %v2924, %v2929
      %v2934 = vrsqrt.pop %v2320
      %v2935 = vmul.f32 %v2934, %v2320
      %v2936 = vmul.f32 %v2935, %v2934
      %v2937 = vmul.f32 0.5, %v2936
      %v2938 = vsub.f32 1.5, %v2937
      %v2939 = vmul.f32 %v2934, %v2938
      %vm2940 = vweird.f32 %v2320
      %vm2941 = vweird.f32 %v2934
      %vm2942 = vmor %vm2940, %vm2941
      %v2943 = vsel %vm2942, %v2934, %v2939
      %v2944 = vrsqrt.pop %v2321
      %v2945 = vmul.f32 %v2944, %v2321
      %v2946 = vmul.f32 %v2945, %v2944
      %v2947 = vmul.f32 0.5, %v2946
      %v2948 = vsub.f32 1.5, %v2947
      %v2949 = vmul.f32 %v2944, %v2948
      %vm2950 = vweird.f32 %v2321
      %vm2951 = vweird.f32 %v2944
      %vm2952 = vmor %vm2950, %vm2951
      %v2953 = vsel %vm2952, %v2944, %v2949
      %v2954 = vrsqrt.pop %v2322
      %v2955 = vmul.f32 %v2954, %v2322
      %v2956 = vmul.f32 %v2955, %v2954
      %v2957 = vmul.f32 0.5, %v2956
      %v2958 = vsub.f32 1.5, %v2957
      %v2959 = vmul.f32 %v2954, %v2958
      %vm2960 = vweird.f32 %v2322
      %vm2961 = vweird.f32 %v2954
      %vm2962 = vmor %vm2960, %vm2961
      %v2963 = vsel %vm2962, %v2954, %v2959
      %v2964 = vrsqrt.pop %v2323
      %v2965 = vmul.f32 %v2964, %v2323
      %v2966 = vmul.f32 %v2965, %v2964
      %v2967 = vmul.f32 0.5, %v2966
      %v2968 = vsub.f32 1.5, %v2967
      %v2969 = vmul.f32 %v2964, %v2968
      %vm2970 = vweird.f32 %v2323
      %vm2971 = vweird.f32 %v2964
      %vm2972 = vmor %vm2970, %vm2971
      %v2973 = vsel %vm2972, %v2964, %v2969
      %v2974 = vrsqrt.pop %v2324
      %v2975 = vmul.f32 %v2974, %v2324
      %v2976 = vmul.f32 %v2975, %v2974
      %v2977 = vmul.f32 0.5, %v2976
      %v2978 = vsub.f32 1.5, %v2977
      %v2979 = vmul.f32 %v2974, %v2978
      %vm2980 = vweird.f32 %v2324
      %vm2981 = vweird.f32 %v2974
      %vm2982 = vmor %vm2980, %vm2981
      %v2983 = vsel %vm2982, %v2974, %v2979
      %v2984 = vrsqrt.pop %v2325
      %v2985 = vmul.f32 %v2984, %v2325
      %v2986 = vmul.f32 %v2985, %v2984
      %v2987 = vmul.f32 0.5, %v2986
      %v2988 = vsub.f32 1.5, %v2987
      %v2989 = vmul.f32 %v2984, %v2988
      %vm2990 = vweird.f32 %v2325
      %vm2991 = vweird.f32 %v2984
      %vm2992 = vmor %vm2990, %vm2991
      %v2993 = vsel %vm2992, %v2984, %v2989
      %v2994 = vrsqrt.pop %v2326
      %v2995 = vmul.f32 %v2994, %v2326
      %v2996 = vmul.f32 %v2995, %v2994
      %v2997 = vmul.f32 0.5, %v2996
      %v2998 = vsub.f32 1.5, %v2997
      %v2999 = vmul.f32 %v2994, %v2998
      %vm3000 = vweird.f32 %v2326
      %vm3001 = vweird.f32 %v2994
      %vm3002 = vmor %vm3000, %vm3001
      %v3003 = vsel %vm3002, %v2994, %v2999
      %v3004 = vrsqrt.pop %v2327
      %v3005 = vmul.f32 %v3004, %v2327
      %v3006 = vmul.f32 %v3005, %v3004
      %v3007 = vmul.f32 0.5, %v3006
      %v3008 = vsub.f32 1.5, %v3007
      %v3009 = vmul.f32 %v3004, %v3008
      %vm3010 = vweird.f32 %v2327
      %vm3011 = vweird.f32 %v3004
      %vm3012 = vmor %vm3010, %vm3011
      %v3013 = vsel %vm3012, %v3004, %v3009
      %v3014 = vrsqrt.pop %v2328
      %v3015 = vmul.f32 %v3014, %v2328
      %v3016 = vmul.f32 %v3015, %v3014
      %v3017 = vmul.f32 0.5, %v3016
      %v3018 = vsub.f32 1.5, %v3017
      %v3019 = vmul.f32 %v3014, %v3018
      %vm3020 = vweird.f32 %v2328
      %vm3021 = vweird.f32 %v3014
      %vm3022 = vmor %vm3020, %vm3021
      %v3023 = vsel %vm3022, %v3014, %v3019
      %v3024 = vrsqrt.pop %v2329
      %v3025 = vmul.f32 %v3024, %v2329
      %v3026 = vmul.f32 %v3025, %v3024
      %v3027 = vmul.f32 0.5, %v3026
      %v3028 = vsub.f32 1.5, %v3027
      %v3029 = vmul.f32 %v3024, %v3028
      %vm3030 = vweird.f32 %v2329
      %vm3031 = vweird.f32 %v3024
      %vm3032 = vmor %vm3030, %vm3031
      %v3033 = vsel %vm3032, %v3024, %v3029
      %v3034 = vrsqrt.pop %v2330
      %v3035 = vmul.f32 %v3034, %v2330
      %v3036 = vmul.f32 %v3035, %v3034
      %v3037 = vmul.f32 0.5, %v3036
      %v3038 = vsub.f32 1.5, %v3037
      %v3039 = vmul.f32 %v3034, %v3038
      %vm3040 = vweird.f32 %v2330
      %vm3041 = vweird.f32 %v3034
      %vm3042 = vmor %vm3040, %vm3041
      %v3043 = vsel %vm3042, %v3034, %v3039
      %v3044 = vrsqrt.pop %v2331
      %v3045 = vmul.f32 %v3044, %v2331
      %v3046 = vmul.f32 %v3045, %v3044
      %v3047 = vmul.f32 0.5, %v3046
      %v3048 = vsub.f32 1.5, %v3047
      %v3049 = vmul.f32 %v3044, %v3048
      %vm3050 = vweird.f32 %v2331
      %vm3051 = vweird.f32 %v3044
      %vm3052 = vmor %vm3050, %vm3051
      %v3053 = vsel %vm3052, %v3044, %v3049
      %v3054 = vrsqrt.pop %v2332
      %v3055 = vmul.f32 %v3054, %v2332
      %v3056 = vmul.f32 %v3055, %v3054
      %v3057 = vmul.f32 0.5, %v3056
      %v3058 = vsub.f32 1.5, %v3057
      %v3059 = vmul.f32 %v3054, %v3058
      %vm3060 = vweird.f32 %v2332
      %vm3061 = vweird.f32 %v3054
      %vm3062 = vmor %vm3060, %vm3061
      %v3063 = vsel %vm3062, %v3054, %v3059
      %v3064 = vrsqrt.pop %v2333
      %v3065 = vmul.f32 %v3064, %v2333
      %v3066 = vmul.f32 %v3065, %v3064
      %v3067 = vmul.f32 0.5, %v3066
      %v3068 = vsub.f32 1.5, %v3067
      %v3069 = vmul.f32 %v3064, %v3068
      %vm3070 = vweird.f32 %v2333
      %vm3071 = vweird.f32 %v3064
      %vm3072 = vmor %vm3070, %vm3071
      %v3073 = vsel %vm3072, %v3064, %v3069
      %v3074 = vrsqrt.pop %v2334
      %v3075 = vmul.f32 %v3074, %v2334
      %v3076 = vmul.f32 %v3075, %v3074
      %v3077 = vmul.f32 0.5, %v3076
      %v3078 = vsub.f32 1.5, %v3077
      %v3079 = vmul.f32 %v3074, %v3078
      %vm3080 = vweird.f32 %v2334
      %vm3081 = vweird.f32 %v3074
      %vm3082 = vmor %vm3080, %vm3081
      %v3083 = vsel %vm3082, %v3074, %v3079
      %v3084 = vrsqrt.pop %v2335
      %v3085 = vmul.f32 %v3084, %v2335
      %v3086 = vmul.f32 %v3085, %v3084
      %v3087 = vmul.f32 0.5, %v3086
      %v3088 = vsub.f32 1.5, %v3087
      %v3089 = vmul.f32 %v3084, %v3088
      %vm3090 = vweird.f32 %v2335
      %vm3091 = vweird.f32 %v3084
      %vm3092 = vmor %vm3090, %vm3091
      %v3093 = vsel %vm3092, %v3084, %v3089
      %v3094 = vrsqrt.pop %v2336
      %v3095 = vmul.f32 %v3094, %v2336
      %v3096 = vmul.f32 %v3095, %v3094
      %v3097 = vmul.f32 0.5, %v3096
      %v3098 = vsub.f32 1.5, %v3097
      %v3099 = vmul.f32 %v3094, %v3098
      %vm3100 = vweird.f32 %v2336
      %vm3101 = vweird.f32 %v3094
      %vm3102 = vmor %vm3100, %vm3101
      %v3103 = vsel %vm3102, %v3094, %v3099
      %v3104 = vrsqrt.pop %v2337
      %v3105 = vmul.f32 %v3104, %v2337
      %v3106 = vmul.f32 %v3105, %v3104
      %v3107 = vmul.f32 0.5, %v3106
      %v3108 = vsub.f32 1.5, %v3107
      %v3109 = vmul.f32 %v3104, %v3108
      %vm3110 = vweird.f32 %v2337
      %vm3111 = vweird.f32 %v3104
      %vm3112 = vmor %vm3110, %vm3111
      %v3113 = vsel %vm3112, %v3104, %v3109
      %v3114 = vrsqrt.pop %v2338
      %v3115 = vmul.f32 %v3114, %v2338
      %v3116 = vmul.f32 %v3115, %v3114
      %v3117 = vmul.f32 0.5, %v3116
      %v3118 = vsub.f32 1.5, %v3117
      %v3119 = vmul.f32 %v3114, %v3118
      %vm3120 = vweird.f32 %v2338
      %vm3121 = vweird.f32 %v3114
      %vm3122 = vmor %vm3120, %vm3121
      %v3123 = vsel %vm3122, %v3114, %v3119
      %v3124 = vrsqrt.pop %v2339
      %v3125 = vmul.f32 %v3124, %v2339
      %v3126 = vmul.f32 %v3125, %v3124
      %v3127 = vmul.f32 0.5, %v3126
      %v3128 = vsub.f32 1.5, %v3127
      %v3129 = vmul.f32 %v3124, %v3128
      %vm3130 = vweird.f32 %v2339
      %vm3131 = vweird.f32 %v3124
      %vm3132 = vmor %vm3130, %vm3131
      %v3133 = vsel %vm3132, %v3124, %v3129
      %v3134 = vrsqrt.pop %v2340
      %v3135 = vmul.f32 %v3134, %v2340
      %v3136 = vmul.f32 %v3135, %v3134
      %v3137 = vmul.f32 0.5, %v3136
      %v3138 = vsub.f32 1.5, %v3137
      %v3139 = vmul.f32 %v3134, %v3138
      %vm3140 = vweird.f32 %v2340
      %vm3141 = vweird.f32 %v3134
      %vm3142 = vmor %vm3140, %vm3141
      %v3143 = vsel %vm3142, %v3134, %v3139
      %v3144 = vrsqrt.pop %v2341
      %v3145 = vmul.f32 %v3144, %v2341
      %v3146 = vmul.f32 %v3145, %v3144
      %v3147 = vmul.f32 0.5, %v3146
      %v3148 = vsub.f32 1.5, %v3147
      %v3149 = vmul.f32 %v3144, %v3148
      %vm3150 = vweird.f32 %v2341
      %vm3151 = vweird.f32 %v3144
      %vm3152 = vmor %vm3150, %vm3151
      %v3153 = vsel %vm3152, %v3144, %v3149
      %v3154 = vrsqrt.pop %v2342
      %v3155 = vmul.f32 %v3154, %v2342
      %v3156 = vmul.f32 %v3155, %v3154
      %v3157 = vmul.f32 0.5, %v3156
      %v3158 = vsub.f32 1.5, %v3157
      %v3159 = vmul.f32 %v3154, %v3158
      %vm3160 = vweird.f32 %v2342
      %vm3161 = vweird.f32 %v3154
      %vm3162 = vmor %vm3160, %vm3161
      %v3163 = vsel %vm3162, %v3154, %v3159
      %v3164 = vrsqrt.pop %v2343
      %v3165 = vmul.f32 %v3164, %v2343
      %v3166 = vmul.f32 %v3165, %v3164
      %v3167 = vmul.f32 0.5, %v3166
      %v3168 = vsub.f32 1.5, %v3167
      %v3169 = vmul.f32 %v3164, %v3168
      %vm3170 = vweird.f32 %v2343
      %vm3171 = vweird.f32 %v3164
      %vm3172 = vmor %vm3170, %vm3171
      %v3173 = vsel %vm3172, %v3164, %v3169
      %v3174 = vrsqrt.pop %v2344
      %v3175 = vmul.f32 %v3174, %v2344
      %v3176 = vmul.f32 %v3175, %v3174
      %v3177 = vmul.f32 0.5, %v3176
      %v3178 = vsub.f32 1.5, %v3177
      %v3179 = vmul.f32 %v3174, %v3178
      %vm3180 = vweird.f32 %v2344
      %vm3181 = vweird.f32 %v3174
      %vm3182 = vmor %vm3180, %vm3181
      %v3183 = vsel %vm3182, %v3174, %v3179
      %v3184 = vrsqrt.pop %v2345
      %v3185 = vmul.f32 %v3184, %v2345
      %v3186 = vmul.f32 %v3185, %v3184
      %v3187 = vmul.f32 0.5, %v3186
      %v3188 = vsub.f32 1.5, %v3187
      %v3189 = vmul.f32 %v3184, %v3188
      %vm3190 = vweird.f32 %v2345
      %vm3191 = vweird.f32 %v3184
      %vm3192 = vmor %vm3190, %vm3191
      %v3193 = vsel %vm3192, %v3184, %v3189
      %v3194 = vrsqrt.pop %v2346
      %v3195 = vmul.f32 %v3194, %v2346
      %v3196 = vmul.f32 %v3195, %v3194
      %v3197 = vmul.f32 0.5, %v3196
      %v3198 = vsub.f32 1.5, %v3197
      %v3199 = vmul.f32 %v3194, %v3198
      %vm3200 = vweird.f32 %v2346
      %vm3201 = vweird.f32 %v3194
      %vm3202 = vmor %vm3200, %vm3201
      %v3203 = vsel %vm3202, %v3194, %v3199
      %v3204 = vrsqrt.pop %v2347
      %v3205 = vmul.f32 %v3204, %v2347
      %v3206 = vmul.f32 %v3205, %v3204
      %v3207 = vmul.f32 0.5, %v3206
      %v3208 = vsub.f32 1.5, %v3207
      %v3209 = vmul.f32 %v3204, %v3208
      %vm3210 = vweird.f32 %v2347
      %vm3211 = vweird.f32 %v3204
      %vm3212 = vmor %vm3210, %vm3211
      %v3213 = vsel %vm3212, %v3204, %v3209
      %v3214 = vrsqrt.pop %v2348
      %v3215 = vmul.f32 %v3214, %v2348
      %v3216 = vmul.f32 %v3215, %v3214
      %v3217 = vmul.f32 0.5, %v3216
      %v3218 = vsub.f32 1.5, %v3217
      %v3219 = vmul.f32 %v3214, %v3218
      %vm3220 = vweird.f32 %v2348
      %vm3221 = vweird.f32 %v3214
      %vm3222 = vmor %vm3220, %vm3221
      %v3223 = vsel %vm3222, %v3214, %v3219
      %v3224 = vrsqrt.pop %v2349
      %v3225 = vmul.f32 %v3224, %v2349
      %v3226 = vmul.f32 %v3225, %v3224
      %v3227 = vmul.f32 0.5, %v3226
      %v3228 = vsub.f32 1.5, %v3227
      %v3229 = vmul.f32 %v3224, %v3228
      %vm3230 = vweird.f32 %v2349
      %vm3231 = vweird.f32 %v3224
      %vm3232 = vmor %vm3230, %vm3231
      %v3233 = vsel %vm3232, %v3224, %v3229
      %v3234 = vrsqrt.pop %v2350
      %v3235 = vmul.f32 %v3234, %v2350
      %v3236 = vmul.f32 %v3235, %v3234
      %v3237 = vmul.f32 0.5, %v3236
      %v3238 = vsub.f32 1.5, %v3237
      %v3239 = vmul.f32 %v3234, %v3238
      %vm3240 = vweird.f32 %v2350
      %vm3241 = vweird.f32 %v3234
      %vm3242 = vmor %vm3240, %vm3241
      %v3243 = vsel %vm3242, %v3234, %v3239
      %v3244 = vrsqrt.pop %v2351
      %v3245 = vmul.f32 %v3244, %v2351
      %v3246 = vmul.f32 %v3245, %v3244
      %v3247 = vmul.f32 0.5, %v3246
      %v3248 = vsub.f32 1.5, %v3247
      %v3249 = vmul.f32 %v3244, %v3248
      %vm3250 = vweird.f32 %v2351
      %vm3251 = vweird.f32 %v3244
      %vm3252 = vmor %vm3250, %vm3251
      %v3253 = vsel %vm3252, %v3244, %v3249
      %v3254 = vrsqrt.pop %v2352
      %v3255 = vmul.f32 %v3254, %v2352
      %v3256 = vmul.f32 %v3255, %v3254
      %v3257 = vmul.f32 0.5, %v3256
      %v3258 = vsub.f32 1.5, %v3257
      %v3259 = vmul.f32 %v3254, %v3258
      %vm3260 = vweird.f32 %v2352
      %vm3261 = vweird.f32 %v3254
      %vm3262 = vmor %vm3260, %vm3261
      %v3263 = vsel %vm3262, %v3254, %v3259
      %v3264 = vrsqrt.pop %v2353
      %v3265 = vmul.f32 %v3264, %v2353
      %v3266 = vmul.f32 %v3265, %v3264
      %v3267 = vmul.f32 0.5, %v3266
      %v3268 = vsub.f32 1.5, %v3267
      %v3269 = vmul.f32 %v3264, %v3268
      %vm3270 = vweird.f32 %v2353
      %vm3271 = vweird.f32 %v3264
      %vm3272 = vmor %vm3270, %vm3271
      %v3273 = vsel %vm3272, %v3264, %v3269
      %v3274 = vrsqrt.pop %v2354
      %v3275 = vmul.f32 %v3274, %v2354
      %v3276 = vmul.f32 %v3275, %v3274
      %v3277 = vmul.f32 0.5, %v3276
      %v3278 = vsub.f32 1.5, %v3277
      %v3279 = vmul.f32 %v3274, %v3278
      %vm3280 = vweird.f32 %v2354
      %vm3281 = vweird.f32 %v3274
      %vm3282 = vmor %vm3280, %vm3281
      %v3283 = vsel %vm3282, %v3274, %v3279
      %v3284 = vrsqrt.pop %v2355
      %v3285 = vmul.f32 %v3284, %v2355
      %v3286 = vmul.f32 %v3285, %v3284
      %v3287 = vmul.f32 0.5, %v3286
      %v3288 = vsub.f32 1.5, %v3287
      %v3289 = vmul.f32 %v3284, %v3288
      %vm3290 = vweird.f32 %v2355
      %vm3291 = vweird.f32 %v3284
      %vm3292 = vmor %vm3290, %vm3291
      %v3293 = vsel %vm3292, %v3284, %v3289
      %v3294 = vrsqrt.pop %v2356
      %v3295 = vmul.f32 %v3294, %v2356
      %v3296 = vmul.f32 %v3295, %v3294
      %v3297 = vmul.f32 0.5, %v3296
      %v3298 = vsub.f32 1.5, %v3297
      %v3299 = vmul.f32 %v3294, %v3298
      %vm3300 = vweird.f32 %v2356
      %vm3301 = vweird.f32 %v3294
      %vm3302 = vmor %vm3300, %vm3301
      %v3303 = vsel %vm3302, %v3294, %v3299
      %v3304 = vrsqrt.pop %v2357
      %v3305 = vmul.f32 %v3304, %v2357
      %v3306 = vmul.f32 %v3305, %v3304
      %v3307 = vmul.f32 0.5, %v3306
      %v3308 = vsub.f32 1.5, %v3307
      %v3309 = vmul.f32 %v3304, %v3308
      %vm3310 = vweird.f32 %v2357
      %vm3311 = vweird.f32 %v3304
      %vm3312 = vmor %vm3310, %vm3311
      %v3313 = vsel %vm3312, %v3304, %v3309
      %v3314 = vrsqrt.pop %v2358
      %v3315 = vmul.f32 %v3314, %v2358
      %v3316 = vmul.f32 %v3315, %v3314
      %v3317 = vmul.f32 0.5, %v3316
      %v3318 = vsub.f32 1.5, %v3317
      %v3319 = vmul.f32 %v3314, %v3318
      %vm3320 = vweird.f32 %v2358
      %vm3321 = vweird.f32 %v3314
      %vm3322 = vmor %vm3320, %vm3321
      %v3323 = vsel %vm3322, %v3314, %v3319
      %v3324 = vrsqrt.pop %v2359
      %v3325 = vmul.f32 %v3324, %v2359
      %v3326 = vmul.f32 %v3325, %v3324
      %v3327 = vmul.f32 0.5, %v3326
      %v3328 = vsub.f32 1.5, %v3327
      %v3329 = vmul.f32 %v3324, %v3328
      %vm3330 = vweird.f32 %v2359
      %vm3331 = vweird.f32 %v3324
      %vm3332 = vmor %vm3330, %vm3331
      %v3333 = vsel %vm3332, %v3324, %v3329
      %v3334 = vrsqrt.pop %v2360
      %v3335 = vmul.f32 %v3334, %v2360
      %v3336 = vmul.f32 %v3335, %v3334
      %v3337 = vmul.f32 0.5, %v3336
      %v3338 = vsub.f32 1.5, %v3337
      %v3339 = vmul.f32 %v3334, %v3338
      %vm3340 = vweird.f32 %v2360
      %vm3341 = vweird.f32 %v3334
      %vm3342 = vmor %vm3340, %vm3341
      %v3343 = vsel %vm3342, %v3334, %v3339
      %v3344 = vrsqrt.pop %v2361
      %v3345 = vmul.f32 %v3344, %v2361
      %v3346 = vmul.f32 %v3345, %v3344
      %v3347 = vmul.f32 0.5, %v3346
      %v3348 = vsub.f32 1.5, %v3347
      %v3349 = vmul.f32 %v3344, %v3348
      %vm3350 = vweird.f32 %v2361
      %vm3351 = vweird.f32 %v3344
      %vm3352 = vmor %vm3350, %vm3351
      %v3353 = vsel %vm3352, %v3344, %v3349
      %v3354 = vrsqrt.pop %v2362
      %v3355 = vmul.f32 %v3354, %v2362
      %v3356 = vmul.f32 %v3355, %v3354
      %v3357 = vmul.f32 0.5, %v3356
      %v3358 = vsub.f32 1.5, %v3357
      %v3359 = vmul.f32 %v3354, %v3358
      %vm3360 = vweird.f32 %v2362
      %vm3361 = vweird.f32 %v3354
      %vm3362 = vmor %vm3360, %vm3361
      %v3363 = vsel %vm3362, %v3354, %v3359
      %v3364 = vrsqrt.pop %v2363
      %v3365 = vmul.f32 %v3364, %v2363
      %v3366 = vmul.f32 %v3365, %v3364
      %v3367 = vmul.f32 0.5, %v3366
      %v3368 = vsub.f32 1.5, %v3367
      %v3369 = vmul.f32 %v3364, %v3368
      %vm3370 = vweird.f32 %v2363
      %vm3371 = vweird.f32 %v3364
      %vm3372 = vmor %vm3370, %vm3371
      %v3373 = vsel %vm3372, %v3364, %v3369
      %v3374 = vrsqrt.pop %v2364
      %v3375 = vmul.f32 %v3374, %v2364
      %v3376 = vmul.f32 %v3375, %v3374
      %v3377 = vmul.f32 0.5, %v3376
      %v3378 = vsub.f32 1.5, %v3377
      %v3379 = vmul.f32 %v3374, %v3378
      %vm3380 = vweird.f32 %v2364
      %vm3381 = vweird.f32 %v3374
      %vm3382 = vmor %vm3380, %vm3381
      %v3383 = vsel %vm3382, %v3374, %v3379
      %v3384 = vrsqrt.pop %v2365
      %v3385 = vmul.f32 %v3384, %v2365
      %v3386 = vmul.f32 %v3385, %v3384
      %v3387 = vmul.f32 0.5, %v3386
      %v3388 = vsub.f32 1.5, %v3387
      %v3389 = vmul.f32 %v3384, %v3388
      %vm3390 = vweird.f32 %v2365
      %vm3391 = vweird.f32 %v3384
      %vm3392 = vmor %vm3390, %vm3391
      %v3393 = vsel %vm3392, %v3384, %v3389
      %v3394 = vrsqrt.pop %v2366
      %v3395 = vmul.f32 %v3394, %v2366
      %v3396 = vmul.f32 %v3395, %v3394
      %v3397 = vmul.f32 0.5, %v3396
      %v3398 = vsub.f32 1.5, %v3397
      %v3399 = vmul.f32 %v3394, %v3398
      %vm3400 = vweird.f32 %v2366
      %vm3401 = vweird.f32 %v3394
      %vm3402 = vmor %vm3400, %vm3401
      %v3403 = vsel %vm3402, %v3394, %v3399
      %v3404 = vrsqrt.pop %v2367
      %v3405 = vmul.f32 %v3404, %v2367
      %v3406 = vmul.f32 %v3405, %v3404
      %v3407 = vmul.f32 0.5, %v3406
      %v3408 = vsub.f32 1.5, %v3407
      %v3409 = vmul.f32 %v3404, %v3408
      %vm3410 = vweird.f32 %v2367
      %vm3411 = vweird.f32 %v3404
      %vm3412 = vmor %vm3410, %vm3411
      %v3413 = vsel %vm3412, %v3404, %v3409
      %v3414 = vrsqrt.pop %v2368
      %v3415 = vmul.f32 %v3414, %v2368
      %v3416 = vmul.f32 %v3415, %v3414
      %v3417 = vmul.f32 0.5, %v3416
      %v3418 = vsub.f32 1.5, %v3417
      %v3419 = vmul.f32 %v3414, %v3418
      %vm3420 = vweird.f32 %v2368
      %vm3421 = vweird.f32 %v3414
      %vm3422 = vmor %vm3420, %vm3421
      %v3423 = vsel %vm3422, %v3414, %v3419
      %v3424 = vrsqrt.pop %v2369
      %v3425 = vmul.f32 %v3424, %v2369
      %v3426 = vmul.f32 %v3425, %v3424
      %v3427 = vmul.f32 0.5, %v3426
      %v3428 = vsub.f32 1.5, %v3427
      %v3429 = vmul.f32 %v3424, %v3428
      %vm3430 = vweird.f32 %v2369
      %vm3431 = vweird.f32 %v3424
      %vm3432 = vmor %vm3430, %vm3431
      %v3433 = vsel %vm3432, %v3424, %v3429
      %v3434 = vrsqrt.pop %v2370
      %v3435 = vmul.f32 %v3434, %v2370
      %v3436 = vmul.f32 %v3435, %v3434
      %v3437 = vmul.f32 0.5, %v3436
      %v3438 = vsub.f32 1.5, %v3437
      %v3439 = vmul.f32 %v3434, %v3438
      %vm3440 = vweird.f32 %v2370
      %vm3441 = vweird.f32 %v3434
      %vm3442 = vmor %vm3440, %vm3441
      %v3443 = vsel %vm3442, %v3434, %v3439
      %v3444 = vrsqrt.pop %v2371
      %v3445 = vmul.f32 %v3444, %v2371
      %v3446 = vmul.f32 %v3445, %v3444
      %v3447 = vmul.f32 0.5, %v3446
      %v3448 = vsub.f32 1.5, %v3447
      %v3449 = vmul.f32 %v3444, %v3448
      %vm3450 = vweird.f32 %v2371
      %vm3451 = vweird.f32 %v3444
      %vm3452 = vmor %vm3450, %vm3451
      %v3453 = vsel %vm3452, %v3444, %v3449
      %v3454 = vrsqrt.pop %v2372
      %v3455 = vmul.f32 %v3454, %v2372
      %v3456 = vmul.f32 %v3455, %v3454
      %v3457 = vmul.f32 0.5, %v3456
      %v3458 = vsub.f32 1.5, %v3457
      %v3459 = vmul.f32 %v3454, %v3458
      %vm3460 = vweird.f32 %v2372
      %vm3461 = vweird.f32 %v3454
      %vm3462 = vmor %vm3460, %vm3461
      %v3463 = vsel %vm3462, %v3454, %v3459
      %v3464 = vrsqrt.pop %v2373
      %v3465 = vmul.f32 %v3464, %v2373
      %v3466 = vmul.f32 %v3465, %v3464
      %v3467 = vmul.f32 0.5, %v3466
      %v3468 = vsub.f32 1.5, %v3467
      %v3469 = vmul.f32 %v3464, %v3468
      %vm3470 = vweird.f32 %v2373
      %vm3471 = vweird.f32 %v3464
      %vm3472 = vmor %vm3470, %vm3471
      %v3473 = vsel %vm3472, %v3464, %v3469
      %v3474 = vrsqrt.pop %v2374
      %v3475 = vmul.f32 %v3474, %v2374
      %v3476 = vmul.f32 %v3475, %v3474
      %v3477 = vmul.f32 0.5, %v3476
      %v3478 = vsub.f32 1.5, %v3477
      %v3479 = vmul.f32 %v3474, %v3478
      %vm3480 = vweird.f32 %v2374
      %vm3481 = vweird.f32 %v3474
      %vm3482 = vmor %vm3480, %vm3481
      %v3483 = vsel %vm3482, %v3474, %v3479
      %v3484 = vrsqrt.pop %v2375
      %v3485 = vmul.f32 %v3484, %v2375
      %v3486 = vmul.f32 %v3485, %v3484
      %v3487 = vmul.f32 0.5, %v3486
      %v3488 = vsub.f32 1.5, %v3487
      %v3489 = vmul.f32 %v3484, %v3488
      %vm3490 = vweird.f32 %v2375
      %vm3491 = vweird.f32 %v3484
      %vm3492 = vmor %vm3490, %vm3491
      %v3493 = vsel %vm3492, %v3484, %v3489
      %v3494 = vrsqrt.pop %v2376
      %v3495 = vmul.f32 %v3494, %v2376
      %v3496 = vmul.f32 %v3495, %v3494
      %v3497 = vmul.f32 0.5, %v3496
      %v3498 = vsub.f32 1.5, %v3497
      %v3499 = vmul.f32 %v3494, %v3498
      %vm3500 = vweird.f32 %v2376
      %vm3501 = vweird.f32 %v3494
      %vm3502 = vmor %vm3500, %vm3501
      %v3503 = vsel %vm3502, %v3494, %v3499
      %v3504 = vrsqrt.pop %v2377
      %v3505 = vmul.f32 %v3504, %v2377
      %v3506 = vmul.f32 %v3505, %v3504
      %v3507 = vmul.f32 0.5, %v3506
      %v3508 = vsub.f32 1.5, %v3507
      %v3509 = vmul.f32 %v3504, %v3508
      %vm3510 = vweird.f32 %v2377
      %vm3511 = vweird.f32 %v3504
      %vm3512 = vmor %vm3510, %vm3511
      %v3513 = vsel %vm3512, %v3504, %v3509
      %v3514 = vrsqrt.pop %v2378
      %v3515 = vmul.f32 %v3514, %v2378
      %v3516 = vmul.f32 %v3515, %v3514
      %v3517 = vmul.f32 0.5, %v3516
      %v3518 = vsub.f32 1.5, %v3517
      %v3519 = vmul.f32 %v3514, %v3518
      %vm3520 = vweird.f32 %v2378
      %vm3521 = vweird.f32 %v3514
      %vm3522 = vmor %vm3520, %vm3521
      %v3523 = vsel %vm3522, %v3514, %v3519
      %v3524 = vrsqrt.pop %v2379
      %v3525 = vmul.f32 %v3524, %v2379
      %v3526 = vmul.f32 %v3525, %v3524
      %v3527 = vmul.f32 0.5, %v3526
      %v3528 = vsub.f32 1.5, %v3527
      %v3529 = vmul.f32 %v3524, %v3528
      %vm3530 = vweird.f32 %v2379
      %vm3531 = vweird.f32 %v3524
      %vm3532 = vmor %vm3530, %vm3531
      %v3533 = vsel %vm3532, %v3524, %v3529
      %v3534 = vrsqrt.pop %v2380
      %v3535 = vmul.f32 %v3534, %v2380
      %v3536 = vmul.f32 %v3535, %v3534
      %v3537 = vmul.f32 0.5, %v3536
      %v3538 = vsub.f32 1.5, %v3537
      %v3539 = vmul.f32 %v3534, %v3538
      %vm3540 = vweird.f32 %v2380
      %vm3541 = vweird.f32 %v3534
      %vm3542 = vmor %vm3540, %vm3541
      %v3543 = vsel %vm3542, %v3534, %v3539
      %v3544 = vrsqrt.pop %v2381
      %v3545 = vmul.f32 %v3544, %v2381
      %v3546 = vmul.f32 %v3545, %v3544
      %v3547 = vmul.f32 0.5, %v3546
      %v3548 = vsub.f32 1.5, %v3547
      %v3549 = vmul.f32 %v3544, %v3548
      %vm3550 = vweird.f32 %v2381
      %vm3551 = vweird.f32 %v3544
      %vm3552 = vmor %vm3550, %vm3551
      %v3553 = vsel %vm3552, %v3544, %v3549
      %v3554 = vrsqrt.pop %v2382
      %v3555 = vmul.f32 %v3554, %v2382
      %v3556 = vmul.f32 %v3555, %v3554
      %v3557 = vmul.f32 0.5, %v3556
      %v3558 = vsub.f32 1.5, %v3557
      %v3559 = vmul.f32 %v3554, %v3558
      %vm3560 = vweird.f32 %v2382
      %vm3561 = vweird.f32 %v3554
      %vm3562 = vmor %vm3560, %vm3561
      %v3563 = vsel %vm3562, %v3554, %v3559
      %v3564 = vrsqrt.pop %v2383
      %v3565 = vmul.f32 %v3564, %v2383
      %v3566 = vmul.f32 %v3565, %v3564
      %v3567 = vmul.f32 0.5, %v3566
      %v3568 = vsub.f32 1.5, %v3567
      %v3569 = vmul.f32 %v3564, %v3568
      %vm3570 = vweird.f32 %v2383
      %vm3571 = vweird.f32 %v3564
      %vm3572 = vmor %vm3570, %vm3571
      %v3573 = vsel %vm3572, %v3564, %v3569
      %v3574 = vrsqrt.pop %v2384
      %v3575 = vmul.f32 %v3574, %v2384
      %v3576 = vmul.f32 %v3575, %v3574
      %v3577 = vmul.f32 0.5, %v3576
      %v3578 = vsub.f32 1.5, %v3577
      %v3579 = vmul.f32 %v3574, %v3578
      %vm3580 = vweird.f32 %v2384
      %vm3581 = vweird.f32 %v3574
      %vm3582 = vmor %vm3580, %vm3581
      %v3583 = vsel %vm3582, %v3574, %v3579
      %v3584 = vrsqrt.pop %v2385
      %v3585 = vmul.f32 %v3584, %v2385
      %v3586 = vmul.f32 %v3585, %v3584
      %v3587 = vmul.f32 0.5, %v3586
      %v3588 = vsub.f32 1.5, %v3587
      %v3589 = vmul.f32 %v3584, %v3588
      %vm3590 = vweird.f32 %v2385
      %vm3591 = vweird.f32 %v3584
      %vm3592 = vmor %vm3590, %vm3591
      %v3593 = vsel %vm3592, %v3584, %v3589
      %v3594 = vrsqrt.pop %v2386
      %v3595 = vmul.f32 %v3594, %v2386
      %v3596 = vmul.f32 %v3595, %v3594
      %v3597 = vmul.f32 0.5, %v3596
      %v3598 = vsub.f32 1.5, %v3597
      %v3599 = vmul.f32 %v3594, %v3598
      %vm3600 = vweird.f32 %v2386
      %vm3601 = vweird.f32 %v3594
      %vm3602 = vmor %vm3600, %vm3601
      %v3603 = vsel %vm3602, %v3594, %v3599
      %v3604 = vrsqrt.pop %v2387
      %v3605 = vmul.f32 %v3604, %v2387
      %v3606 = vmul.f32 %v3605, %v3604
      %v3607 = vmul.f32 0.5, %v3606
      %v3608 = vsub.f32 1.5, %v3607
      %v3609 = vmul.f32 %v3604, %v3608
      %vm3610 = vweird.f32 %v2387
      %vm3611 = vweird.f32 %v3604
      %vm3612 = vmor %vm3610, %vm3611
      %v3613 = vsel %vm3612, %v3604, %v3609
      %v3614 = vrsqrt.pop %v2388
      %v3615 = vmul.f32 %v3614, %v2388
      %v3616 = vmul.f32 %v3615, %v3614
      %v3617 = vmul.f32 0.5, %v3616
      %v3618 = vsub.f32 1.5, %v3617
      %v3619 = vmul.f32 %v3614, %v3618
      %vm3620 = vweird.f32 %v2388
      %vm3621 = vweird.f32 %v3614
      %vm3622 = vmor %vm3620, %vm3621
      %v3623 = vsel %vm3622, %v3614, %v3619
      %v3624 = vrsqrt.pop %v2389
      %v3625 = vmul.f32 %v3624, %v2389
      %v3626 = vmul.f32 %v3625, %v3624
      %v3627 = vmul.f32 0.5, %v3626
      %v3628 = vsub.f32 1.5, %v3627
      %v3629 = vmul.f32 %v3624, %v3628
      %vm3630 = vweird.f32 %v2389
      %vm3631 = vweird.f32 %v3624
      %vm3632 = vmor %vm3630, %vm3631
      %v3633 = vsel %vm3632, %v3624, %v3629
      %v3634 = vrsqrt.pop %v2390
      %v3635 = vmul.f32 %v3634, %v2390
      %v3636 = vmul.f32 %v3635, %v3634
      %v3637 = vmul.f32 0.5, %v3636
      %v3638 = vsub.f32 1.5, %v3637
      %v3639 = vmul.f32 %v3634, %v3638
      %vm3640 = vweird.f32 %v2390
      %vm3641 = vweird.f32 %v3634
      %vm3642 = vmor %vm3640, %vm3641
      %v3643 = vsel %vm3642, %v3634, %v3639
      %v3644 = vrsqrt.pop %v2391
      %v3645 = vmul.f32 %v3644, %v2391
      %v3646 = vmul.f32 %v3645, %v3644
      %v3647 = vmul.f32 0.5, %v3646
      %v3648 = vsub.f32 1.5, %v3647
      %v3649 = vmul.f32 %v3644, %v3648
      %vm3650 = vweird.f32 %v2391
      %vm3651 = vweird.f32 %v3644
      %vm3652 = vmor %vm3650, %vm3651
      %v3653 = vsel %vm3652, %v3644, %v3649
      %v3654 = vrsqrt.pop %v2392
      %v3655 = vmul.f32 %v3654, %v2392
      %v3656 = vmul.f32 %v3655, %v3654
      %v3657 = vmul.f32 0.5, %v3656
      %v3658 = vsub.f32 1.5, %v3657
      %v3659 = vmul.f32 %v3654, %v3658
      %vm3660 = vweird.f32 %v2392
      %vm3661 = vweird.f32 %v3654
      %vm3662 = vmor %vm3660, %vm3661
      %v3663 = vsel %vm3662, %v3654, %v3659
      %v3664 = vrsqrt.pop %v2393
      %v3665 = vmul.f32 %v3664, %v2393
      %v3666 = vmul.f32 %v3665, %v3664
      %v3667 = vmul.f32 0.5, %v3666
      %v3668 = vsub.f32 1.5, %v3667
      %v3669 = vmul.f32 %v3664, %v3668
      %vm3670 = vweird.f32 %v2393
      %vm3671 = vweird.f32 %v3664
      %vm3672 = vmor %vm3670, %vm3671
      %v3673 = vsel %vm3672, %v3664, %v3669
      %v3674 = vmul.f32 %v2262, %v2403
      %v3675 = vmul.f32 %v2263, %v2413
      %v3676 = vmul.f32 %v2264, %v2423
      %v3677 = vmul.f32 %v2265, %v2433
      %v3678 = vmul.f32 %v2262, %v2443
      %v3679 = vmul.f32 %v2263, %v2453
      %v3680 = vmul.f32 %v2264, %v2463
      %v3681 = vmul.f32 %v2265, %v2473
      %v3682 = vmul.f32 %v2262, %v2483
      %v3683 = vmul.f32 %v2263, %v2493
      %v3684 = vmul.f32 %v2264, %v2503
      %v3685 = vmul.f32 %v2265, %v2513
      %v3686 = vmul.f32 %v2262, %v2523
      %v3687 = vmul.f32 %v2263, %v2533
      %v3688 = vmul.f32 %v2264, %v2543
      %v3689 = vmul.f32 %v2265, %v2553
      %v3690 = vmul.f32 %v2262, %v2563
      %v3691 = vmul.f32 %v2263, %v2573
      %v3692 = vmul.f32 %v2264, %v2583
      %v3693 = vmul.f32 %v2265, %v2593
      %v3694 = vmul.f32 %v2262, %v2603
      %v3695 = vmul.f32 %v2263, %v2613
      %v3696 = vmul.f32 %v2264, %v2623
      %v3697 = vmul.f32 %v2265, %v2633
      %v3698 = vmul.f32 %v2262, %v2643
      %v3699 = vmul.f32 %v2263, %v2653
      %v3700 = vmul.f32 %v2264, %v2663
      %v3701 = vmul.f32 %v2265, %v2673
      %v3702 = vmul.f32 %v2262, %v2683
      %v3703 = vmul.f32 %v2263, %v2693
      %v3704 = vmul.f32 %v2264, %v2703
      %v3705 = vmul.f32 %v2265, %v2713
      %v3706 = vmul.f32 %v2262, %v2723
      %v3707 = vmul.f32 %v2263, %v2733
      %v3708 = vmul.f32 %v2264, %v2743
      %v3709 = vmul.f32 %v2265, %v2753
      %v3710 = vmul.f32 %v2262, %v2763
      %v3711 = vmul.f32 %v2263, %v2773
      %v3712 = vmul.f32 %v2264, %v2783
      %v3713 = vmul.f32 %v2265, %v2793
      %v3714 = vmul.f32 %v2262, %v2803
      %v3715 = vmul.f32 %v2263, %v2813
      %v3716 = vmul.f32 %v2264, %v2823
      %v3717 = vmul.f32 %v2265, %v2833
      %v3718 = vmul.f32 %v2262, %v2843
      %v3719 = vmul.f32 %v2263, %v2853
      %v3720 = vmul.f32 %v2264, %v2863
      %v3721 = vmul.f32 %v2265, %v2873
      %v3722 = vmul.f32 %v2262, %v2883
      %v3723 = vmul.f32 %v2263, %v2893
      %v3724 = vmul.f32 %v2264, %v2903
      %v3725 = vmul.f32 %v2265, %v2913
      %v3726 = vmul.f32 %v2262, %v2923
      %v3727 = vmul.f32 %v2263, %v2933
      %v3728 = vmul.f32 %v2264, %v2943
      %v3729 = vmul.f32 %v2265, %v2953
      %v3730 = vmul.f32 %v2262, %v2963
      %v3731 = vmul.f32 %v2263, %v2973
      %v3732 = vmul.f32 %v2264, %v2983
      %v3733 = vmul.f32 %v2265, %v2993
      %v3734 = vmul.f32 %v2262, %v3003
      %v3735 = vmul.f32 %v2263, %v3013
      %v3736 = vmul.f32 %v2264, %v3023
      %v3737 = vmul.f32 %v2265, %v3033
      %v3738 = vmul.f32 %v2262, %v3043
      %v3739 = vmul.f32 %v2263, %v3053
      %v3740 = vmul.f32 %v2264, %v3063
      %v3741 = vmul.f32 %v2265, %v3073
      %v3742 = vmul.f32 %v2262, %v3083
      %v3743 = vmul.f32 %v2263, %v3093
      %v3744 = vmul.f32 %v2264, %v3103
      %v3745 = vmul.f32 %v2265, %v3113
      %v3746 = vmul.f32 %v2262, %v3123
      %v3747 = vmul.f32 %v2263, %v3133
      %v3748 = vmul.f32 %v2264, %v3143
      %v3749 = vmul.f32 %v2265, %v3153
      %v3750 = vmul.f32 %v2262, %v3163
      %v3751 = vmul.f32 %v2263, %v3173
      %v3752 = vmul.f32 %v2264, %v3183
      %v3753 = vmul.f32 %v2265, %v3193
      %v3754 = vmul.f32 %v2262, %v3203
      %v3755 = vmul.f32 %v2263, %v3213
      %v3756 = vmul.f32 %v2264, %v3223
      %v3757 = vmul.f32 %v2265, %v3233
      %v3758 = vmul.f32 %v2262, %v3243
      %v3759 = vmul.f32 %v2263, %v3253
      %v3760 = vmul.f32 %v2264, %v3263
      %v3761 = vmul.f32 %v2265, %v3273
      %v3762 = vmul.f32 %v2262, %v3283
      %v3763 = vmul.f32 %v2263, %v3293
      %v3764 = vmul.f32 %v2264, %v3303
      %v3765 = vmul.f32 %v2265, %v3313
      %v3766 = vmul.f32 %v2262, %v3323
      %v3767 = vmul.f32 %v2263, %v3333
      %v3768 = vmul.f32 %v2264, %v3343
      %v3769 = vmul.f32 %v2265, %v3353
      %v3770 = vmul.f32 %v2262, %v3363
      %v3771 = vmul.f32 %v2263, %v3373
      %v3772 = vmul.f32 %v2264, %v3383
      %v3773 = vmul.f32 %v2265, %v3393
      %v3774 = vmul.f32 %v2262, %v3403
      %v3775 = vmul.f32 %v2263, %v3413
      %v3776 = vmul.f32 %v2264, %v3423
      %v3777 = vmul.f32 %v2265, %v3433
      %v3778 = vmul.f32 %v2262, %v3443
      %v3779 = vmul.f32 %v2263, %v3453
      %v3780 = vmul.f32 %v2264, %v3463
      %v3781 = vmul.f32 %v2265, %v3473
      %v3782 = vmul.f32 %v2262, %v3483
      %v3783 = vmul.f32 %v2263, %v3493
      %v3784 = vmul.f32 %v2264, %v3503
      %v3785 = vmul.f32 %v2265, %v3513
      %v3786 = vmul.f32 %v2262, %v3523
      %v3787 = vmul.f32 %v2263, %v3533
      %v3788 = vmul.f32 %v2264, %v3543
      %v3789 = vmul.f32 %v2265, %v3553
      %v3790 = vmul.f32 %v2262, %v3563
      %v3791 = vmul.f32 %v2263, %v3573
      %v3792 = vmul.f32 %v2264, %v3583
      %v3793 = vmul.f32 %v2265, %v3593
      %v3794 = vmul.f32 %v2262, %v3603
      %v3795 = vmul.f32 %v2263, %v3613
      %v3796 = vmul.f32 %v2264, %v3623
      %v3797 = vmul.f32 %v2265, %v3633
      %v3798 = vmul.f32 %v2262, %v3643
      %v3799 = vmul.f32 %v2263, %v3653
      %v3800 = vmul.f32 %v2264, %v3663
      %v3801 = vmul.f32 %v2265, %v3673
      %3803 = vset.pattern.permute.xlu0 0
      %3804 = vperm.xlu0 %3803, %v3674
      %v3805 = vpop.permute.xlu0 %3804
      %3808 = vset.pattern.permute.xlu0 0
      %3809 = vperm.xlu0 %3808, %v3675
      %v3810 = vpop.permute.xlu0 %3809
      %3813 = vset.pattern.permute.xlu0 0
      %3814 = vperm.xlu0 %3813, %v3676
      %v3815 = vpop.permute.xlu0 %3814
      %3818 = vset.pattern.permute.xlu0 0
      %3819 = vperm.xlu0 %3818, %v3677
      %v3820 = vpop.permute.xlu0 %3819
      %3823 = vset.pattern.permute.xlu0 0
      %3824 = vperm.xlu0 %3823, %v3678
      %v3825 = vpop.permute.xlu0 %3824
      %3828 = vset.pattern.permute.xlu0 0
      %3829 = vperm.xlu0 %3828, %v3679
      %v3830 = vpop.permute.xlu0 %3829
      %3833 = vset.pattern.permute.xlu0 0
      %3834 = vperm.xlu0 %3833, %v3680
      %v3835 = vpop.permute.xlu0 %3834
      %3838 = vset.pattern.permute.xlu0 0
      %3839 = vperm.xlu0 %3838, %v3681
      %v3840 = vpop.permute.xlu0 %3839
      %3843 = vset.pattern.permute.xlu0 0
      %3844 = vperm.xlu0 %3843, %v3682
      %v3845 = vpop.permute.xlu0 %3844
      %3848 = vset.pattern.permute.xlu0 0
      %3849 = vperm.xlu0 %3848, %v3683
      %v3850 = vpop.permute.xlu0 %3849
      %3853 = vset.pattern.permute.xlu0 0
      %3854 = vperm.xlu0 %3853, %v3684
      %v3855 = vpop.permute.xlu0 %3854
      %3858 = vset.pattern.permute.xlu0 0
      %3859 = vperm.xlu0 %3858, %v3685
      %v3860 = vpop.permute.xlu0 %3859
      %3863 = vset.pattern.permute.xlu0 0
      %3864 = vperm.xlu0 %3863, %v3686
      %v3865 = vpop.permute.xlu0 %3864
      %3868 = vset.pattern.permute.xlu0 0
      %3869 = vperm.xlu0 %3868, %v3687
      %v3870 = vpop.permute.xlu0 %3869
      %3873 = vset.pattern.permute.xlu0 0
      %3874 = vperm.xlu0 %3873, %v3688
      %v3875 = vpop.permute.xlu0 %3874
      %3878 = vset.pattern.permute.xlu0 0
      %3879 = vperm.xlu0 %3878, %v3689
      %v3880 = vpop.permute.xlu0 %3879
      %3883 = vset.pattern.permute.xlu0 0
      %3884 = vperm.xlu0 %3883, %v3690
      %v3885 = vpop.permute.xlu0 %3884
      %3888 = vset.pattern.permute.xlu0 0
      %3889 = vperm.xlu0 %3888, %v3691
      %v3890 = vpop.permute.xlu0 %3889
      %3893 = vset.pattern.permute.xlu0 0
      %3894 = vperm.xlu0 %3893, %v3692
      %v3895 = vpop.permute.xlu0 %3894
      %3898 = vset.pattern.permute.xlu0 0
      %3899 = vperm.xlu0 %3898, %v3693
      %v3900 = vpop.permute.xlu0 %3899
      %3903 = vset.pattern.permute.xlu0 0
      %3904 = vperm.xlu0 %3903, %v3694
      %v3905 = vpop.permute.xlu0 %3904
      %3908 = vset.pattern.permute.xlu0 0
      %3909 = vperm.xlu0 %3908, %v3695
      %v3910 = vpop.permute.xlu0 %3909
      %3913 = vset.pattern.permute.xlu0 0
      %3914 = vperm.xlu0 %3913, %v3696
      %v3915 = vpop.permute.xlu0 %3914
      %3918 = vset.pattern.permute.xlu0 0
      %3919 = vperm.xlu0 %3918, %v3697
      %v3920 = vpop.permute.xlu0 %3919
      %3923 = vset.pattern.permute.xlu0 0
      %3924 = vperm.xlu0 %3923, %v3698
      %v3925 = vpop.permute.xlu0 %3924
      %3928 = vset.pattern.permute.xlu0 0
      %3929 = vperm.xlu0 %3928, %v3699
      %v3930 = vpop.permute.xlu0 %3929
      %3933 = vset.pattern.permute.xlu0 0
      %3934 = vperm.xlu0 %3933, %v3700
      %v3935 = vpop.permute.xlu0 %3934
      %3938 = vset.pattern.permute.xlu0 0
      %3939 = vperm.xlu0 %3938, %v3701
      %v3940 = vpop.permute.xlu0 %3939
      %3943 = vset.pattern.permute.xlu0 0
      %3944 = vperm.xlu0 %3943, %v3702
      %v3945 = vpop.permute.xlu0 %3944
      %3948 = vset.pattern.permute.xlu0 0
      %3949 = vperm.xlu0 %3948, %v3703
      %v3950 = vpop.permute.xlu0 %3949
      %3953 = vset.pattern.permute.xlu0 0
      %3954 = vperm.xlu0 %3953, %v3704
      %v3955 = vpop.permute.xlu0 %3954
      %3958 = vset.pattern.permute.xlu0 0
      %3959 = vperm.xlu0 %3958, %v3705
      %v3960 = vpop.permute.xlu0 %3959
      %3963 = vset.pattern.permute.xlu0 0
      %3964 = vperm.xlu0 %3963, %v3706
      %v3965 = vpop.permute.xlu0 %3964
      %3968 = vset.pattern.permute.xlu0 0
      %3969 = vperm.xlu0 %3968, %v3707
      %v3970 = vpop.permute.xlu0 %3969
      %3973 = vset.pattern.permute.xlu0 0
      %3974 = vperm.xlu0 %3973, %v3708
      %v3975 = vpop.permute.xlu0 %3974
      %3978 = vset.pattern.permute.xlu0 0
      %3979 = vperm.xlu0 %3978, %v3709
      %v3980 = vpop.permute.xlu0 %3979
      %3983 = vset.pattern.permute.xlu0 0
      %3984 = vperm.xlu0 %3983, %v3710
      %v3985 = vpop.permute.xlu0 %3984
      %3988 = vset.pattern.permute.xlu0 0
      %3989 = vperm.xlu0 %3988, %v3711
      %v3990 = vpop.permute.xlu0 %3989
      %3993 = vset.pattern.permute.xlu0 0
      %3994 = vperm.xlu0 %3993, %v3712
      %v3995 = vpop.permute.xlu0 %3994
      %3998 = vset.pattern.permute.xlu0 0
      %3999 = vperm.xlu0 %3998, %v3713
      %v4000 = vpop.permute.xlu0 %3999
      %4003 = vset.pattern.permute.xlu0 0
      %4004 = vperm.xlu0 %4003, %v3714
      %v4005 = vpop.permute.xlu0 %4004
      %4008 = vset.pattern.permute.xlu0 0
      %4009 = vperm.xlu0 %4008, %v3715
      %v4010 = vpop.permute.xlu0 %4009
      %4013 = vset.pattern.permute.xlu0 0
      %4014 = vperm.xlu0 %4013, %v3716
      %v4015 = vpop.permute.xlu0 %4014
      %4018 = vset.pattern.permute.xlu0 0
      %4019 = vperm.xlu0 %4018, %v3717
      %v4020 = vpop.permute.xlu0 %4019
      %4023 = vset.pattern.permute.xlu0 0
      %4024 = vperm.xlu0 %4023, %v3718
      %v4025 = vpop.permute.xlu0 %4024
      %4028 = vset.pattern.permute.xlu0 0
      %4029 = vperm.xlu0 %4028, %v3719
      %v4030 = vpop.permute.xlu0 %4029
      %4033 = vset.pattern.permute.xlu0 0
      %4034 = vperm.xlu0 %4033, %v3720
      %v4035 = vpop.permute.xlu0 %4034
      %4038 = vset.pattern.permute.xlu0 0
      %4039 = vperm.xlu0 %4038, %v3721
      %v4040 = vpop.permute.xlu0 %4039
      %4043 = vset.pattern.permute.xlu0 0
      %4044 = vperm.xlu0 %4043, %v3722
      %v4045 = vpop.permute.xlu0 %4044
      %4048 = vset.pattern.permute.xlu0 0
      %4049 = vperm.xlu0 %4048, %v3723
      %v4050 = vpop.permute.xlu0 %4049
      %4053 = vset.pattern.permute.xlu0 0
      %4054 = vperm.xlu0 %4053, %v3724
      %v4055 = vpop.permute.xlu0 %4054
      %4058 = vset.pattern.permute.xlu0 0
      %4059 = vperm.xlu0 %4058, %v3725
      %v4060 = vpop.permute.xlu0 %4059
      %4063 = vset.pattern.permute.xlu0 0
      %4064 = vperm.xlu0 %4063, %v3726
      %v4065 = vpop.permute.xlu0 %4064
      %4068 = vset.pattern.permute.xlu0 0
      %4069 = vperm.xlu0 %4068, %v3727
      %v4070 = vpop.permute.xlu0 %4069
      %4073 = vset.pattern.permute.xlu0 0
      %4074 = vperm.xlu0 %4073, %v3728
      %v4075 = vpop.permute.xlu0 %4074
      %4078 = vset.pattern.permute.xlu0 0
      %4079 = vperm.xlu0 %4078, %v3729
      %v4080 = vpop.permute.xlu0 %4079
      %4083 = vset.pattern.permute.xlu0 0
      %4084 = vperm.xlu0 %4083, %v3730
      %v4085 = vpop.permute.xlu0 %4084
      %4088 = vset.pattern.permute.xlu0 0
      %4089 = vperm.xlu0 %4088, %v3731
      %v4090 = vpop.permute.xlu0 %4089
      %4093 = vset.pattern.permute.xlu0 0
      %4094 = vperm.xlu0 %4093, %v3732
      %v4095 = vpop.permute.xlu0 %4094
      %4098 = vset.pattern.permute.xlu0 0
      %4099 = vperm.xlu0 %4098, %v3733
      %v4100 = vpop.permute.xlu0 %4099
      %4103 = vset.pattern.permute.xlu0 0
      %4104 = vperm.xlu0 %4103, %v3734
      %v4105 = vpop.permute.xlu0 %4104
      %4108 = vset.pattern.permute.xlu0 0
      %4109 = vperm.xlu0 %4108, %v3735
      %v4110 = vpop.permute.xlu0 %4109
      %4113 = vset.pattern.permute.xlu0 0
      %4114 = vperm.xlu0 %4113, %v3736
      %v4115 = vpop.permute.xlu0 %4114
      %4118 = vset.pattern.permute.xlu0 0
      %4119 = vperm.xlu0 %4118, %v3737
      %v4120 = vpop.permute.xlu0 %4119
      %4123 = vset.pattern.permute.xlu0 0
      %4124 = vperm.xlu0 %4123, %v3738
      %v4125 = vpop.permute.xlu0 %4124
      %4128 = vset.pattern.permute.xlu0 0
      %4129 = vperm.xlu0 %4128, %v3739
      %v4130 = vpop.permute.xlu0 %4129
      %4133 = vset.pattern.permute.xlu0 0
      %4134 = vperm.xlu0 %4133, %v3740
      %v4135 = vpop.permute.xlu0 %4134
      %4138 = vset.pattern.permute.xlu0 0
      %4139 = vperm.xlu0 %4138, %v3741
      %v4140 = vpop.permute.xlu0 %4139
      %4143 = vset.pattern.permute.xlu0 0
      %4144 = vperm.xlu0 %4143, %v3742
      %v4145 = vpop.permute.xlu0 %4144
      %4148 = vset.pattern.permute.xlu0 0
      %4149 = vperm.xlu0 %4148, %v3743
      %v4150 = vpop.permute.xlu0 %4149
      %4153 = vset.pattern.permute.xlu0 0
      %4154 = vperm.xlu0 %4153, %v3744
      %v4155 = vpop.permute.xlu0 %4154
      %4158 = vset.pattern.permute.xlu0 0
      %4159 = vperm.xlu0 %4158, %v3745
      %v4160 = vpop.permute.xlu0 %4159
      %4163 = vset.pattern.permute.xlu0 0
      %4164 = vperm.xlu0 %4163, %v3746
      %v4165 = vpop.permute.xlu0 %4164
      %4168 = vset.pattern.permute.xlu0 0
      %4169 = vperm.xlu0 %4168, %v3747
      %v4170 = vpop.permute.xlu0 %4169
      %4173 = vset.pattern.permute.xlu0 0
      %4174 = vperm.xlu0 %4173, %v3748
      %v4175 = vpop.permute.xlu0 %4174
      %4178 = vset.pattern.permute.xlu0 0
      %4179 = vperm.xlu0 %4178, %v3749
      %v4180 = vpop.permute.xlu0 %4179
      %4183 = vset.pattern.permute.xlu0 0
      %4184 = vperm.xlu0 %4183, %v3750
      %v4185 = vpop.permute.xlu0 %4184
      %4188 = vset.pattern.permute.xlu0 0
      %4189 = vperm.xlu0 %4188, %v3751
      %v4190 = vpop.permute.xlu0 %4189
      %4193 = vset.pattern.permute.xlu0 0
      %4194 = vperm.xlu0 %4193, %v3752
      %v4195 = vpop.permute.xlu0 %4194
      %4198 = vset.pattern.permute.xlu0 0
      %4199 = vperm.xlu0 %4198, %v3753
      %v4200 = vpop.permute.xlu0 %4199
      %4203 = vset.pattern.permute.xlu0 0
      %4204 = vperm.xlu0 %4203, %v3754
      %v4205 = vpop.permute.xlu0 %4204
      %4208 = vset.pattern.permute.xlu0 0
      %4209 = vperm.xlu0 %4208, %v3755
      %v4210 = vpop.permute.xlu0 %4209
      %4213 = vset.pattern.permute.xlu0 0
      %4214 = vperm.xlu0 %4213, %v3756
      %v4215 = vpop.permute.xlu0 %4214
      %4218 = vset.pattern.permute.xlu0 0
      %4219 = vperm.xlu0 %4218, %v3757
      %v4220 = vpop.permute.xlu0 %4219
      %4223 = vset.pattern.permute.xlu0 0
      %4224 = vperm.xlu0 %4223, %v3758
      %v4225 = vpop.permute.xlu0 %4224
      %4228 = vset.pattern.permute.xlu0 0
      %4229 = vperm.xlu0 %4228, %v3759
      %v4230 = vpop.permute.xlu0 %4229
      %4233 = vset.pattern.permute.xlu0 0
      %4234 = vperm.xlu0 %4233, %v3760
      %v4235 = vpop.permute.xlu0 %4234
      %4238 = vset.pattern.permute.xlu0 0
      %4239 = vperm.xlu0 %4238, %v3761
      %v4240 = vpop.permute.xlu0 %4239
      %4243 = vset.pattern.permute.xlu0 0
      %4244 = vperm.xlu0 %4243, %v3762
      %v4245 = vpop.permute.xlu0 %4244
      %4248 = vset.pattern.permute.xlu0 0
      %4249 = vperm.xlu0 %4248, %v3763
      %v4250 = vpop.permute.xlu0 %4249
      %4253 = vset.pattern.permute.xlu0 0
      %4254 = vperm.xlu0 %4253, %v3764
      %v4255 = vpop.permute.xlu0 %4254
      %4258 = vset.pattern.permute.xlu0 0
      %4259 = vperm.xlu0 %4258, %v3765
      %v4260 = vpop.permute.xlu0 %4259
      %4263 = vset.pattern.permute.xlu0 0
      %4264 = vperm.xlu0 %4263, %v3766
      %v4265 = vpop.permute.xlu0 %4264
      %4268 = vset.pattern.permute.xlu0 0
      %4269 = vperm.xlu0 %4268, %v3767
      %v4270 = vpop.permute.xlu0 %4269
      %4273 = vset.pattern.permute.xlu0 0
      %4274 = vperm.xlu0 %4273, %v3768
      %v4275 = vpop.permute.xlu0 %4274
      %4278 = vset.pattern.permute.xlu0 0
      %4279 = vperm.xlu0 %4278, %v3769
      %v4280 = vpop.permute.xlu0 %4279
      %4283 = vset.pattern.permute.xlu0 0
      %4284 = vperm.xlu0 %4283, %v3770
      %v4285 = vpop.permute.xlu0 %4284
      %4288 = vset.pattern.permute.xlu0 0
      %4289 = vperm.xlu0 %4288, %v3771
      %v4290 = vpop.permute.xlu0 %4289
      %4293 = vset.pattern.permute.xlu0 0
      %4294 = vperm.xlu0 %4293, %v3772
      %v4295 = vpop.permute.xlu0 %4294
      %4298 = vset.pattern.permute.xlu0 0
      %4299 = vperm.xlu0 %4298, %v3773
      %v4300 = vpop.permute.xlu0 %4299
      %4303 = vset.pattern.permute.xlu0 0
      %4304 = vperm.xlu0 %4303, %v3774
      %v4305 = vpop.permute.xlu0 %4304
      %4308 = vset.pattern.permute.xlu0 0
      %4309 = vperm.xlu0 %4308, %v3775
      %v4310 = vpop.permute.xlu0 %4309
      %4313 = vset.pattern.permute.xlu0 0
      %4314 = vperm.xlu0 %4313, %v3776
      %v4315 = vpop.permute.xlu0 %4314
      %4318 = vset.pattern.permute.xlu0 0
      %4319 = vperm.xlu0 %4318, %v3777
      %v4320 = vpop.permute.xlu0 %4319
      %4323 = vset.pattern.permute.xlu0 0
      %4324 = vperm.xlu0 %4323, %v3778
      %v4325 = vpop.permute.xlu0 %4324
      %4328 = vset.pattern.permute.xlu0 0
      %4329 = vperm.xlu0 %4328, %v3779
      %v4330 = vpop.permute.xlu0 %4329
      %4333 = vset.pattern.permute.xlu0 0
      %4334 = vperm.xlu0 %4333, %v3780
      %v4335 = vpop.permute.xlu0 %4334
      %4338 = vset.pattern.permute.xlu0 0
      %4339 = vperm.xlu0 %4338, %v3781
      %v4340 = vpop.permute.xlu0 %4339
      %4343 = vset.pattern.permute.xlu0 0
      %4344 = vperm.xlu0 %4343, %v3782
      %v4345 = vpop.permute.xlu0 %4344
      %4348 = vset.pattern.permute.xlu0 0
      %4349 = vperm.xlu0 %4348, %v3783
      %v4350 = vpop.permute.xlu0 %4349
      %4353 = vset.pattern.permute.xlu0 0
      %4354 = vperm.xlu0 %4353, %v3784
      %v4355 = vpop.permute.xlu0 %4354
      %4358 = vset.pattern.permute.xlu0 0
      %4359 = vperm.xlu0 %4358, %v3785
      %v4360 = vpop.permute.xlu0 %4359
      %4363 = vset.pattern.permute.xlu0 0
      %4364 = vperm.xlu0 %4363, %v3786
      %v4365 = vpop.permute.xlu0 %4364
      %4368 = vset.pattern.permute.xlu0 0
      %4369 = vperm.xlu0 %4368, %v3787
      %v4370 = vpop.permute.xlu0 %4369
      %4373 = vset.pattern.permute.xlu0 0
      %4374 = vperm.xlu0 %4373, %v3788
      %v4375 = vpop.permute.xlu0 %4374
      %4378 = vset.pattern.permute.xlu0 0
      %4379 = vperm.xlu0 %4378, %v3789
      %v4380 = vpop.permute.xlu0 %4379
      %4383 = vset.pattern.permute.xlu0 0
      %4384 = vperm.xlu0 %4383, %v3790
      %v4385 = vpop.permute.xlu0 %4384
      %4388 = vset.pattern.permute.xlu0 0
      %4389 = vperm.xlu0 %4388, %v3791
      %v4390 = vpop.permute.xlu0 %4389
      %4393 = vset.pattern.permute.xlu0 0
      %4394 = vperm.xlu0 %4393, %v3792
      %v4395 = vpop.permute.xlu0 %4394
      %4398 = vset.pattern.permute.xlu0 0
      %4399 = vperm.xlu0 %4398, %v3793
      %v4400 = vpop.permute.xlu0 %4399
      %4403 = vset.pattern.permute.xlu0 0
      %4404 = vperm.xlu0 %4403, %v3794
      %v4405 = vpop.permute.xlu0 %4404
      %4408 = vset.pattern.permute.xlu0 0
      %4409 = vperm.xlu0 %4408, %v3795
      %v4410 = vpop.permute.xlu0 %4409
      %4413 = vset.pattern.permute.xlu0 0
      %4414 = vperm.xlu0 %4413, %v3796
      %v4415 = vpop.permute.xlu0 %4414
      %4418 = vset.pattern.permute.xlu0 0
      %4419 = vperm.xlu0 %4418, %v3797
      %v4420 = vpop.permute.xlu0 %4419
      %4423 = vset.pattern.permute.xlu0 0
      %4424 = vperm.xlu0 %4423, %v3798
      %v4425 = vpop.permute.xlu0 %4424
      %4428 = vset.pattern.permute.xlu0 0
      %4429 = vperm.xlu0 %4428, %v3799
      %v4430 = vpop.permute.xlu0 %4429
      %4433 = vset.pattern.permute.xlu0 0
      %4434 = vperm.xlu0 %4433, %v3800
      %v4435 = vpop.permute.xlu0 %4434
      %4438 = vset.pattern.permute.xlu0 0
      %4439 = vperm.xlu0 %4438, %v3801
      %v4440 = vpop.permute.xlu0 %4439
      %v4442 = vmul.f32 %v968, %v3805
      %v4443 = vmul.f32 %v971, %v3810
      %v4444 = vmul.f32 %v974, %v3815
      %v4445 = vmul.f32 %v977, %v3820
      %v4446 = vmul.f32 %v997, %v3825
      %v4447 = vmul.f32 %v1000, %v3830
      %v4448 = vmul.f32 %v1003, %v3835
      %v4449 = vmul.f32 %v1006, %v3840
      %v4450 = vmul.f32 %v1026, %v3845
      %v4451 = vmul.f32 %v1029, %v3850
      %v4452 = vmul.f32 %v1032, %v3855
      %v4453 = vmul.f32 %v1035, %v3860
      %v4454 = vmul.f32 %v1055, %v3865
      %v4455 = vmul.f32 %v1058, %v3870
      %v4456 = vmul.f32 %v1061, %v3875
      %v4457 = vmul.f32 %v1064, %v3880
      %v4458 = vmul.f32 %v1084, %v3885
      %v4459 = vmul.f32 %v1087, %v3890
      %v4460 = vmul.f32 %v1090, %v3895
      %v4461 = vmul.f32 %v1093, %v3900
      %v4462 = vmul.f32 %v1113, %v3905
      %v4463 = vmul.f32 %v1116, %v3910
      %v4464 = vmul.f32 %v1119, %v3915
      %v4465 = vmul.f32 %v1122, %v3920
      %v4466 = vmul.f32 %v1142, %v3925
      %v4467 = vmul.f32 %v1145, %v3930
      %v4468 = vmul.f32 %v1148, %v3935
      %v4469 = vmul.f32 %v1151, %v3940
      %v4470 = vmul.f32 %v1171, %v3945
      %v4471 = vmul.f32 %v1174, %v3950
      %v4472 = vmul.f32 %v1177, %v3955
      %v4473 = vmul.f32 %v1180, %v3960
      %v4474 = vmul.f32 %v1200, %v3965
      %v4475 = vmul.f32 %v1203, %v3970
      %v4476 = vmul.f32 %v1206, %v3975
      %v4477 = vmul.f32 %v1209, %v3980
      %v4478 = vmul.f32 %v1229, %v3985
      %v4479 = vmul.f32 %v1232, %v3990
      %v4480 = vmul.f32 %v1235, %v3995
      %v4481 = vmul.f32 %v1238, %v4000
      %v4482 = vmul.f32 %v1258, %v4005
      %v4483 = vmul.f32 %v1261, %v4010
      %v4484 = vmul.f32 %v1264, %v4015
      %v4485 = vmul.f32 %v1267, %v4020
      %v4486 = vmul.f32 %v1287, %v4025
      %v4487 = vmul.f32 %v1290, %v4030
      %v4488 = vmul.f32 %v1293, %v4035
      %v4489 = vmul.f32 %v1296, %v4040
      %v4490 = vmul.f32 %v1316, %v4045
      %v4491 = vmul.f32 %v1319, %v4050
      %v4492 = vmul.f32 %v1322, %v4055
      %v4493 = vmul.f32 %v1325, %v4060
      %v4494 = vmul.f32 %v1345, %v4065
      %v4495 = vmul.f32 %v1348, %v4070
      %v4496 = vmul.f32 %v1351, %v4075
      %v4497 = vmul.f32 %v1354, %v4080
      %v4498 = vmul.f32 %v1374, %v4085
      %v4499 = vmul.f32 %v1377, %v4090
      %v4500 = vmul.f32 %v1380, %v4095
      %v4501 = vmul.f32 %v1383, %v4100
      %v4502 = vmul.f32 %v1403, %v4105
      %v4503 = vmul.f32 %v1406, %v4110
      %v4504 = vmul.f32 %v1409, %v4115
      %v4505 = vmul.f32 %v1412, %v4120
      %v4506 = vmul.f32 %v1432, %v4125
      %v4507 = vmul.f32 %v1435, %v4130
      %v4508 = vmul.f32 %v1438, %v4135
      %v4509 = vmul.f32 %v1441, %v4140
      %v4510 = vmul.f32 %v1461, %v4145
      %v4511 = vmul.f32 %v1464, %v4150
      %v4512 = vmul.f32 %v1467, %v4155
      %v4513 = vmul.f32 %v1470, %v4160
      %v4514 = vmul.f32 %v1490, %v4165
      %v4515 = vmul.f32 %v1493, %v4170
      %v4516 = vmul.f32 %v1496, %v4175
      %v4517 = vmul.f32 %v1499, %v4180
      %v4518 = vmul.f32 %v1519, %v4185
      %v4519 = vmul.f32 %v1522, %v4190
      %v4520 = vmul.f32 %v1525, %v4195
      %v4521 = vmul.f32 %v1528, %v4200
      %v4522 = vmul.f32 %v1548, %v4205
      %v4523 = vmul.f32 %v1551, %v4210
      %v4524 = vmul.f32 %v1554, %v4215
      %v4525 = vmul.f32 %v1557, %v4220
      %v4526 = vmul.f32 %v1577, %v4225
      %v4527 = vmul.f32 %v1580, %v4230
      %v4528 = vmul.f32 %v1583, %v4235
      %v4529 = vmul.f32 %v1586, %v4240
      %v4530 = vmul.f32 %v1606, %v4245
      %v4531 = vmul.f32 %v1609, %v4250
      %v4532 = vmul.f32 %v1612, %v4255
      %v4533 = vmul.f32 %v1615, %v4260
      %v4534 = vmul.f32 %v1635, %v4265
      %v4535 = vmul.f32 %v1638, %v4270
      %v4536 = vmul.f32 %v1641, %v4275
      %v4537 = vmul.f32 %v1644, %v4280
      %v4538 = vmul.f32 %v1664, %v4285
      %v4539 = vmul.f32 %v1667, %v4290
      %v4540 = vmul.f32 %v1670, %v4295
      %v4541 = vmul.f32 %v1673, %v4300
      %v4542 = vmul.f32 %v1693, %v4305
      %v4543 = vmul.f32 %v1696, %v4310
      %v4544 = vmul.f32 %v1699, %v4315
      %v4545 = vmul.f32 %v1702, %v4320
      %v4546 = vmul.f32 %v1722, %v4325
      %v4547 = vmul.f32 %v1725, %v4330
      %v4548 = vmul.f32 %v1728, %v4335
      %v4549 = vmul.f32 %v1731, %v4340
      %v4550 = vmul.f32 %v1751, %v4345
      %v4551 = vmul.f32 %v1754, %v4350
      %v4552 = vmul.f32 %v1757, %v4355
      %v4553 = vmul.f32 %v1760, %v4360
      %v4554 = vmul.f32 %v1780, %v4365
      %v4555 = vmul.f32 %v1783, %v4370
      %v4556 = vmul.f32 %v1786, %v4375
      %v4557 = vmul.f32 %v1789, %v4380
      %v4558 = vmul.f32 %v1809, %v4385
      %v4559 = vmul.f32 %v1812, %v4390
      %v4560 = vmul.f32 %v1815, %v4395
      %v4561 = vmul.f32 %v1818, %v4400
      %v4562 = vmul.f32 %v1838, %v4405
      %v4563 = vmul.f32 %v1841, %v4410
      %v4564 = vmul.f32 %v1844, %v4415
      %v4565 = vmul.f32 %v1847, %v4420
      %v4566 = vmul.f32 %v1867, %v4425
      %v4567 = vmul.f32 %v1870, %v4430
      %v4568 = vmul.f32 %v1873, %v4435
      %v4569 = vmul.f32 %v1876, %v4440
      %v4570 = vmul.f32 %v4442, %v4442
      %v4571 = vmul.f32 %v4443, %v4443
      %v4572 = vmul.f32 %v4444, %v4444
      %v4573 = vmul.f32 %v4445, %v4445
      %v4574 = vmul.f32 %v4446, %v4446
      %v4575 = vmul.f32 %v4447, %v4447
      %v4576 = vmul.f32 %v4448, %v4448
      %v4577 = vmul.f32 %v4449, %v4449
      %v4578 = vmul.f32 %v4450, %v4450
      %v4579 = vmul.f32 %v4451, %v4451
      %v4580 = vmul.f32 %v4452, %v4452
      %v4581 = vmul.f32 %v4453, %v4453
      %v4582 = vmul.f32 %v4454, %v4454
      %v4583 = vmul.f32 %v4455, %v4455
      %v4584 = vmul.f32 %v4456, %v4456
      %v4585 = vmul.f32 %v4457, %v4457
      %v4586 = vmul.f32 %v4458, %v4458
      %v4587 = vmul.f32 %v4459, %v4459
      %v4588 = vmul.f32 %v4460, %v4460
      %v4589 = vmul.f32 %v4461, %v4461
      %v4590 = vmul.f32 %v4462, %v4462
      %v4591 = vmul.f32 %v4463, %v4463
      %v4592 = vmul.f32 %v4464, %v4464
      %v4593 = vmul.f32 %v4465, %v4465
      %v4594 = vmul.f32 %v4466, %v4466
      %v4595 = vmul.f32 %v4467, %v4467
      %v4596 = vmul.f32 %v4468, %v4468
      %v4597 = vmul.f32 %v4469, %v4469
      %v4598 = vmul.f32 %v4470, %v4470
      %v4599 = vmul.f32 %v4471, %v4471
      %v4600 = vmul.f32 %v4472, %v4472
      %v4601 = vmul.f32 %v4473, %v4473
      %v4602 = vmul.f32 %v4474, %v4474
      %v4603 = vmul.f32 %v4475, %v4475
      %v4604 = vmul.f32 %v4476, %v4476
      %v4605 = vmul.f32 %v4477, %v4477
      %v4606 = vmul.f32 %v4478, %v4478
      %v4607 = vmul.f32 %v4479, %v4479
      %v4608 = vmul.f32 %v4480, %v4480
      %v4609 = vmul.f32 %v4481, %v4481
      %v4610 = vmul.f32 %v4482, %v4482
      %v4611 = vmul.f32 %v4483, %v4483
      %v4612 = vmul.f32 %v4484, %v4484
      %v4613 = vmul.f32 %v4485, %v4485
      %v4614 = vmul.f32 %v4486, %v4486
      %v4615 = vmul.f32 %v4487, %v4487
      %v4616 = vmul.f32 %v4488, %v4488
      %v4617 = vmul.f32 %v4489, %v4489
      %v4618 = vmul.f32 %v4490, %v4490
      %v4619 = vmul.f32 %v4491, %v4491
      %v4620 = vmul.f32 %v4492, %v4492
      %v4621 = vmul.f32 %v4493, %v4493
      %v4622 = vmul.f32 %v4494, %v4494
      %v4623 = vmul.f32 %v4495, %v4495
      %v4624 = vmul.f32 %v4496, %v4496
      %v4625 = vmul.f32 %v4497, %v4497
      %v4626 = vmul.f32 %v4498, %v4498
      %v4627 = vmul.f32 %v4499, %v4499
      %v4628 = vmul.f32 %v4500, %v4500
      %v4629 = vmul.f32 %v4501, %v4501
      %v4630 = vmul.f32 %v4502, %v4502
      %v4631 = vmul.f32 %v4503, %v4503
      %v4632 = vmul.f32 %v4504, %v4504
      %v4633 = vmul.f32 %v4505, %v4505
      %v4634 = vmul.f32 %v4506, %v4506
      %v4635 = vmul.f32 %v4507, %v4507
      %v4636 = vmul.f32 %v4508, %v4508
      %v4637 = vmul.f32 %v4509, %v4509
      %v4638 = vmul.f32 %v4510, %v4510
      %v4639 = vmul.f32 %v4511, %v4511
      %v4640 = vmul.f32 %v4512, %v4512
      %v4641 = vmul.f32 %v4513, %v4513
      %v4642 = vmul.f32 %v4514, %v4514
      %v4643 = vmul.f32 %v4515, %v4515
      %v4644 = vmul.f32 %v4516, %v4516
      %v4645 = vmul.f32 %v4517, %v4517
      %v4646 = vmul.f32 %v4518, %v4518
      %v4647 = vmul.f32 %v4519, %v4519
      %v4648 = vmul.f32 %v4520, %v4520
      %v4649 = vmul.f32 %v4521, %v4521
      %v4650 = vmul.f32 %v4522, %v4522
      %v4651 = vmul.f32 %v4523, %v4523
      %v4652 = vmul.f32 %v4524, %v4524
      %v4653 = vmul.f32 %v4525, %v4525
      %v4654 = vmul.f32 %v4526, %v4526
      %v4655 = vmul.f32 %v4527, %v4527
      %v4656 = vmul.f32 %v4528, %v4528
      %v4657 = vmul.f32 %v4529, %v4529
      %v4658 = vmul.f32 %v4530, %v4530
      %v4659 = vmul.f32 %v4531, %v4531
      %v4660 = vmul.f32 %v4532, %v4532
      %v4661 = vmul.f32 %v4533, %v4533
      %v4662 = vmul.f32 %v4534, %v4534
      %v4663 = vmul.f32 %v4535, %v4535
      %v4664 = vmul.f32 %v4536, %v4536
      %v4665 = vmul.f32 %v4537, %v4537
      %v4666 = vmul.f32 %v4538, %v4538
      %v4667 = vmul.f32 %v4539, %v4539
      %v4668 = vmul.f32 %v4540, %v4540
      %v4669 = vmul.f32 %v4541, %v4541
      %v4670 = vmul.f32 %v4542, %v4542
      %v4671 = vmul.f32 %v4543, %v4543
      %v4672 = vmul.f32 %v4544, %v4544
      %v4673 = vmul.f32 %v4545, %v4545
      %v4674 = vmul.f32 %v4546, %v4546
      %v4675 = vmul.f32 %v4547, %v4547
      %v4676 = vmul.f32 %v4548, %v4548
      %v4677 = vmul.f32 %v4549, %v4549
      %v4678 = vmul.f32 %v4550, %v4550
      %v4679 = vmul.f32 %v4551, %v4551
      %v4680 = vmul.f32 %v4552, %v4552
      %v4681 = vmul.f32 %v4553, %v4553
      %v4682 = vmul.f32 %v4554, %v4554
      %v4683 = vmul.f32 %v4555, %v4555
      %v4684 = vmul.f32 %v4556, %v4556
      %v4685 = vmul.f32 %v4557, %v4557
      %v4686 = vmul.f32 %v4558, %v4558
      %v4687 = vmul.f32 %v4559, %v4559
      %v4688 = vmul.f32 %v4560, %v4560
      %v4689 = vmul.f32 %v4561, %v4561
      %v4690 = vmul.f32 %v4562, %v4562
      %v4691 = vmul.f32 %v4563, %v4563
      %v4692 = vmul.f32 %v4564, %v4564
      %v4693 = vmul.f32 %v4565, %v4565
      %v4694 = vmul.f32 %v4566, %v4566
      %v4695 = vmul.f32 %v4567, %v4567
      %v4696 = vmul.f32 %v4568, %v4568
      %v4697 = vmul.f32 %v4569, %v4569
      %v4698 = vmul.f32 %v4442, %v4570
      %v4699 = vmul.f32 %v4443, %v4571
      %v4700 = vmul.f32 %v4444, %v4572
      %v4701 = vmul.f32 %v4445, %v4573
      %v4702 = vmul.f32 %v4446, %v4574
      %v4703 = vmul.f32 %v4447, %v4575
      %v4704 = vmul.f32 %v4448, %v4576
      %v4705 = vmul.f32 %v4449, %v4577
      %v4706 = vmul.f32 %v4450, %v4578
      %v4707 = vmul.f32 %v4451, %v4579
      %v4708 = vmul.f32 %v4452, %v4580
      %v4709 = vmul.f32 %v4453, %v4581
      %v4710 = vmul.f32 %v4454, %v4582
      %v4711 = vmul.f32 %v4455, %v4583
      %v4712 = vmul.f32 %v4456, %v4584
      %v4713 = vmul.f32 %v4457, %v4585
      %v4714 = vmul.f32 %v4458, %v4586
      %v4715 = vmul.f32 %v4459, %v4587
      %v4716 = vmul.f32 %v4460, %v4588
      %v4717 = vmul.f32 %v4461, %v4589
      %v4718 = vmul.f32 %v4462, %v4590
      %v4719 = vmul.f32 %v4463, %v4591
      %v4720 = vmul.f32 %v4464, %v4592
      %v4721 = vmul.f32 %v4465, %v4593
      %v4722 = vmul.f32 %v4466, %v4594
      %v4723 = vmul.f32 %v4467, %v4595
      %v4724 = vmul.f32 %v4468, %v4596
      %v4725 = vmul.f32 %v4469, %v4597
      %v4726 = vmul.f32 %v4470, %v4598
      %v4727 = vmul.f32 %v4471, %v4599
      %v4728 = vmul.f32 %v4472, %v4600
      %v4729 = vmul.f32 %v4473, %v4601
      %v4730 = vmul.f32 %v4474, %v4602
      %v4731 = vmul.f32 %v4475, %v4603
      %v4732 = vmul.f32 %v4476, %v4604
      %v4733 = vmul.f32 %v4477, %v4605
      %v4734 = vmul.f32 %v4478, %v4606
      %v4735 = vmul.f32 %v4479, %v4607
      %v4736 = vmul.f32 %v4480, %v4608
      %v4737 = vmul.f32 %v4481, %v4609
      %v4738 = vmul.f32 %v4482, %v4610
      %v4739 = vmul.f32 %v4483, %v4611
      %v4740 = vmul.f32 %v4484, %v4612
      %v4741 = vmul.f32 %v4485, %v4613
      %v4742 = vmul.f32 %v4486, %v4614
      %v4743 = vmul.f32 %v4487, %v4615
      %v4744 = vmul.f32 %v4488, %v4616
      %v4745 = vmul.f32 %v4489, %v4617
      %v4746 = vmul.f32 %v4490, %v4618
      %v4747 = vmul.f32 %v4491, %v4619
      %v4748 = vmul.f32 %v4492, %v4620
      %v4749 = vmul.f32 %v4493, %v4621
      %v4750 = vmul.f32 %v4494, %v4622
      %v4751 = vmul.f32 %v4495, %v4623
      %v4752 = vmul.f32 %v4496, %v4624
      %v4753 = vmul.f32 %v4497, %v4625
      %v4754 = vmul.f32 %v4498, %v4626
      %v4755 = vmul.f32 %v4499, %v4627
      %v4756 = vmul.f32 %v4500, %v4628
      %v4757 = vmul.f32 %v4501, %v4629
      %v4758 = vmul.f32 %v4502, %v4630
      %v4759 = vmul.f32 %v4503, %v4631
      %v4760 = vmul.f32 %v4504, %v4632
      %v4761 = vmul.f32 %v4505, %v4633
      %v4762 = vmul.f32 %v4506, %v4634
      %v4763 = vmul.f32 %v4507, %v4635
      %v4764 = vmul.f32 %v4508, %v4636
      %v4765 = vmul.f32 %v4509, %v4637
      %v4766 = vmul.f32 %v4510, %v4638
      %v4767 = vmul.f32 %v4511, %v4639
      %v4768 = vmul.f32 %v4512, %v4640
      %v4769 = vmul.f32 %v4513, %v4641
      %v4770 = vmul.f32 %v4514, %v4642
      %v4771 = vmul.f32 %v4515, %v4643
      %v4772 = vmul.f32 %v4516, %v4644
      %v4773 = vmul.f32 %v4517, %v4645
      %v4774 = vmul.f32 %v4518, %v4646
      %v4775 = vmul.f32 %v4519, %v4647
      %v4776 = vmul.f32 %v4520, %v4648
      %v4777 = vmul.f32 %v4521, %v4649
      %v4778 = vmul.f32 %v4522, %v4650
      %v4779 = vmul.f32 %v4523, %v4651
      %v4780 = vmul.f32 %v4524, %v4652
      %v4781 = vmul.f32 %v4525, %v4653
      %v4782 = vmul.f32 %v4526, %v4654
      %v4783 = vmul.f32 %v4527, %v4655
      %v4784 = vmul.f32 %v4528, %v4656
      %v4785 = vmul.f32 %v4529, %v4657
      %v4786 = vmul.f32 %v4530, %v4658
      %v4787 = vmul.f32 %v4531, %v4659
      %v4788 = vmul.f32 %v4532, %v4660
      %v4789 = vmul.f32 %v4533, %v4661
      %v4790 = vmul.f32 %v4534, %v4662
      %v4791 = vmul.f32 %v4535, %v4663
      %v4792 = vmul.f32 %v4536, %v4664
      %v4793 = vmul.f32 %v4537, %v4665
      %v4794 = vmul.f32 %v4538, %v4666
      %v4795 = vmul.f32 %v4539, %v4667
      %v4796 = vmul.f32 %v4540, %v4668
      %v4797 = vmul.f32 %v4541, %v4669
      %v4798 = vmul.f32 %v4542, %v4670
      %v4799 = vmul.f32 %v4543, %v4671
      %v4800 = vmul.f32 %v4544, %v4672
      %v4801 = vmul.f32 %v4545, %v4673
      %v4802 = vmul.f32 %v4546, %v4674
      %v4803 = vmul.f32 %v4547, %v4675
      %v4804 = vmul.f32 %v4548, %v4676
      %v4805 = vmul.f32 %v4549, %v4677
      %v4806 = vmul.f32 %v4550, %v4678
      %v4807 = vmul.f32 %v4551, %v4679
      %v4808 = vmul.f32 %v4552, %v4680
      %v4809 = vmul.f32 %v4553, %v4681
      %v4810 = vmul.f32 %v4554, %v4682
      %v4811 = vmul.f32 %v4555, %v4683
      %v4812 = vmul.f32 %v4556, %v4684
      %v4813 = vmul.f32 %v4557, %v4685
      %v4814 = vmul.f32 %v4558, %v4686
      %v4815 = vmul.f32 %v4559, %v4687
      %v4816 = vmul.f32 %v4560, %v4688
      %v4817 = vmul.f32 %v4561, %v4689
      %v4818 = vmul.f32 %v4562, %v4690
      %v4819 = vmul.f32 %v4563, %v4691
      %v4820 = vmul.f32 %v4564, %v4692
      %v4821 = vmul.f32 %v4565, %v4693
      %v4822 = vmul.f32 %v4566, %v4694
      %v4823 = vmul.f32 %v4567, %v4695
      %v4824 = vmul.f32 %v4568, %v4696
      %v4825 = vmul.f32 %v4569, %v4697
      %v4826 = vmul.f32 %v4698, 0.044715
      %v4827 = vmul.f32 %v4699, 0.044715
      %v4828 = vmul.f32 %v4700, 0.044715
      %v4829 = vmul.f32 %v4701, 0.044715
      %v4830 = vmul.f32 %v4702, 0.044715
      %v4831 = vmul.f32 %v4703, 0.044715
      %v4832 = vmul.f32 %v4704, 0.044715
      %v4833 = vmul.f32 %v4705, 0.044715
      %v4834 = vmul.f32 %v4706, 0.044715
      %v4835 = vmul.f32 %v4707, 0.044715
      %v4836 = vmul.f32 %v4708, 0.044715
      %v4837 = vmul.f32 %v4709, 0.044715
      %v4838 = vmul.f32 %v4710, 0.044715
      %v4839 = vmul.f32 %v4711, 0.044715
      %v4840 = vmul.f32 %v4712, 0.044715
      %v4841 = vmul.f32 %v4713, 0.044715
      %v4842 = vmul.f32 %v4714, 0.044715
      %v4843 = vmul.f32 %v4715, 0.044715
      %v4844 = vmul.f32 %v4716, 0.044715
      %v4845 = vmul.f32 %v4717, 0.044715
      %v4846 = vmul.f32 %v4718, 0.044715
      %v4847 = vmul.f32 %v4719, 0.044715
      %v4848 = vmul.f32 %v4720, 0.044715
      %v4849 = vmul.f32 %v4721, 0.044715
      %v4850 = vmul.f32 %v4722, 0.044715
      %v4851 = vmul.f32 %v4723, 0.044715
      %v4852 = vmul.f32 %v4724, 0.044715
      %v4853 = vmul.f32 %v4725, 0.044715
      %v4854 = vmul.f32 %v4726, 0.044715
      %v4855 = vmul.f32 %v4727, 0.044715
      %v4856 = vmul.f32 %v4728, 0.044715
      %v4857 = vmul.f32 %v4729, 0.044715
      %v4858 = vmul.f32 %v4730, 0.044715
      %v4859 = vmul.f32 %v4731, 0.044715
      %v4860 = vmul.f32 %v4732, 0.044715
      %v4861 = vmul.f32 %v4733, 0.044715
      %v4862 = vmul.f32 %v4734, 0.044715
      %v4863 = vmul.f32 %v4735, 0.044715
      %v4864 = vmul.f32 %v4736, 0.044715
      %v4865 = vmul.f32 %v4737, 0.044715
      %v4866 = vmul.f32 %v4738, 0.044715
      %v4867 = vmul.f32 %v4739, 0.044715
      %v4868 = vmul.f32 %v4740, 0.044715
      %v4869 = vmul.f32 %v4741, 0.044715
      %v4870 = vmul.f32 %v4742, 0.044715
      %v4871 = vmul.f32 %v4743, 0.044715
      %v4872 = vmul.f32 %v4744, 0.044715
      %v4873 = vmul.f32 %v4745, 0.044715
      %v4874 = vmul.f32 %v4746, 0.044715
      %v4875 = vmul.f32 %v4747, 0.044715
      %v4876 = vmul.f32 %v4748, 0.044715
      %v4877 = vmul.f32 %v4749, 0.044715
      %v4878 = vmul.f32 %v4750, 0.044715
      %v4879 = vmul.f32 %v4751, 0.044715
      %v4880 = vmul.f32 %v4752, 0.044715
      %v4881 = vmul.f32 %v4753, 0.044715
      %v4882 = vmul.f32 %v4754, 0.044715
      %v4883 = vmul.f32 %v4755, 0.044715
      %v4884 = vmul.f32 %v4756, 0.044715
      %v4885 = vmul.f32 %v4757, 0.044715
      %v4886 = vmul.f32 %v4758, 0.044715
      %v4887 = vmul.f32 %v4759, 0.044715
      %v4888 = vmul.f32 %v4760, 0.044715
      %v4889 = vmul.f32 %v4761, 0.044715
      %v4890 = vmul.f32 %v4762, 0.044715
      %v4891 = vmul.f32 %v4763, 0.044715
      %v4892 = vmul.f32 %v4764, 0.044715
      %v4893 = vmul.f32 %v4765, 0.044715
      %v4894 = vmul.f32 %v4766, 0.044715
      %v4895 = vmul.f32 %v4767, 0.044715
      %v4896 = vmul.f32 %v4768, 0.044715
      %v4897 = vmul.f32 %v4769, 0.044715
      %v4898 = vmul.f32 %v4770, 0.044715
      %v4899 = vmul.f32 %v4771, 0.044715
      %v4900 = vmul.f32 %v4772, 0.044715
      %v4901 = vmul.f32 %v4773, 0.044715
      %v4902 = vmul.f32 %v4774, 0.044715
      %v4903 = vmul.f32 %v4775, 0.044715
      %v4904 = vmul.f32 %v4776, 0.044715
      %v4905 = vmul.f32 %v4777, 0.044715
      %v4906 = vmul.f32 %v4778, 0.044715
      %v4907 = vmul.f32 %v4779, 0.044715
      %v4908 = vmul.f32 %v4780, 0.044715
      %v4909 = vmul.f32 %v4781, 0.044715
      %v4910 = vmul.f32 %v4782, 0.044715
      %v4911 = vmul.f32 %v4783, 0.044715
      %v4912 = vmul.f32 %v4784, 0.044715
      %v4913 = vmul.f32 %v4785, 0.044715
      %v4914 = vmul.f32 %v4786, 0.044715
      %v4915 = vmul.f32 %v4787, 0.044715
      %v4916 = vmul.f32 %v4788, 0.044715
      %v4917 = vmul.f32 %v4789, 0.044715
      %v4918 = vmul.f32 %v4790, 0.044715
      %v4919 = vmul.f32 %v4791, 0.044715
      %v4920 = vmul.f32 %v4792, 0.044715
      %v4921 = vmul.f32 %v4793, 0.044715
      %v4922 = vmul.f32 %v4794, 0.044715
      %v4923 = vmul.f32 %v4795, 0.044715
      %v4924 = vmul.f32 %v4796, 0.044715
      %v4925 = vmul.f32 %v4797, 0.044715
      %v4926 = vmul.f32 %v4798, 0.044715
      %v4927 = vmul.f32 %v4799, 0.044715
      %v4928 = vmul.f32 %v4800, 0.044715
      %v4929 = vmul.f32 %v4801, 0.044715
      %v4930 = vmul.f32 %v4802, 0.044715
      %v4931 = vmul.f32 %v4803, 0.044715
      %v4932 = vmul.f32 %v4804, 0.044715
      %v4933 = vmul.f32 %v4805, 0.044715
      %v4934 = vmul.f32 %v4806, 0.044715
      %v4935 = vmul.f32 %v4807, 0.044715
      %v4936 = vmul.f32 %v4808, 0.044715
      %v4937 = vmul.f32 %v4809, 0.044715
      %v4938 = vmul.f32 %v4810, 0.044715
      %v4939 = vmul.f32 %v4811, 0.044715
      %v4940 = vmul.f32 %v4812, 0.044715
      %v4941 = vmul.f32 %v4813, 0.044715
      %v4942 = vmul.f32 %v4814, 0.044715
      %v4943 = vmul.f32 %v4815, 0.044715
      %v4944 = vmul.f32 %v4816, 0.044715
      %v4945 = vmul.f32 %v4817, 0.044715
      %v4946 = vmul.f32 %v4818, 0.044715
      %v4947 = vmul.f32 %v4819, 0.044715
      %v4948 = vmul.f32 %v4820, 0.044715
      %v4949 = vmul.f32 %v4821, 0.044715
      %v4950 = vmul.f32 %v4822, 0.044715
      %v4951 = vmul.f32 %v4823, 0.044715
      %v4952 = vmul.f32 %v4824, 0.044715
      %v4953 = vmul.f32 %v4825, 0.044715
      %v4954 = vadd.f32 %v4442, %v4826
      %v4955 = vadd.f32 %v4443, %v4827
      %v4956 = vadd.f32 %v4444, %v4828
      %v4957 = vadd.f32 %v4445, %v4829
      %v4958 = vadd.f32 %v4446, %v4830
      %v4959 = vadd.f32 %v4447, %v4831
      %v4960 = vadd.f32 %v4448, %v4832
      %v4961 = vadd.f32 %v4449, %v4833
      %v4962 = vadd.f32 %v4450, %v4834
      %v4963 = vadd.f32 %v4451, %v4835
      %v4964 = vadd.f32 %v4452, %v4836
      %v4965 = vadd.f32 %v4453, %v4837
      %v4966 = vadd.f32 %v4454, %v4838
      %v4967 = vadd.f32 %v4455, %v4839
      %v4968 = vadd.f32 %v4456, %v4840
      %v4969 = vadd.f32 %v4457, %v4841
      %v4970 = vadd.f32 %v4458, %v4842
      %v4971 = vadd.f32 %v4459, %v4843
      %v4972 = vadd.f32 %v4460, %v4844
      %v4973 = vadd.f32 %v4461, %v4845
      %v4974 = vadd.f32 %v4462, %v4846
      %v4975 = vadd.f32 %v4463, %v4847
      %v4976 = vadd.f32 %v4464, %v4848
      %v4977 = vadd.f32 %v4465, %v4849
      %v4978 = vadd.f32 %v4466, %v4850
      %v4979 = vadd.f32 %v4467, %v4851
      %v4980 = vadd.f32 %v4468, %v4852
      %v4981 = vadd.f32 %v4469, %v4853
      %v4982 = vadd.f32 %v4470, %v4854
      %v4983 = vadd.f32 %v4471, %v4855
      %v4984 = vadd.f32 %v4472, %v4856
      %v4985 = vadd.f32 %v4473, %v4857
      %v4986 = vadd.f32 %v4474, %v4858
      %v4987 = vadd.f32 %v4475, %v4859
      %v4988 = vadd.f32 %v4476, %v4860
      %v4989 = vadd.f32 %v4477, %v4861
      %v4990 = vadd.f32 %v4478, %v4862
      %v4991 = vadd.f32 %v4479, %v4863
      %v4992 = vadd.f32 %v4480, %v4864
      %v4993 = vadd.f32 %v4481, %v4865
      %v4994 = vadd.f32 %v4482, %v4866
      %v4995 = vadd.f32 %v4483, %v4867
      %v4996 = vadd.f32 %v4484, %v4868
      %v4997 = vadd.f32 %v4485, %v4869
      %v4998 = vadd.f32 %v4486, %v4870
      %v4999 = vadd.f32 %v4487, %v4871
      %v5000 = vadd.f32 %v4488, %v4872
      %v5001 = vadd.f32 %v4489, %v4873
      %v5002 = vadd.f32 %v4490, %v4874
      %v5003 = vadd.f32 %v4491, %v4875
      %v5004 = vadd.f32 %v4492, %v4876
      %v5005 = vadd.f32 %v4493, %v4877
      %v5006 = vadd.f32 %v4494, %v4878
      %v5007 = vadd.f32 %v4495, %v4879
      %v5008 = vadd.f32 %v4496, %v4880
      %v5009 = vadd.f32 %v4497, %v4881
      %v5010 = vadd.f32 %v4498, %v4882
      %v5011 = vadd.f32 %v4499, %v4883
      %v5012 = vadd.f32 %v4500, %v4884
      %v5013 = vadd.f32 %v4501, %v4885
      %v5014 = vadd.f32 %v4502, %v4886
      %v5015 = vadd.f32 %v4503, %v4887
      %v5016 = vadd.f32 %v4504, %v4888
      %v5017 = vadd.f32 %v4505, %v4889
      %v5018 = vadd.f32 %v4506, %v4890
      %v5019 = vadd.f32 %v4507, %v4891
      %v5020 = vadd.f32 %v4508, %v4892
      %v5021 = vadd.f32 %v4509, %v4893
      %v5022 = vadd.f32 %v4510, %v4894
      %v5023 = vadd.f32 %v4511, %v4895
      %v5024 = vadd.f32 %v4512, %v4896
      %v5025 = vadd.f32 %v4513, %v4897
      %v5026 = vadd.f32 %v4514, %v4898
      %v5027 = vadd.f32 %v4515, %v4899
      %v5028 = vadd.f32 %v4516, %v4900
      %v5029 = vadd.f32 %v4517, %v4901
      %v5030 = vadd.f32 %v4518, %v4902
      %v5031 = vadd.f32 %v4519, %v4903
      %v5032 = vadd.f32 %v4520, %v4904
      %v5033 = vadd.f32 %v4521, %v4905
      %v5034 = vadd.f32 %v4522, %v4906
      %v5035 = vadd.f32 %v4523, %v4907
      %v5036 = vadd.f32 %v4524, %v4908
      %v5037 = vadd.f32 %v4525, %v4909
      %v5038 = vadd.f32 %v4526, %v4910
      %v5039 = vadd.f32 %v4527, %v4911
      %v5040 = vadd.f32 %v4528, %v4912
      %v5041 = vadd.f32 %v4529, %v4913
      %v5042 = vadd.f32 %v4530, %v4914
      %v5043 = vadd.f32 %v4531, %v4915
      %v5044 = vadd.f32 %v4532, %v4916
      %v5045 = vadd.f32 %v4533, %v4917
      %v5046 = vadd.f32 %v4534, %v4918
      %v5047 = vadd.f32 %v4535, %v4919
      %v5048 = vadd.f32 %v4536, %v4920
      %v5049 = vadd.f32 %v4537, %v4921
      %v5050 = vadd.f32 %v4538, %v4922
      %v5051 = vadd.f32 %v4539, %v4923
      %v5052 = vadd.f32 %v4540, %v4924
      %v5053 = vadd.f32 %v4541, %v4925
      %v5054 = vadd.f32 %v4542, %v4926
      %v5055 = vadd.f32 %v4543, %v4927
      %v5056 = vadd.f32 %v4544, %v4928
      %v5057 = vadd.f32 %v4545, %v4929
      %v5058 = vadd.f32 %v4546, %v4930
      %v5059 = vadd.f32 %v4547, %v4931
      %v5060 = vadd.f32 %v4548, %v4932
      %v5061 = vadd.f32 %v4549, %v4933
      %v5062 = vadd.f32 %v4550, %v4934
      %v5063 = vadd.f32 %v4551, %v4935
      %v5064 = vadd.f32 %v4552, %v4936
      %v5065 = vadd.f32 %v4553, %v4937
      %v5066 = vadd.f32 %v4554, %v4938
      %v5067 = vadd.f32 %v4555, %v4939
      %v5068 = vadd.f32 %v4556, %v4940
      %v5069 = vadd.f32 %v4557, %v4941
      %v5070 = vadd.f32 %v4558, %v4942
      %v5071 = vadd.f32 %v4559, %v4943
      %v5072 = vadd.f32 %v4560, %v4944
      %v5073 = vadd.f32 %v4561, %v4945
      %v5074 = vadd.f32 %v4562, %v4946
      %v5075 = vadd.f32 %v4563, %v4947
      %v5076 = vadd.f32 %v4564, %v4948
      %v5077 = vadd.f32 %v4565, %v4949
      %v5078 = vadd.f32 %v4566, %v4950
      %v5079 = vadd.f32 %v4567, %v4951
      %v5080 = vadd.f32 %v4568, %v4952
      %v5081 = vadd.f32 %v4569, %v4953
      %v5082 = vmul.f32 %v4954, 0.7978846
      %v5083 = vmul.f32 %v4955, 0.7978846
      %v5084 = vmul.f32 %v4956, 0.7978846
      %v5085 = vmul.f32 %v4957, 0.7978846
      %v5086 = vmul.f32 %v4958, 0.7978846
      %v5087 = vmul.f32 %v4959, 0.7978846
      %v5088 = vmul.f32 %v4960, 0.7978846
      %v5089 = vmul.f32 %v4961, 0.7978846
      %v5090 = vmul.f32 %v4962, 0.7978846
      %v5091 = vmul.f32 %v4963, 0.7978846
      %v5092 = vmul.f32 %v4964, 0.7978846
      %v5093 = vmul.f32 %v4965, 0.7978846
      %v5094 = vmul.f32 %v4966, 0.7978846
      %v5095 = vmul.f32 %v4967, 0.7978846
      %v5096 = vmul.f32 %v4968, 0.7978846
      %v5097 = vmul.f32 %v4969, 0.7978846
      %v5098 = vmul.f32 %v4970, 0.7978846
      %v5099 = vmul.f32 %v4971, 0.7978846
      %v5100 = vmul.f32 %v4972, 0.7978846
      %v5101 = vmul.f32 %v4973, 0.7978846
      %v5102 = vmul.f32 %v4974, 0.7978846
      %v5103 = vmul.f32 %v4975, 0.7978846
      %v5104 = vmul.f32 %v4976, 0.7978846
      %v5105 = vmul.f32 %v4977, 0.7978846
      %v5106 = vmul.f32 %v4978, 0.7978846
      %v5107 = vmul.f32 %v4979, 0.7978846
      %v5108 = vmul.f32 %v4980, 0.7978846
      %v5109 = vmul.f32 %v4981, 0.7978846
      %v5110 = vmul.f32 %v4982, 0.7978846
      %v5111 = vmul.f32 %v4983, 0.7978846
      %v5112 = vmul.f32 %v4984, 0.7978846
      %v5113 = vmul.f32 %v4985, 0.7978846
      %v5114 = vmul.f32 %v4986, 0.7978846
      %v5115 = vmul.f32 %v4987, 0.7978846
      %v5116 = vmul.f32 %v4988, 0.7978846
      %v5117 = vmul.f32 %v4989, 0.7978846
      %v5118 = vmul.f32 %v4990, 0.7978846
      %v5119 = vmul.f32 %v4991, 0.7978846
      %v5120 = vmul.f32 %v4992, 0.7978846
      %v5121 = vmul.f32 %v4993, 0.7978846
      %v5122 = vmul.f32 %v4994, 0.7978846
      %v5123 = vmul.f32 %v4995, 0.7978846
      %v5124 = vmul.f32 %v4996, 0.7978846
      %v5125 = vmul.f32 %v4997, 0.7978846
      %v5126 = vmul.f32 %v4998, 0.7978846
      %v5127 = vmul.f32 %v4999, 0.7978846
      %v5128 = vmul.f32 %v5000, 0.7978846
      %v5129 = vmul.f32 %v5001, 0.7978846
      %v5130 = vmul.f32 %v5002, 0.7978846
      %v5131 = vmul.f32 %v5003, 0.7978846
      %v5132 = vmul.f32 %v5004, 0.7978846
      %v5133 = vmul.f32 %v5005, 0.7978846
      %v5134 = vmul.f32 %v5006, 0.7978846
      %v5135 = vmul.f32 %v5007, 0.7978846
      %v5136 = vmul.f32 %v5008, 0.7978846
      %v5137 = vmul.f32 %v5009, 0.7978846
      %v5138 = vmul.f32 %v5010, 0.7978846
      %v5139 = vmul.f32 %v5011, 0.7978846
      %v5140 = vmul.f32 %v5012, 0.7978846
      %v5141 = vmul.f32 %v5013, 0.7978846
      %v5142 = vmul.f32 %v5014, 0.7978846
      %v5143 = vmul.f32 %v5015, 0.7978846
      %v5144 = vmul.f32 %v5016, 0.7978846
      %v5145 = vmul.f32 %v5017, 0.7978846
      %v5146 = vmul.f32 %v5018, 0.7978846
      %v5147 = vmul.f32 %v5019, 0.7978846
      %v5148 = vmul.f32 %v5020, 0.7978846
      %v5149 = vmul.f32 %v5021, 0.7978846
      %v5150 = vmul.f32 %v5022, 0.7978846
      %v5151 = vmul.f32 %v5023, 0.7978846
      %v5152 = vmul.f32 %v5024, 0.7978846
      %v5153 = vmul.f32 %v5025, 0.7978846
      %v5154 = vmul.f32 %v5026, 0.7978846
      %v5155 = vmul.f32 %v5027, 0.7978846
      %v5156 = vmul.f32 %v5028, 0.7978846
      %v5157 = vmul.f32 %v5029, 0.7978846
      %v5158 = vmul.f32 %v5030, 0.7978846
      %v5159 = vmul.f32 %v5031, 0.7978846
      %v5160 = vmul.f32 %v5032, 0.7978846
      %v5161 = vmul.f32 %v5033, 0.7978846
      %v5162 = vmul.f32 %v5034, 0.7978846
      %v5163 = vmul.f32 %v5035, 0.7978846
      %v5164 = vmul.f32 %v5036, 0.7978846
      %v5165 = vmul.f32 %v5037, 0.7978846
      %v5166 = vmul.f32 %v5038, 0.7978846
      %v5167 = vmul.f32 %v5039, 0.7978846
      %v5168 = vmul.f32 %v5040, 0.7978846
      %v5169 = vmul.f32 %v5041, 0.7978846
      %v5170 = vmul.f32 %v5042, 0.7978846
      %v5171 = vmul.f32 %v5043, 0.7978846
      %v5172 = vmul.f32 %v5044, 0.7978846
      %v5173 = vmul.f32 %v5045, 0.7978846
      %v5174 = vmul.f32 %v5046, 0.7978846
      %v5175 = vmul.f32 %v5047, 0.7978846
      %v5176 = vmul.f32 %v5048, 0.7978846
      %v5177 = vmul.f32 %v5049, 0.7978846
      %v5178 = vmul.f32 %v5050, 0.7978846
      %v5179 = vmul.f32 %v5051, 0.7978846
      %v5180 = vmul.f32 %v5052, 0.7978846
      %v5181 = vmul.f32 %v5053, 0.7978846
      %v5182 = vmul.f32 %v5054, 0.7978846
      %v5183 = vmul.f32 %v5055, 0.7978846
      %v5184 = vmul.f32 %v5056, 0.7978846
      %v5185 = vmul.f32 %v5057, 0.7978846
      %v5186 = vmul.f32 %v5058, 0.7978846
      %v5187 = vmul.f32 %v5059, 0.7978846
      %v5188 = vmul.f32 %v5060, 0.7978846
      %v5189 = vmul.f32 %v5061, 0.7978846
      %v5190 = vmul.f32 %v5062, 0.7978846
      %v5191 = vmul.f32 %v5063, 0.7978846
      %v5192 = vmul.f32 %v5064, 0.7978846
      %v5193 = vmul.f32 %v5065, 0.7978846
      %v5194 = vmul.f32 %v5066, 0.7978846
      %v5195 = vmul.f32 %v5067, 0.7978846
      %v5196 = vmul.f32 %v5068, 0.7978846
      %v5197 = vmul.f32 %v5069, 0.7978846
      %v5198 = vmul.f32 %v5070, 0.7978846
      %v5199 = vmul.f32 %v5071, 0.7978846
      %v5200 = vmul.f32 %v5072, 0.7978846
      %v5201 = vmul.f32 %v5073, 0.7978846
      %v5202 = vmul.f32 %v5074, 0.7978846
      %v5203 = vmul.f32 %v5075, 0.7978846
      %v5204 = vmul.f32 %v5076, 0.7978846
      %v5205 = vmul.f32 %v5077, 0.7978846
      %v5206 = vmul.f32 %v5078, 0.7978846
      %v5207 = vmul.f32 %v5079, 0.7978846
      %v5208 = vmul.f32 %v5080, 0.7978846
      %v5209 = vmul.f32 %v5081, 0.7978846
      %v5210 = vtanh.pop %v5082
      %v5211 = vtanh.pop %v5083
      %v5212 = vtanh.pop %v5084
      %v5213 = vtanh.pop %v5085
      %v5214 = vtanh.pop %v5086
      %v5215 = vtanh.pop %v5087
      %v5216 = vtanh.pop %v5088
      %v5217 = vtanh.pop %v5089
      %v5218 = vtanh.pop %v5090
      %v5219 = vtanh.pop %v5091
      %v5220 = vtanh.pop %v5092
      %v5221 = vtanh.pop %v5093
      %v5222 = vtanh.pop %v5094
      %v5223 = vtanh.pop %v5095
      %v5224 = vtanh.pop %v5096
      %v5225 = vtanh.pop %v5097
      %v5226 = vtanh.pop %v5098
      %v5227 = vtanh.pop %v5099
      %v5228 = vtanh.pop %v5100
      %v5229 = vtanh.pop %v5101
      %v5230 = vtanh.pop %v5102
      %v5231 = vtanh.pop %v5103
      %v5232 = vtanh.pop %v5104
      %v5233 = vtanh.pop %v5105
      %v5234 = vtanh.pop %v5106
      %v5235 = vtanh.pop %v5107
      %v5236 = vtanh.pop %v5108
      %v5237 = vtanh.pop %v5109
      %v5238 = vtanh.pop %v5110
      %v5239 = vtanh.pop %v5111
      %v5240 = vtanh.pop %v5112
      %v5241 = vtanh.pop %v5113
      %v5242 = vtanh.pop %v5114
      %v5243 = vtanh.pop %v5115
      %v5244 = vtanh.pop %v5116
      %v5245 = vtanh.pop %v5117
      %v5246 = vtanh.pop %v5118
      %v5247 = vtanh.pop %v5119
      %v5248 = vtanh.pop %v5120
      %v5249 = vtanh.pop %v5121
      %v5250 = vtanh.pop %v5122
      %v5251 = vtanh.pop %v5123
      %v5252 = vtanh.pop %v5124
      %v5253 = vtanh.pop %v5125
      %v5254 = vtanh.pop %v5126
      %v5255 = vtanh.pop %v5127
      %v5256 = vtanh.pop %v5128
      %v5257 = vtanh.pop %v5129
      %v5258 = vtanh.pop %v5130
      %v5259 = vtanh.pop %v5131
      %v5260 = vtanh.pop %v5132
      %v5261 = vtanh.pop %v5133
      %v5262 = vtanh.pop %v5134
      %v5263 = vtanh.pop %v5135
      %v5264 = vtanh.pop %v5136
      %v5265 = vtanh.pop %v5137
      %v5266 = vtanh.pop %v5138
      %v5267 = vtanh.pop %v5139
      %v5268 = vtanh.pop %v5140
      %v5269 = vtanh.pop %v5141
      %v5270 = vtanh.pop %v5142
      %v5271 = vtanh.pop %v5143
      %v5272 = vtanh.pop %v5144
      %v5273 = vtanh.pop %v5145
      %v5274 = vtanh.pop %v5146
      %v5275 = vtanh.pop %v5147
      %v5276 = vtanh.pop %v5148
      %v5277 = vtanh.pop %v5149
      %v5278 = vtanh.pop %v5150
      %v5279 = vtanh.pop %v5151
      %v5280 = vtanh.pop %v5152
      %v5281 = vtanh.pop %v5153
      %v5282 = vtanh.pop %v5154
      %v5283 = vtanh.pop %v5155
      %v5284 = vtanh.pop %v5156
      %v5285 = vtanh.pop %v5157
      %v5286 = vtanh.pop %v5158
      %v5287 = vtanh.pop %v5159
      %v5288 = vtanh.pop %v5160
      %v5289 = vtanh.pop %v5161
      %v5290 = vtanh.pop %v5162
      %v5291 = vtanh.pop %v5163
      %v5292 = vtanh.pop %v5164
      %v5293 = vtanh.pop %v5165
      %v5294 = vtanh.pop %v5166
      %v5295 = vtanh.pop %v5167
      %v5296 = vtanh.pop %v5168
      %v5297 = vtanh.pop %v5169
      %v5298 = vtanh.pop %v5170
      %v5299 = vtanh.pop %v5171
      %v5300 = vtanh.pop %v5172
      %v5301 = vtanh.pop %v5173
      %v5302 = vtanh.pop %v5174
      %v5303 = vtanh.pop %v5175
      %v5304 = vtanh.pop %v5176
      %v5305 = vtanh.pop %v5177
      %v5306 = vtanh.pop %v5178
      %v5307 = vtanh.pop %v5179
      %v5308 = vtanh.pop %v5180
      %v5309 = vtanh.pop %v5181
      %v5310 = vtanh.pop %v5182
      %v5311 = vtanh.pop %v5183
      %v5312 = vtanh.pop %v5184
      %v5313 = vtanh.pop %v5185
      %v5314 = vtanh.pop %v5186
      %v5315 = vtanh.pop %v5187
      %v5316 = vtanh.pop %v5188
      %v5317 = vtanh.pop %v5189
      %v5318 = vtanh.pop %v5190
      %v5319 = vtanh.pop %v5191
      %v5320 = vtanh.pop %v5192
      %v5321 = vtanh.pop %v5193
      %v5322 = vtanh.pop %v5194
      %v5323 = vtanh.pop %v5195
      %v5324 = vtanh.pop %v5196
      %v5325 = vtanh.pop %v5197
      %v5326 = vtanh.pop %v5198
      %v5327 = vtanh.pop %v5199
      %v5328 = vtanh.pop %v5200
      %v5329 = vtanh.pop %v5201
      %v5330 = vtanh.pop %v5202
      %v5331 = vtanh.pop %v5203
      %v5332 = vtanh.pop %v5204
      %v5333 = vtanh.pop %v5205
      %v5334 = vtanh.pop %v5206
      %v5335 = vtanh.pop %v5207
      %v5336 = vtanh.pop %v5208
      %v5337 = vtanh.pop %v5209
      %v5338 = vadd.f32 %v5210, 1.0
      %v5339 = vadd.f32 %v5211, 1.0
      %v5340 = vadd.f32 %v5212, 1.0
      %v5341 = vadd.f32 %v5213, 1.0
      %v5342 = vadd.f32 %v5214, 1.0
      %v5343 = vadd.f32 %v5215, 1.0
      %v5344 = vadd.f32 %v5216, 1.0
      %v5345 = vadd.f32 %v5217, 1.0
      %v5346 = vadd.f32 %v5218, 1.0
      %v5347 = vadd.f32 %v5219, 1.0
      %v5348 = vadd.f32 %v5220, 1.0
      %v5349 = vadd.f32 %v5221, 1.0
      %v5350 = vadd.f32 %v5222, 1.0
      %v5351 = vadd.f32 %v5223, 1.0
      %v5352 = vadd.f32 %v5224, 1.0
      %v5353 = vadd.f32 %v5225, 1.0
      %v5354 = vadd.f32 %v5226, 1.0
      %v5355 = vadd.f32 %v5227, 1.0
      %v5356 = vadd.f32 %v5228, 1.0
      %v5357 = vadd.f32 %v5229, 1.0
      %v5358 = vadd.f32 %v5230, 1.0
      %v5359 = vadd.f32 %v5231, 1.0
      %v5360 = vadd.f32 %v5232, 1.0
      %v5361 = vadd.f32 %v5233, 1.0
      %v5362 = vadd.f32 %v5234, 1.0
      %v5363 = vadd.f32 %v5235, 1.0
      %v5364 = vadd.f32 %v5236, 1.0
      %v5365 = vadd.f32 %v5237, 1.0
      %v5366 = vadd.f32 %v5238, 1.0
      %v5367 = vadd.f32 %v5239, 1.0
      %v5368 = vadd.f32 %v5240, 1.0
      %v5369 = vadd.f32 %v5241, 1.0
      %v5370 = vadd.f32 %v5242, 1.0
      %v5371 = vadd.f32 %v5243, 1.0
      %v5372 = vadd.f32 %v5244, 1.0
      %v5373 = vadd.f32 %v5245, 1.0
      %v5374 = vadd.f32 %v5246, 1.0
      %v5375 = vadd.f32 %v5247, 1.0
      %v5376 = vadd.f32 %v5248, 1.0
      %v5377 = vadd.f32 %v5249, 1.0
      %v5378 = vadd.f32 %v5250, 1.0
      %v5379 = vadd.f32 %v5251, 1.0
      %v5380 = vadd.f32 %v5252, 1.0
      %v5381 = vadd.f32 %v5253, 1.0
      %v5382 = vadd.f32 %v5254, 1.0
      %v5383 = vadd.f32 %v5255, 1.0
      %v5384 = vadd.f32 %v5256, 1.0
      %v5385 = vadd.f32 %v5257, 1.0
      %v5386 = vadd.f32 %v5258, 1.0
      %v5387 = vadd.f32 %v5259, 1.0
      %v5388 = vadd.f32 %v5260, 1.0
      %v5389 = vadd.f32 %v5261, 1.0
      %v5390 = vadd.f32 %v5262, 1.0
      %v5391 = vadd.f32 %v5263, 1.0
      %v5392 = vadd.f32 %v5264, 1.0
      %v5393 = vadd.f32 %v5265, 1.0
      %v5394 = vadd.f32 %v5266, 1.0
      %v5395 = vadd.f32 %v5267, 1.0
      %v5396 = vadd.f32 %v5268, 1.0
      %v5397 = vadd.f32 %v5269, 1.0
      %v5398 = vadd.f32 %v5270, 1.0
      %v5399 = vadd.f32 %v5271, 1.0
      %v5400 = vadd.f32 %v5272, 1.0
      %v5401 = vadd.f32 %v5273, 1.0
      %v5402 = vadd.f32 %v5274, 1.0
      %v5403 = vadd.f32 %v5275, 1.0
      %v5404 = vadd.f32 %v5276, 1.0
      %v5405 = vadd.f32 %v5277, 1.0
      %v5406 = vadd.f32 %v5278, 1.0
      %v5407 = vadd.f32 %v5279, 1.0
      %v5408 = vadd.f32 %v5280, 1.0
      %v5409 = vadd.f32 %v5281, 1.0
      %v5410 = vadd.f32 %v5282, 1.0
      %v5411 = vadd.f32 %v5283, 1.0
      %v5412 = vadd.f32 %v5284, 1.0
      %v5413 = vadd.f32 %v5285, 1.0
      %v5414 = vadd.f32 %v5286, 1.0
      %v5415 = vadd.f32 %v5287, 1.0
      %v5416 = vadd.f32 %v5288, 1.0
      %v5417 = vadd.f32 %v5289, 1.0
      %v5418 = vadd.f32 %v5290, 1.0
      %v5419 = vadd.f32 %v5291, 1.0
      %v5420 = vadd.f32 %v5292, 1.0
      %v5421 = vadd.f32 %v5293, 1.0
      %v5422 = vadd.f32 %v5294, 1.0
      %v5423 = vadd.f32 %v5295, 1.0
      %v5424 = vadd.f32 %v5296, 1.0
      %v5425 = vadd.f32 %v5297, 1.0
      %v5426 = vadd.f32 %v5298, 1.0
      %v5427 = vadd.f32 %v5299, 1.0
      %v5428 = vadd.f32 %v5300, 1.0
      %v5429 = vadd.f32 %v5301, 1.0
      %v5430 = vadd.f32 %v5302, 1.0
      %v5431 = vadd.f32 %v5303, 1.0
      %v5432 = vadd.f32 %v5304, 1.0
      %v5433 = vadd.f32 %v5305, 1.0
      %v5434 = vadd.f32 %v5306, 1.0
      %v5435 = vadd.f32 %v5307, 1.0
      %v5436 = vadd.f32 %v5308, 1.0
      %v5437 = vadd.f32 %v5309, 1.0
      %v5438 = vadd.f32 %v5310, 1.0
      %v5439 = vadd.f32 %v5311, 1.0
      %v5440 = vadd.f32 %v5312, 1.0
      %v5441 = vadd.f32 %v5313, 1.0
      %v5442 = vadd.f32 %v5314, 1.0
      %v5443 = vadd.f32 %v5315, 1.0
      %v5444 = vadd.f32 %v5316, 1.0
      %v5445 = vadd.f32 %v5317, 1.0
      %v5446 = vadd.f32 %v5318, 1.0
      %v5447 = vadd.f32 %v5319, 1.0
      %v5448 = vadd.f32 %v5320, 1.0
      %v5449 = vadd.f32 %v5321, 1.0
      %v5450 = vadd.f32 %v5322, 1.0
      %v5451 = vadd.f32 %v5323, 1.0
      %v5452 = vadd.f32 %v5324, 1.0
      %v5453 = vadd.f32 %v5325, 1.0
      %v5454 = vadd.f32 %v5326, 1.0
      %v5455 = vadd.f32 %v5327, 1.0
      %v5456 = vadd.f32 %v5328, 1.0
      %v5457 = vadd.f32 %v5329, 1.0
      %v5458 = vadd.f32 %v5330, 1.0
      %v5459 = vadd.f32 %v5331, 1.0
      %v5460 = vadd.f32 %v5332, 1.0
      %v5461 = vadd.f32 %v5333, 1.0
      %v5462 = vadd.f32 %v5334, 1.0
      %v5463 = vadd.f32 %v5335, 1.0
      %v5464 = vadd.f32 %v5336, 1.0
      %v5465 = vadd.f32 %v5337, 1.0
      %v5466 = vmul.f32 %v5338, 0.5
      %v5467 = vmul.f32 %v5339, 0.5
      %v5468 = vmul.f32 %v5340, 0.5
      %v5469 = vmul.f32 %v5341, 0.5
      %v5470 = vmul.f32 %v5342, 0.5
      %v5471 = vmul.f32 %v5343, 0.5
      %v5472 = vmul.f32 %v5344, 0.5
      %v5473 = vmul.f32 %v5345, 0.5
      %v5474 = vmul.f32 %v5346, 0.5
      %v5475 = vmul.f32 %v5347, 0.5
      %v5476 = vmul.f32 %v5348, 0.5
      %v5477 = vmul.f32 %v5349, 0.5
      %v5478 = vmul.f32 %v5350, 0.5
      %v5479 = vmul.f32 %v5351, 0.5
      %v5480 = vmul.f32 %v5352, 0.5
      %v5481 = vmul.f32 %v5353, 0.5
      %v5482 = vmul.f32 %v5354, 0.5
      %v5483 = vmul.f32 %v5355, 0.5
      %v5484 = vmul.f32 %v5356, 0.5
      %v5485 = vmul.f32 %v5357, 0.5
      %v5486 = vmul.f32 %v5358, 0.5
      %v5487 = vmul.f32 %v5359, 0.5
      %v5488 = vmul.f32 %v5360, 0.5
      %v5489 = vmul.f32 %v5361, 0.5
      %v5490 = vmul.f32 %v5362, 0.5
      %v5491 = vmul.f32 %v5363, 0.5
      %v5492 = vmul.f32 %v5364, 0.5
      %v5493 = vmul.f32 %v5365, 0.5
      %v5494 = vmul.f32 %v5366, 0.5
      %v5495 = vmul.f32 %v5367, 0.5
      %v5496 = vmul.f32 %v5368, 0.5
      %v5497 = vmul.f32 %v5369, 0.5
      %v5498 = vmul.f32 %v5370, 0.5
      %v5499 = vmul.f32 %v5371, 0.5
      %v5500 = vmul.f32 %v5372, 0.5
      %v5501 = vmul.f32 %v5373, 0.5
      %v5502 = vmul.f32 %v5374, 0.5
      %v5503 = vmul.f32 %v5375, 0.5
      %v5504 = vmul.f32 %v5376, 0.5
      %v5505 = vmul.f32 %v5377, 0.5
      %v5506 = vmul.f32 %v5378, 0.5
      %v5507 = vmul.f32 %v5379, 0.5
      %v5508 = vmul.f32 %v5380, 0.5
      %v5509 = vmul.f32 %v5381, 0.5
      %v5510 = vmul.f32 %v5382, 0.5
      %v5511 = vmul.f32 %v5383, 0.5
      %v5512 = vmul.f32 %v5384, 0.5
      %v5513 = vmul.f32 %v5385, 0.5
      %v5514 = vmul.f32 %v5386, 0.5
      %v5515 = vmul.f32 %v5387, 0.5
      %v5516 = vmul.f32 %v5388, 0.5
      %v5517 = vmul.f32 %v5389, 0.5
      %v5518 = vmul.f32 %v5390, 0.5
      %v5519 = vmul.f32 %v5391, 0.5
      %v5520 = vmul.f32 %v5392, 0.5
      %v5521 = vmul.f32 %v5393, 0.5
      %v5522 = vmul.f32 %v5394, 0.5
      %v5523 = vmul.f32 %v5395, 0.5
      %v5524 = vmul.f32 %v5396, 0.5
      %v5525 = vmul.f32 %v5397, 0.5
      %v5526 = vmul.f32 %v5398, 0.5
      %v5527 = vmul.f32 %v5399, 0.5
      %v5528 = vmul.f32 %v5400, 0.5
      %v5529 = vmul.f32 %v5401, 0.5
      %v5530 = vmul.f32 %v5402, 0.5
      %v5531 = vmul.f32 %v5403, 0.5
      %v5532 = vmul.f32 %v5404, 0.5
      %v5533 = vmul.f32 %v5405, 0.5
      %v5534 = vmul.f32 %v5406, 0.5
      %v5535 = vmul.f32 %v5407, 0.5
      %v5536 = vmul.f32 %v5408, 0.5
      %v5537 = vmul.f32 %v5409, 0.5
      %v5538 = vmul.f32 %v5410, 0.5
      %v5539 = vmul.f32 %v5411, 0.5
      %v5540 = vmul.f32 %v5412, 0.5
      %v5541 = vmul.f32 %v5413, 0.5
      %v5542 = vmul.f32 %v5414, 0.5
      %v5543 = vmul.f32 %v5415, 0.5
      %v5544 = vmul.f32 %v5416, 0.5
      %v5545 = vmul.f32 %v5417, 0.5
      %v5546 = vmul.f32 %v5418, 0.5
      %v5547 = vmul.f32 %v5419, 0.5
      %v5548 = vmul.f32 %v5420, 0.5
      %v5549 = vmul.f32 %v5421, 0.5
      %v5550 = vmul.f32 %v5422, 0.5
      %v5551 = vmul.f32 %v5423, 0.5
      %v5552 = vmul.f32 %v5424, 0.5
      %v5553 = vmul.f32 %v5425, 0.5
      %v5554 = vmul.f32 %v5426, 0.5
      %v5555 = vmul.f32 %v5427, 0.5
      %v5556 = vmul.f32 %v5428, 0.5
      %v5557 = vmul.f32 %v5429, 0.5
      %v5558 = vmul.f32 %v5430, 0.5
      %v5559 = vmul.f32 %v5431, 0.5
      %v5560 = vmul.f32 %v5432, 0.5
      %v5561 = vmul.f32 %v5433, 0.5
      %v5562 = vmul.f32 %v5434, 0.5
      %v5563 = vmul.f32 %v5435, 0.5
      %v5564 = vmul.f32 %v5436, 0.5
      %v5565 = vmul.f32 %v5437, 0.5
      %v5566 = vmul.f32 %v5438, 0.5
      %v5567 = vmul.f32 %v5439, 0.5
      %v5568 = vmul.f32 %v5440, 0.5
      %v5569 = vmul.f32 %v5441, 0.5
      %v5570 = vmul.f32 %v5442, 0.5
      %v5571 = vmul.f32 %v5443, 0.5
      %v5572 = vmul.f32 %v5444, 0.5
      %v5573 = vmul.f32 %v5445, 0.5
      %v5574 = vmul.f32 %v5446, 0.5
      %v5575 = vmul.f32 %v5447, 0.5
      %v5576 = vmul.f32 %v5448, 0.5
      %v5577 = vmul.f32 %v5449, 0.5
      %v5578 = vmul.f32 %v5450, 0.5
      %v5579 = vmul.f32 %v5451, 0.5
      %v5580 = vmul.f32 %v5452, 0.5
      %v5581 = vmul.f32 %v5453, 0.5
      %v5582 = vmul.f32 %v5454, 0.5
      %v5583 = vmul.f32 %v5455, 0.5
      %v5584 = vmul.f32 %v5456, 0.5
      %v5585 = vmul.f32 %v5457, 0.5
      %v5586 = vmul.f32 %v5458, 0.5
      %v5587 = vmul.f32 %v5459, 0.5
      %v5588 = vmul.f32 %v5460, 0.5
      %v5589 = vmul.f32 %v5461, 0.5
      %v5590 = vmul.f32 %v5462, 0.5
      %v5591 = vmul.f32 %v5463, 0.5
      %v5592 = vmul.f32 %v5464, 0.5
      %v5593 = vmul.f32 %v5465, 0.5
      %v5594 = vmul.f32 %v4442, %v5466
      %v5595 = vmul.f32 %v4443, %v5467
      %v5596 = vmul.f32 %v4444, %v5468
      %v5597 = vmul.f32 %v4445, %v5469
      %v5598 = vmul.f32 %v4446, %v5470
      %v5599 = vmul.f32 %v4447, %v5471
      %v5600 = vmul.f32 %v4448, %v5472
      %v5601 = vmul.f32 %v4449, %v5473
      %v5602 = vmul.f32 %v4450, %v5474
      %v5603 = vmul.f32 %v4451, %v5475
      %v5604 = vmul.f32 %v4452, %v5476
      %v5605 = vmul.f32 %v4453, %v5477
      %v5606 = vmul.f32 %v4454, %v5478
      %v5607 = vmul.f32 %v4455, %v5479
      %v5608 = vmul.f32 %v4456, %v5480
      %v5609 = vmul.f32 %v4457, %v5481
      %v5610 = vmul.f32 %v4458, %v5482
      %v5611 = vmul.f32 %v4459, %v5483
      %v5612 = vmul.f32 %v4460, %v5484
      %v5613 = vmul.f32 %v4461, %v5485
      %v5614 = vmul.f32 %v4462, %v5486
      %v5615 = vmul.f32 %v4463, %v5487
      %v5616 = vmul.f32 %v4464, %v5488
      %v5617 = vmul.f32 %v4465, %v5489
      %v5618 = vmul.f32 %v4466, %v5490
      %v5619 = vmul.f32 %v4467, %v5491
      %v5620 = vmul.f32 %v4468, %v5492
      %v5621 = vmul.f32 %v4469, %v5493
      %v5622 = vmul.f32 %v4470, %v5494
      %v5623 = vmul.f32 %v4471, %v5495
      %v5624 = vmul.f32 %v4472, %v5496
      %v5625 = vmul.f32 %v4473, %v5497
      %v5626 = vmul.f32 %v4474, %v5498
      %v5627 = vmul.f32 %v4475, %v5499
      %v5628 = vmul.f32 %v4476, %v5500
      %v5629 = vmul.f32 %v4477, %v5501
      %v5630 = vmul.f32 %v4478, %v5502
      %v5631 = vmul.f32 %v4479, %v5503
      %v5632 = vmul.f32 %v4480, %v5504
      %v5633 = vmul.f32 %v4481, %v5505
      %v5634 = vmul.f32 %v4482, %v5506
      %v5635 = vmul.f32 %v4483, %v5507
      %v5636 = vmul.f32 %v4484, %v5508
      %v5637 = vmul.f32 %v4485, %v5509
      %v5638 = vmul.f32 %v4486, %v5510
      %v5639 = vmul.f32 %v4487, %v5511
      %v5640 = vmul.f32 %v4488, %v5512
      %v5641 = vmul.f32 %v4489, %v5513
      %v5642 = vmul.f32 %v4490, %v5514
      %v5643 = vmul.f32 %v4491, %v5515
      %v5644 = vmul.f32 %v4492, %v5516
      %v5645 = vmul.f32 %v4493, %v5517
      %v5646 = vmul.f32 %v4494, %v5518
      %v5647 = vmul.f32 %v4495, %v5519
      %v5648 = vmul.f32 %v4496, %v5520
      %v5649 = vmul.f32 %v4497, %v5521
      %v5650 = vmul.f32 %v4498, %v5522
      %v5651 = vmul.f32 %v4499, %v5523
      %v5652 = vmul.f32 %v4500, %v5524
      %v5653 = vmul.f32 %v4501, %v5525
      %v5654 = vmul.f32 %v4502, %v5526
      %v5655 = vmul.f32 %v4503, %v5527
      %v5656 = vmul.f32 %v4504, %v5528
      %v5657 = vmul.f32 %v4505, %v5529
      %v5658 = vmul.f32 %v4506, %v5530
      %v5659 = vmul.f32 %v4507, %v5531
      %v5660 = vmul.f32 %v4508, %v5532
      %v5661 = vmul.f32 %v4509, %v5533
      %v5662 = vmul.f32 %v4510, %v5534
      %v5663 = vmul.f32 %v4511, %v5535
      %v5664 = vmul.f32 %v4512, %v5536
      %v5665 = vmul.f32 %v4513, %v5537
      %v5666 = vmul.f32 %v4514, %v5538
      %v5667 = vmul.f32 %v4515, %v5539
      %v5668 = vmul.f32 %v4516, %v5540
      %v5669 = vmul.f32 %v4517, %v5541
      %v5670 = vmul.f32 %v4518, %v5542
      %v5671 = vmul.f32 %v4519, %v5543
      %v5672 = vmul.f32 %v4520, %v5544
      %v5673 = vmul.f32 %v4521, %v5545
      %v5674 = vmul.f32 %v4522, %v5546
      %v5675 = vmul.f32 %v4523, %v5547
      %v5676 = vmul.f32 %v4524, %v5548
      %v5677 = vmul.f32 %v4525, %v5549
      %v5678 = vmul.f32 %v4526, %v5550
      %v5679 = vmul.f32 %v4527, %v5551
      %v5680 = vmul.f32 %v4528, %v5552
      %v5681 = vmul.f32 %v4529, %v5553
      %v5682 = vmul.f32 %v4530, %v5554
      %v5683 = vmul.f32 %v4531, %v5555
      %v5684 = vmul.f32 %v4532, %v5556
      %v5685 = vmul.f32 %v4533, %v5557
      %v5686 = vmul.f32 %v4534, %v5558
      %v5687 = vmul.f32 %v4535, %v5559
      %v5688 = vmul.f32 %v4536, %v5560
      %v5689 = vmul.f32 %v4537, %v5561
      %v5690 = vmul.f32 %v4538, %v5562
      %v5691 = vmul.f32 %v4539, %v5563
      %v5692 = vmul.f32 %v4540, %v5564
      %v5693 = vmul.f32 %v4541, %v5565
      %v5694 = vmul.f32 %v4542, %v5566
      %v5695 = vmul.f32 %v4543, %v5567
      %v5696 = vmul.f32 %v4544, %v5568
      %v5697 = vmul.f32 %v4545, %v5569
      %v5698 = vmul.f32 %v4546, %v5570
      %v5699 = vmul.f32 %v4547, %v5571
      %v5700 = vmul.f32 %v4548, %v5572
      %v5701 = vmul.f32 %v4549, %v5573
      %v5702 = vmul.f32 %v4550, %v5574
      %v5703 = vmul.f32 %v4551, %v5575
      %v5704 = vmul.f32 %v4552, %v5576
      %v5705 = vmul.f32 %v4553, %v5577
      %v5706 = vmul.f32 %v4554, %v5578
      %v5707 = vmul.f32 %v4555, %v5579
      %v5708 = vmul.f32 %v4556, %v5580
      %v5709 = vmul.f32 %v4557, %v5581
      %v5710 = vmul.f32 %v4558, %v5582
      %v5711 = vmul.f32 %v4559, %v5583
      %v5712 = vmul.f32 %v4560, %v5584
      %v5713 = vmul.f32 %v4561, %v5585
      %v5714 = vmul.f32 %v4562, %v5586
      %v5715 = vmul.f32 %v4563, %v5587
      %v5716 = vmul.f32 %v4564, %v5588
      %v5717 = vmul.f32 %v4565, %v5589
      %v5718 = vmul.f32 %v4566, %v5590
      %v5719 = vmul.f32 %v4567, %v5591
      %v5720 = vmul.f32 %v4568, %v5592
      %v5721 = vmul.f32 %v4569, %v5593
      %v5722 = vld [vmem:[%s4] sm:$0xff]
      %vm5723 = vcmask 261120
      %v5725 = vsel %vm5723, %v5722, 0
      %5727 = vmatpush.msra.mxu0 0.0
      %5728 = vmatpush.msra.mxu0 0.0
      %5729 = vmatpush.msra.mxu0 0.0
      %5730 = vmatpush.msra.mxu0 0.0
      %5731 = vmatpush.msra.mxu0 0.0
      %5732 = vmatpush.msra.mxu0 0.0
      %5733 = vmatpush.msra.mxu0 0.0
      %5734 = vmatpush.msra.mxu0 0.0
      %5735 = vmatpush.msra.mxu0 0.0
      %5736 = vmatpush.msra.mxu0 0.0
      %5737 = vmatpush.msra.mxu0 0.0
      %5738 = vmatpush.msra.mxu0 0.0
      %5739 = vmatpush.msra.mxu0 %v5597
      %5740 = vmatpush.msra.mxu0 %v5596
      %5741 = vmatpush.msra.mxu0 %v5595
      %5742 = vmatpush.msra.mxu0 %v5594
      %5743 = vmatmul.f32.gmra.mxu0 %v5725
      %v5744 = vpop.f32.mrf.mxu0
      %v5745 = vadd.f32 %v228, %v5744
      %5746 = vdwg.mxu0
      %5747 = vmatpush.msra.mxu0 0.0
      %5748 = vmatpush.msra.mxu0 0.0
      %5749 = vmatpush.msra.mxu0 0.0
      %5750 = vmatpush.msra.mxu0 0.0
      %5751 = vmatpush.msra.mxu0 0.0
      %5752 = vmatpush.msra.mxu0 0.0
      %5753 = vmatpush.msra.mxu0 0.0
      %5754 = vmatpush.msra.mxu0 0.0
      %5755 = vmatpush.msra.mxu0 0.0
      %5756 = vmatpush.msra.mxu0 0.0
      %5757 = vmatpush.msra.mxu0 0.0
      %5758 = vmatpush.msra.mxu0 0.0
      %5759 = vmatpush.msra.mxu0 %v5601
      %5760 = vmatpush.msra.mxu0 %v5600
      %5761 = vmatpush.msra.mxu0 %v5599
      %5762 = vmatpush.msra.mxu0 %v5598
      %5763 = vmatmul.f32.gmra.mxu0 %v5725
      %v5764 = vpop.f32.mrf.mxu0
      %v5765 = vadd.f32 %v229, %v5764
      %5766 = vdwg.mxu0
      %5767 = vmatpush.msra.mxu0 0.0
      %5768 = vmatpush.msra.mxu0 0.0
      %5769 = vmatpush.msra.mxu0 0.0
      %5770 = vmatpush.msra.mxu0 0.0
      %5771 = vmatpush.msra.mxu0 0.0
      %5772 = vmatpush.msra.mxu0 0.0
      %5773 = vmatpush.msra.mxu0 0.0
      %5774 = vmatpush.msra.mxu0 0.0
      %5775 = vmatpush.msra.mxu0 0.0
      %5776 = vmatpush.msra.mxu0 0.0
      %5777 = vmatpush.msra.mxu0 0.0
      %5778 = vmatpush.msra.mxu0 0.0
      %5779 = vmatpush.msra.mxu0 %v5605
      %5780 = vmatpush.msra.mxu0 %v5604
      %5781 = vmatpush.msra.mxu0 %v5603
      %5782 = vmatpush.msra.mxu0 %v5602
      %5783 = vmatmul.f32.gmra.mxu0 %v5725
      %v5784 = vpop.f32.mrf.mxu0
      %v5785 = vadd.f32 %v230, %v5784
      %5786 = vdwg.mxu0
      %5787 = vmatpush.msra.mxu0 0.0
      %5788 = vmatpush.msra.mxu0 0.0
      %5789 = vmatpush.msra.mxu0 0.0
      %5790 = vmatpush.msra.mxu0 0.0
      %5791 = vmatpush.msra.mxu0 0.0
      %5792 = vmatpush.msra.mxu0 0.0
      %5793 = vmatpush.msra.mxu0 0.0
      %5794 = vmatpush.msra.mxu0 0.0
      %5795 = vmatpush.msra.mxu0 0.0
      %5796 = vmatpush.msra.mxu0 0.0
      %5797 = vmatpush.msra.mxu0 0.0
      %5798 = vmatpush.msra.mxu0 0.0
      %5799 = vmatpush.msra.mxu0 %v5609
      %5800 = vmatpush.msra.mxu0 %v5608
      %5801 = vmatpush.msra.mxu0 %v5607
      %5802 = vmatpush.msra.mxu0 %v5606
      %5803 = vmatmul.f32.gmra.mxu0 %v5725
      %v5804 = vpop.f32.mrf.mxu0
      %v5805 = vadd.f32 %v231, %v5804
      %5806 = vdwg.mxu0
      %5807 = vmatpush.msra.mxu0 0.0
      %5808 = vmatpush.msra.mxu0 0.0
      %5809 = vmatpush.msra.mxu0 0.0
      %5810 = vmatpush.msra.mxu0 0.0
      %5811 = vmatpush.msra.mxu0 0.0
      %5812 = vmatpush.msra.mxu0 0.0
      %5813 = vmatpush.msra.mxu0 0.0
      %5814 = vmatpush.msra.mxu0 0.0
      %5815 = vmatpush.msra.mxu0 0.0
      %5816 = vmatpush.msra.mxu0 0.0
      %5817 = vmatpush.msra.mxu0 0.0
      %5818 = vmatpush.msra.mxu0 0.0
      %5819 = vmatpush.msra.mxu0 %v5613
      %5820 = vmatpush.msra.mxu0 %v5612
      %5821 = vmatpush.msra.mxu0 %v5611
      %5822 = vmatpush.msra.mxu0 %v5610
      %5823 = vmatmul.f32.gmra.mxu0 %v5725
      %v5824 = vpop.f32.mrf.mxu0
      %v5825 = vadd.f32 %v232, %v5824
      %5826 = vdwg.mxu0
      %5827 = vmatpush.msra.mxu0 0.0
      %5828 = vmatpush.msra.mxu0 0.0
      %5829 = vmatpush.msra.mxu0 0.0
      %5830 = vmatpush.msra.mxu0 0.0
      %5831 = vmatpush.msra.mxu0 0.0
      %5832 = vmatpush.msra.mxu0 0.0
      %5833 = vmatpush.msra.mxu0 0.0
      %5834 = vmatpush.msra.mxu0 0.0
      %5835 = vmatpush.msra.mxu0 0.0
      %5836 = vmatpush.msra.mxu0 0.0
      %5837 = vmatpush.msra.mxu0 0.0
      %5838 = vmatpush.msra.mxu0 0.0
      %5839 = vmatpush.msra.mxu0 %v5617
      %5840 = vmatpush.msra.mxu0 %v5616
      %5841 = vmatpush.msra.mxu0 %v5615
      %5842 = vmatpush.msra.mxu0 %v5614
      %5843 = vmatmul.f32.gmra.mxu0 %v5725
      %v5844 = vpop.f32.mrf.mxu0
      %v5845 = vadd.f32 %v233, %v5844
      %5846 = vdwg.mxu0
      %5847 = vmatpush.msra.mxu0 0.0
      %5848 = vmatpush.msra.mxu0 0.0
      %5849 = vmatpush.msra.mxu0 0.0
      %5850 = vmatpush.msra.mxu0 0.0
      %5851 = vmatpush.msra.mxu0 0.0
      %5852 = vmatpush.msra.mxu0 0.0
      %5853 = vmatpush.msra.mxu0 0.0
      %5854 = vmatpush.msra.mxu0 0.0
      %5855 = vmatpush.msra.mxu0 0.0
      %5856 = vmatpush.msra.mxu0 0.0
      %5857 = vmatpush.msra.mxu0 0.0
      %5858 = vmatpush.msra.mxu0 0.0
      %5859 = vmatpush.msra.mxu0 %v5621
      %5860 = vmatpush.msra.mxu0 %v5620
      %5861 = vmatpush.msra.mxu0 %v5619
      %5862 = vmatpush.msra.mxu0 %v5618
      %5863 = vmatmul.f32.gmra.mxu0 %v5725
      %v5864 = vpop.f32.mrf.mxu0
      %v5865 = vadd.f32 %v234, %v5864
      %5866 = vdwg.mxu0
      %5867 = vmatpush.msra.mxu0 0.0
      %5868 = vmatpush.msra.mxu0 0.0
      %5869 = vmatpush.msra.mxu0 0.0
      %5870 = vmatpush.msra.mxu0 0.0
      %5871 = vmatpush.msra.mxu0 0.0
      %5872 = vmatpush.msra.mxu0 0.0
      %5873 = vmatpush.msra.mxu0 0.0
      %5874 = vmatpush.msra.mxu0 0.0
      %5875 = vmatpush.msra.mxu0 0.0
      %5876 = vmatpush.msra.mxu0 0.0
      %5877 = vmatpush.msra.mxu0 0.0
      %5878 = vmatpush.msra.mxu0 0.0
      %5879 = vmatpush.msra.mxu0 %v5625
      %5880 = vmatpush.msra.mxu0 %v5624
      %5881 = vmatpush.msra.mxu0 %v5623
      %5882 = vmatpush.msra.mxu0 %v5622
      %5883 = vmatmul.f32.gmra.mxu0 %v5725
      %v5884 = vpop.f32.mrf.mxu0
      %v5885 = vadd.f32 %v235, %v5884
      %5886 = vdwg.mxu0
      %5887 = vmatpush.msra.mxu0 0.0
      %5888 = vmatpush.msra.mxu0 0.0
      %5889 = vmatpush.msra.mxu0 0.0
      %5890 = vmatpush.msra.mxu0 0.0
      %5891 = vmatpush.msra.mxu0 0.0
      %5892 = vmatpush.msra.mxu0 0.0
      %5893 = vmatpush.msra.mxu0 0.0
      %5894 = vmatpush.msra.mxu0 0.0
      %5895 = vmatpush.msra.mxu0 0.0
      %5896 = vmatpush.msra.mxu0 0.0
      %5897 = vmatpush.msra.mxu0 0.0
      %5898 = vmatpush.msra.mxu0 0.0
      %5899 = vmatpush.msra.mxu0 %v5629
      %5900 = vmatpush.msra.mxu0 %v5628
      %5901 = vmatpush.msra.mxu0 %v5627
      %5902 = vmatpush.msra.mxu0 %v5626
      %5903 = vmatmul.f32.gmra.mxu0 %v5725
      %v5904 = vpop.f32.mrf.mxu0
      %v5905 = vadd.f32 %v236, %v5904
      %5906 = vdwg.mxu0
      %5907 = vmatpush.msra.mxu0 0.0
      %5908 = vmatpush.msra.mxu0 0.0
      %5909 = vmatpush.msra.mxu0 0.0
      %5910 = vmatpush.msra.mxu0 0.0
      %5911 = vmatpush.msra.mxu0 0.0
      %5912 = vmatpush.msra.mxu0 0.0
      %5913 = vmatpush.msra.mxu0 0.0
      %5914 = vmatpush.msra.mxu0 0.0
      %5915 = vmatpush.msra.mxu0 0.0
      %5916 = vmatpush.msra.mxu0 0.0
      %5917 = vmatpush.msra.mxu0 0.0
      %5918 = vmatpush.msra.mxu0 0.0
      %5919 = vmatpush.msra.mxu0 %v5633
      %5920 = vmatpush.msra.mxu0 %v5632
      %5921 = vmatpush.msra.mxu0 %v5631
      %5922 = vmatpush.msra.mxu0 %v5630
      %5923 = vmatmul.f32.gmra.mxu0 %v5725
      %v5924 = vpop.f32.mrf.mxu0
      %v5925 = vadd.f32 %v237, %v5924
      %5926 = vdwg.mxu0
      %5927 = vmatpush.msra.mxu0 0.0
      %5928 = vmatpush.msra.mxu0 0.0
      %5929 = vmatpush.msra.mxu0 0.0
      %5930 = vmatpush.msra.mxu0 0.0
      %5931 = vmatpush.msra.mxu0 0.0
      %5932 = vmatpush.msra.mxu0 0.0
      %5933 = vmatpush.msra.mxu0 0.0
      %5934 = vmatpush.msra.mxu0 0.0
      %5935 = vmatpush.msra.mxu0 0.0
      %5936 = vmatpush.msra.mxu0 0.0
      %5937 = vmatpush.msra.mxu0 0.0
      %5938 = vmatpush.msra.mxu0 0.0
      %5939 = vmatpush.msra.mxu0 %v5637
      %5940 = vmatpush.msra.mxu0 %v5636
      %5941 = vmatpush.msra.mxu0 %v5635
      %5942 = vmatpush.msra.mxu0 %v5634
      %5943 = vmatmul.f32.gmra.mxu0 %v5725
      %v5944 = vpop.f32.mrf.mxu0
      %v5945 = vadd.f32 %v238, %v5944
      %5946 = vdwg.mxu0
      %5947 = vmatpush.msra.mxu0 0.0
      %5948 = vmatpush.msra.mxu0 0.0
      %5949 = vmatpush.msra.mxu0 0.0
      %5950 = vmatpush.msra.mxu0 0.0
      %5951 = vmatpush.msra.mxu0 0.0
      %5952 = vmatpush.msra.mxu0 0.0
      %5953 = vmatpush.msra.mxu0 0.0
      %5954 = vmatpush.msra.mxu0 0.0
      %5955 = vmatpush.msra.mxu0 0.0
      %5956 = vmatpush.msra.mxu0 0.0
      %5957 = vmatpush.msra.mxu0 0.0
      %5958 = vmatpush.msra.mxu0 0.0
      %5959 = vmatpush.msra.mxu0 %v5641
      %5960 = vmatpush.msra.mxu0 %v5640
      %5961 = vmatpush.msra.mxu0 %v5639
      %5962 = vmatpush.msra.mxu0 %v5638
      %5963 = vmatmul.f32.gmra.mxu0 %v5725
      %v5964 = vpop.f32.mrf.mxu0
      %v5965 = vadd.f32 %v239, %v5964
      %5966 = vdwg.mxu0
      %5967 = vmatpush.msra.mxu0 0.0
      %5968 = vmatpush.msra.mxu0 0.0
      %5969 = vmatpush.msra.mxu0 0.0
      %5970 = vmatpush.msra.mxu0 0.0
      %5971 = vmatpush.msra.mxu0 0.0
      %5972 = vmatpush.msra.mxu0 0.0
      %5973 = vmatpush.msra.mxu0 0.0
      %5974 = vmatpush.msra.mxu0 0.0
      %5975 = vmatpush.msra.mxu0 0.0
      %5976 = vmatpush.msra.mxu0 0.0
      %5977 = vmatpush.msra.mxu0 0.0
      %5978 = vmatpush.msra.mxu0 0.0
      %5979 = vmatpush.msra.mxu0 %v5645
      %5980 = vmatpush.msra.mxu0 %v5644
      %5981 = vmatpush.msra.mxu0 %v5643
      %5982 = vmatpush.msra.mxu0 %v5642
      %5983 = vmatmul.f32.gmra.mxu0 %v5725
      %v5984 = vpop.f32.mrf.mxu0
      %v5985 = vadd.f32 %v240, %v5984
      %5986 = vdwg.mxu0
      %5987 = vmatpush.msra.mxu0 0.0
      %5988 = vmatpush.msra.mxu0 0.0
      %5989 = vmatpush.msra.mxu0 0.0
      %5990 = vmatpush.msra.mxu0 0.0
      %5991 = vmatpush.msra.mxu0 0.0
      %5992 = vmatpush.msra.mxu0 0.0
      %5993 = vmatpush.msra.mxu0 0.0
      %5994 = vmatpush.msra.mxu0 0.0
      %5995 = vmatpush.msra.mxu0 0.0
      %5996 = vmatpush.msra.mxu0 0.0
      %5997 = vmatpush.msra.mxu0 0.0
      %5998 = vmatpush.msra.mxu0 0.0
      %5999 = vmatpush.msra.mxu0 %v5649
      %6000 = vmatpush.msra.mxu0 %v5648
      %6001 = vmatpush.msra.mxu0 %v5647
      %6002 = vmatpush.msra.mxu0 %v5646
      %6003 = vmatmul.f32.gmra.mxu0 %v5725
      %v6004 = vpop.f32.mrf.mxu0
      %v6005 = vadd.f32 %v241, %v6004
      %6006 = vdwg.mxu0
      %6007 = vmatpush.msra.mxu0 0.0
      %6008 = vmatpush.msra.mxu0 0.0
      %6009 = vmatpush.msra.mxu0 0.0
      %6010 = vmatpush.msra.mxu0 0.0
      %6011 = vmatpush.msra.mxu0 0.0
      %6012 = vmatpush.msra.mxu0 0.0
      %6013 = vmatpush.msra.mxu0 0.0
      %6014 = vmatpush.msra.mxu0 0.0
      %6015 = vmatpush.msra.mxu0 0.0
      %6016 = vmatpush.msra.mxu0 0.0
      %6017 = vmatpush.msra.mxu0 0.0
      %6018 = vmatpush.msra.mxu0 0.0
      %6019 = vmatpush.msra.mxu0 %v5653
      %6020 = vmatpush.msra.mxu0 %v5652
      %6021 = vmatpush.msra.mxu0 %v5651
      %6022 = vmatpush.msra.mxu0 %v5650
      %6023 = vmatmul.f32.gmra.mxu0 %v5725
      %v6024 = vpop.f32.mrf.mxu0
      %v6025 = vadd.f32 %v242, %v6024
      %6026 = vdwg.mxu0
      %6027 = vmatpush.msra.mxu0 0.0
      %6028 = vmatpush.msra.mxu0 0.0
      %6029 = vmatpush.msra.mxu0 0.0
      %6030 = vmatpush.msra.mxu0 0.0
      %6031 = vmatpush.msra.mxu0 0.0
      %6032 = vmatpush.msra.mxu0 0.0
      %6033 = vmatpush.msra.mxu0 0.0
      %6034 = vmatpush.msra.mxu0 0.0
      %6035 = vmatpush.msra.mxu0 0.0
      %6036 = vmatpush.msra.mxu0 0.0
      %6037 = vmatpush.msra.mxu0 0.0
      %6038 = vmatpush.msra.mxu0 0.0
      %6039 = vmatpush.msra.mxu0 %v5657
      %6040 = vmatpush.msra.mxu0 %v5656
      %6041 = vmatpush.msra.mxu0 %v5655
      %6042 = vmatpush.msra.mxu0 %v5654
      %6043 = vmatmul.f32.gmra.mxu0 %v5725
      %v6044 = vpop.f32.mrf.mxu0
      %v6045 = vadd.f32 %v243, %v6044
      %6046 = vdwg.mxu0
      %6047 = vmatpush.msra.mxu0 0.0
      %6048 = vmatpush.msra.mxu0 0.0
      %6049 = vmatpush.msra.mxu0 0.0
      %6050 = vmatpush.msra.mxu0 0.0
      %6051 = vmatpush.msra.mxu0 0.0
      %6052 = vmatpush.msra.mxu0 0.0
      %6053 = vmatpush.msra.mxu0 0.0
      %6054 = vmatpush.msra.mxu0 0.0
      %6055 = vmatpush.msra.mxu0 0.0
      %6056 = vmatpush.msra.mxu0 0.0
      %6057 = vmatpush.msra.mxu0 0.0
      %6058 = vmatpush.msra.mxu0 0.0
      %6059 = vmatpush.msra.mxu0 %v5661
      %6060 = vmatpush.msra.mxu0 %v5660
      %6061 = vmatpush.msra.mxu0 %v5659
      %6062 = vmatpush.msra.mxu0 %v5658
      %6063 = vmatmul.f32.gmra.mxu0 %v5725
      %v6064 = vpop.f32.mrf.mxu0
      %v6065 = vadd.f32 %v244, %v6064
      %6066 = vdwg.mxu0
      %6067 = vmatpush.msra.mxu0 0.0
      %6068 = vmatpush.msra.mxu0 0.0
      %6069 = vmatpush.msra.mxu0 0.0
      %6070 = vmatpush.msra.mxu0 0.0
      %6071 = vmatpush.msra.mxu0 0.0
      %6072 = vmatpush.msra.mxu0 0.0
      %6073 = vmatpush.msra.mxu0 0.0
      %6074 = vmatpush.msra.mxu0 0.0
      %6075 = vmatpush.msra.mxu0 0.0
      %6076 = vmatpush.msra.mxu0 0.0
      %6077 = vmatpush.msra.mxu0 0.0
      %6078 = vmatpush.msra.mxu0 0.0
      %6079 = vmatpush.msra.mxu0 %v5665
      %6080 = vmatpush.msra.mxu0 %v5664
      %6081 = vmatpush.msra.mxu0 %v5663
      %6082 = vmatpush.msra.mxu0 %v5662
      %6083 = vmatmul.f32.gmra.mxu0 %v5725
      %v6084 = vpop.f32.mrf.mxu0
      %v6085 = vadd.f32 %v245, %v6084
      %6086 = vdwg.mxu0
      %6087 = vmatpush.msra.mxu0 0.0
      %6088 = vmatpush.msra.mxu0 0.0
      %6089 = vmatpush.msra.mxu0 0.0
      %6090 = vmatpush.msra.mxu0 0.0
      %6091 = vmatpush.msra.mxu0 0.0
      %6092 = vmatpush.msra.mxu0 0.0
      %6093 = vmatpush.msra.mxu0 0.0
      %6094 = vmatpush.msra.mxu0 0.0
      %6095 = vmatpush.msra.mxu0 0.0
      %6096 = vmatpush.msra.mxu0 0.0
      %6097 = vmatpush.msra.mxu0 0.0
      %6098 = vmatpush.msra.mxu0 0.0
      %6099 = vmatpush.msra.mxu0 %v5669
      %6100 = vmatpush.msra.mxu0 %v5668
      %6101 = vmatpush.msra.mxu0 %v5667
      %6102 = vmatpush.msra.mxu0 %v5666
      %6103 = vmatmul.f32.gmra.mxu0 %v5725
      %v6104 = vpop.f32.mrf.mxu0
      %v6105 = vadd.f32 %v246, %v6104
      %6106 = vdwg.mxu0
      %6107 = vmatpush.msra.mxu0 0.0
      %6108 = vmatpush.msra.mxu0 0.0
      %6109 = vmatpush.msra.mxu0 0.0
      %6110 = vmatpush.msra.mxu0 0.0
      %6111 = vmatpush.msra.mxu0 0.0
      %6112 = vmatpush.msra.mxu0 0.0
      %6113 = vmatpush.msra.mxu0 0.0
      %6114 = vmatpush.msra.mxu0 0.0
      %6115 = vmatpush.msra.mxu0 0.0
      %6116 = vmatpush.msra.mxu0 0.0
      %6117 = vmatpush.msra.mxu0 0.0
      %6118 = vmatpush.msra.mxu0 0.0
      %6119 = vmatpush.msra.mxu0 %v5673
      %6120 = vmatpush.msra.mxu0 %v5672
      %6121 = vmatpush.msra.mxu0 %v5671
      %6122 = vmatpush.msra.mxu0 %v5670
      %6123 = vmatmul.f32.gmra.mxu0 %v5725
      %v6124 = vpop.f32.mrf.mxu0
      %v6125 = vadd.f32 %v247, %v6124
      %6126 = vdwg.mxu0
      %6127 = vmatpush.msra.mxu0 0.0
      %6128 = vmatpush.msra.mxu0 0.0
      %6129 = vmatpush.msra.mxu0 0.0
      %6130 = vmatpush.msra.mxu0 0.0
      %6131 = vmatpush.msra.mxu0 0.0
      %6132 = vmatpush.msra.mxu0 0.0
      %6133 = vmatpush.msra.mxu0 0.0
      %6134 = vmatpush.msra.mxu0 0.0
      %6135 = vmatpush.msra.mxu0 0.0
      %6136 = vmatpush.msra.mxu0 0.0
      %6137 = vmatpush.msra.mxu0 0.0
      %6138 = vmatpush.msra.mxu0 0.0
      %6139 = vmatpush.msra.mxu0 %v5677
      %6140 = vmatpush.msra.mxu0 %v5676
      %6141 = vmatpush.msra.mxu0 %v5675
      %6142 = vmatpush.msra.mxu0 %v5674
      %6143 = vmatmul.f32.gmra.mxu0 %v5725
      %v6144 = vpop.f32.mrf.mxu0
      %v6145 = vadd.f32 %v248, %v6144
      %6146 = vdwg.mxu0
      %6147 = vmatpush.msra.mxu0 0.0
      %6148 = vmatpush.msra.mxu0 0.0
      %6149 = vmatpush.msra.mxu0 0.0
      %6150 = vmatpush.msra.mxu0 0.0
      %6151 = vmatpush.msra.mxu0 0.0
      %6152 = vmatpush.msra.mxu0 0.0
      %6153 = vmatpush.msra.mxu0 0.0
      %6154 = vmatpush.msra.mxu0 0.0
      %6155 = vmatpush.msra.mxu0 0.0
      %6156 = vmatpush.msra.mxu0 0.0
      %6157 = vmatpush.msra.mxu0 0.0
      %6158 = vmatpush.msra.mxu0 0.0
      %6159 = vmatpush.msra.mxu0 %v5681
      %6160 = vmatpush.msra.mxu0 %v5680
      %6161 = vmatpush.msra.mxu0 %v5679
      %6162 = vmatpush.msra.mxu0 %v5678
      %6163 = vmatmul.f32.gmra.mxu0 %v5725
      %v6164 = vpop.f32.mrf.mxu0
      %v6165 = vadd.f32 %v249, %v6164
      %6166 = vdwg.mxu0
      %6167 = vmatpush.msra.mxu0 0.0
      %6168 = vmatpush.msra.mxu0 0.0
      %6169 = vmatpush.msra.mxu0 0.0
      %6170 = vmatpush.msra.mxu0 0.0
      %6171 = vmatpush.msra.mxu0 0.0
      %6172 = vmatpush.msra.mxu0 0.0
      %6173 = vmatpush.msra.mxu0 0.0
      %6174 = vmatpush.msra.mxu0 0.0
      %6175 = vmatpush.msra.mxu0 0.0
      %6176 = vmatpush.msra.mxu0 0.0
      %6177 = vmatpush.msra.mxu0 0.0
      %6178 = vmatpush.msra.mxu0 0.0
      %6179 = vmatpush.msra.mxu0 %v5685
      %6180 = vmatpush.msra.mxu0 %v5684
      %6181 = vmatpush.msra.mxu0 %v5683
      %6182 = vmatpush.msra.mxu0 %v5682
      %6183 = vmatmul.f32.gmra.mxu0 %v5725
      %v6184 = vpop.f32.mrf.mxu0
      %v6185 = vadd.f32 %v250, %v6184
      %6186 = vdwg.mxu0
      %6187 = vmatpush.msra.mxu0 0.0
      %6188 = vmatpush.msra.mxu0 0.0
      %6189 = vmatpush.msra.mxu0 0.0
      %6190 = vmatpush.msra.mxu0 0.0
      %6191 = vmatpush.msra.mxu0 0.0
      %6192 = vmatpush.msra.mxu0 0.0
      %6193 = vmatpush.msra.mxu0 0.0
      %6194 = vmatpush.msra.mxu0 0.0
      %6195 = vmatpush.msra.mxu0 0.0
      %6196 = vmatpush.msra.mxu0 0.0
      %6197 = vmatpush.msra.mxu0 0.0
      %6198 = vmatpush.msra.mxu0 0.0
      %6199 = vmatpush.msra.mxu0 %v5689
      %6200 = vmatpush.msra.mxu0 %v5688
      %6201 = vmatpush.msra.mxu0 %v5687
      %6202 = vmatpush.msra.mxu0 %v5686
      %6203 = vmatmul.f32.gmra.mxu0 %v5725
      %v6204 = vpop.f32.mrf.mxu0
      %v6205 = vadd.f32 %v251, %v6204
      %6206 = vdwg.mxu0
      %6207 = vmatpush.msra.mxu0 0.0
      %6208 = vmatpush.msra.mxu0 0.0
      %6209 = vmatpush.msra.mxu0 0.0
      %6210 = vmatpush.msra.mxu0 0.0
      %6211 = vmatpush.msra.mxu0 0.0
      %6212 = vmatpush.msra.mxu0 0.0
      %6213 = vmatpush.msra.mxu0 0.0
      %6214 = vmatpush.msra.mxu0 0.0
      %6215 = vmatpush.msra.mxu0 0.0
      %6216 = vmatpush.msra.mxu0 0.0
      %6217 = vmatpush.msra.mxu0 0.0
      %6218 = vmatpush.msra.mxu0 0.0
      %6219 = vmatpush.msra.mxu0 %v5693
      %6220 = vmatpush.msra.mxu0 %v5692
      %6221 = vmatpush.msra.mxu0 %v5691
      %6222 = vmatpush.msra.mxu0 %v5690
      %6223 = vmatmul.f32.gmra.mxu0 %v5725
      %v6224 = vpop.f32.mrf.mxu0
      %v6225 = vadd.f32 %v252, %v6224
      %6226 = vdwg.mxu0
      %6227 = vmatpush.msra.mxu0 0.0
      %6228 = vmatpush.msra.mxu0 0.0
      %6229 = vmatpush.msra.mxu0 0.0
      %6230 = vmatpush.msra.mxu0 0.0
      %6231 = vmatpush.msra.mxu0 0.0
      %6232 = vmatpush.msra.mxu0 0.0
      %6233 = vmatpush.msra.mxu0 0.0
      %6234 = vmatpush.msra.mxu0 0.0
      %6235 = vmatpush.msra.mxu0 0.0
      %6236 = vmatpush.msra.mxu0 0.0
      %6237 = vmatpush.msra.mxu0 0.0
      %6238 = vmatpush.msra.mxu0 0.0
      %6239 = vmatpush.msra.mxu0 %v5697
      %6240 = vmatpush.msra.mxu0 %v5696
      %6241 = vmatpush.msra.mxu0 %v5695
      %6242 = vmatpush.msra.mxu0 %v5694
      %6243 = vmatmul.f32.gmra.mxu0 %v5725
      %v6244 = vpop.f32.mrf.mxu0
      %v6245 = vadd.f32 %v253, %v6244
      %6246 = vdwg.mxu0
      %6247 = vmatpush.msra.mxu0 0.0
      %6248 = vmatpush.msra.mxu0 0.0
      %6249 = vmatpush.msra.mxu0 0.0
      %6250 = vmatpush.msra.mxu0 0.0
      %6251 = vmatpush.msra.mxu0 0.0
      %6252 = vmatpush.msra.mxu0 0.0
      %6253 = vmatpush.msra.mxu0 0.0
      %6254 = vmatpush.msra.mxu0 0.0
      %6255 = vmatpush.msra.mxu0 0.0
      %6256 = vmatpush.msra.mxu0 0.0
      %6257 = vmatpush.msra.mxu0 0.0
      %6258 = vmatpush.msra.mxu0 0.0
      %6259 = vmatpush.msra.mxu0 %v5701
      %6260 = vmatpush.msra.mxu0 %v5700
      %6261 = vmatpush.msra.mxu0 %v5699
      %6262 = vmatpush.msra.mxu0 %v5698
      %6263 = vmatmul.f32.gmra.mxu0 %v5725
      %v6264 = vpop.f32.mrf.mxu0
      %v6265 = vadd.f32 %v254, %v6264
      %6266 = vdwg.mxu0
      %6267 = vmatpush.msra.mxu0 0.0
      %6268 = vmatpush.msra.mxu0 0.0
      %6269 = vmatpush.msra.mxu0 0.0
      %6270 = vmatpush.msra.mxu0 0.0
      %6271 = vmatpush.msra.mxu0 0.0
      %6272 = vmatpush.msra.mxu0 0.0
      %6273 = vmatpush.msra.mxu0 0.0
      %6274 = vmatpush.msra.mxu0 0.0
      %6275 = vmatpush.msra.mxu0 0.0
      %6276 = vmatpush.msra.mxu0 0.0
      %6277 = vmatpush.msra.mxu0 0.0
      %6278 = vmatpush.msra.mxu0 0.0
      %6279 = vmatpush.msra.mxu0 %v5705
      %6280 = vmatpush.msra.mxu0 %v5704
      %6281 = vmatpush.msra.mxu0 %v5703
      %6282 = vmatpush.msra.mxu0 %v5702
      %6283 = vmatmul.f32.gmra.mxu0 %v5725
      %v6284 = vpop.f32.mrf.mxu0
      %v6285 = vadd.f32 %v255, %v6284
      %6286 = vdwg.mxu0
      %6287 = vmatpush.msra.mxu0 0.0
      %6288 = vmatpush.msra.mxu0 0.0
      %6289 = vmatpush.msra.mxu0 0.0
      %6290 = vmatpush.msra.mxu0 0.0
      %6291 = vmatpush.msra.mxu0 0.0
      %6292 = vmatpush.msra.mxu0 0.0
      %6293 = vmatpush.msra.mxu0 0.0
      %6294 = vmatpush.msra.mxu0 0.0
      %6295 = vmatpush.msra.mxu0 0.0
      %6296 = vmatpush.msra.mxu0 0.0
      %6297 = vmatpush.msra.mxu0 0.0
      %6298 = vmatpush.msra.mxu0 0.0
      %6299 = vmatpush.msra.mxu0 %v5709
      %6300 = vmatpush.msra.mxu0 %v5708
      %6301 = vmatpush.msra.mxu0 %v5707
      %6302 = vmatpush.msra.mxu0 %v5706
      %6303 = vmatmul.f32.gmra.mxu0 %v5725
      %v6304 = vpop.f32.mrf.mxu0
      %v6305 = vadd.f32 %v256, %v6304
      %6306 = vdwg.mxu0
      %6307 = vmatpush.msra.mxu0 0.0
      %6308 = vmatpush.msra.mxu0 0.0
      %6309 = vmatpush.msra.mxu0 0.0
      %6310 = vmatpush.msra.mxu0 0.0
      %6311 = vmatpush.msra.mxu0 0.0
      %6312 = vmatpush.msra.mxu0 0.0
      %6313 = vmatpush.msra.mxu0 0.0
      %6314 = vmatpush.msra.mxu0 0.0
      %6315 = vmatpush.msra.mxu0 0.0
      %6316 = vmatpush.msra.mxu0 0.0
      %6317 = vmatpush.msra.mxu0 0.0
      %6318 = vmatpush.msra.mxu0 0.0
      %6319 = vmatpush.msra.mxu0 %v5713
      %6320 = vmatpush.msra.mxu0 %v5712
      %6321 = vmatpush.msra.mxu0 %v5711
      %6322 = vmatpush.msra.mxu0 %v5710
      %6323 = vmatmul.f32.gmra.mxu0 %v5725
      %v6324 = vpop.f32.mrf.mxu0
      %v6325 = vadd.f32 %v257, %v6324
      %6326 = vdwg.mxu0
      %6327 = vmatpush.msra.mxu0 0.0
      %6328 = vmatpush.msra.mxu0 0.0
      %6329 = vmatpush.msra.mxu0 0.0
      %6330 = vmatpush.msra.mxu0 0.0
      %6331 = vmatpush.msra.mxu0 0.0
      %6332 = vmatpush.msra.mxu0 0.0
      %6333 = vmatpush.msra.mxu0 0.0
      %6334 = vmatpush.msra.mxu0 0.0
      %6335 = vmatpush.msra.mxu0 0.0
      %6336 = vmatpush.msra.mxu0 0.0
      %6337 = vmatpush.msra.mxu0 0.0
      %6338 = vmatpush.msra.mxu0 0.0
      %6339 = vmatpush.msra.mxu0 %v5717
      %6340 = vmatpush.msra.mxu0 %v5716
      %6341 = vmatpush.msra.mxu0 %v5715
      %6342 = vmatpush.msra.mxu0 %v5714
      %6343 = vmatmul.f32.gmra.mxu0 %v5725
      %v6344 = vpop.f32.mrf.mxu0
      %v6345 = vadd.f32 %v258, %v6344
      %6346 = vdwg.mxu0
      %6347 = vmatpush.msra.mxu0 0.0
      %6348 = vmatpush.msra.mxu0 0.0
      %6349 = vmatpush.msra.mxu0 0.0
      %6350 = vmatpush.msra.mxu0 0.0
      %6351 = vmatpush.msra.mxu0 0.0
      %6352 = vmatpush.msra.mxu0 0.0
      %6353 = vmatpush.msra.mxu0 0.0
      %6354 = vmatpush.msra.mxu0 0.0
      %6355 = vmatpush.msra.mxu0 0.0
      %6356 = vmatpush.msra.mxu0 0.0
      %6357 = vmatpush.msra.mxu0 0.0
      %6358 = vmatpush.msra.mxu0 0.0
      %6359 = vmatpush.msra.mxu0 %v5721
      %6360 = vmatpush.msra.mxu0 %v5720
      %6361 = vmatpush.msra.mxu0 %v5719
      %6362 = vmatpush.msra.mxu0 %v5718
      %6363 = vmatmul.f32.gmra.mxu0 %v5725
      %v6364 = vpop.f32.mrf.mxu0
      %v6365 = vadd.f32 %v259, %v6364
      %6366 = vdwg.mxu0
      %6367 = vst [vmem:[%s226] sm:$0xff] %v5745
      %6368 = vst [vmem:[%s226 + $0x8] sm:$0xff] %v5765
      %6369 = vst [vmem:[%s226 + $0x10] sm:$0xff] %v5785
      %6370 = vst [vmem:[%s226 + $0x18] sm:$0xff] %v5805
      %6371 = vst [vmem:[%s226 + $0x20] sm:$0xff] %v5825
      %6372 = vst [vmem:[%s226 + $0x28] sm:$0xff] %v5845
      %6373 = vst [vmem:[%s226 + $0x30] sm:$0xff] %v5865
      %6374 = vst [vmem:[%s226 + $0x38] sm:$0xff] %v5885
      %6375 = vst [vmem:[%s226 + $0x40] sm:$0xff] %v5905
      %6376 = vst [vmem:[%s226 + $0x48] sm:$0xff] %v5925
      %6377 = vst [vmem:[%s226 + $0x50] sm:$0xff] %v5945
      %6378 = vst [vmem:[%s226 + $0x58] sm:$0xff] %v5965
      %6379 = vst [vmem:[%s226 + $0x60] sm:$0xff] %v5985
      %6380 = vst [vmem:[%s226 + $0x68] sm:$0xff] %v6005
      %6381 = vst [vmem:[%s226 + $0x70] sm:$0xff] %v6025
      %6382 = vst [vmem:[%s226 + $0x78] sm:$0xff] %v6045
      %6383 = vst [vmem:[%s226 + $0x80] sm:$0xff] %v6065
      %6384 = vst [vmem:[%s226 + $0x88] sm:$0xff] %v6085
      %6385 = vst [vmem:[%s226 + $0x90] sm:$0xff] %v6105
      %6386 = vst [vmem:[%s226 + $0x98] sm:$0xff] %v6125
      %6387 = vst [vmem:[%s226 + $0xa0] sm:$0xff] %v6145
      %6388 = vst [vmem:[%s226 + $0xa8] sm:$0xff] %v6165
      %6389 = vst [vmem:[%s226 + $0xb0] sm:$0xff] %v6185
      %6390 = vst [vmem:[%s226 + $0xb8] sm:$0xff] %v6205
      %6391 = vst [vmem:[%s226 + $0xc0] sm:$0xff] %v6225
      %6392 = vst [vmem:[%s226 + $0xc8] sm:$0xff] %v6245
      %6393 = vst [vmem:[%s226 + $0xd0] sm:$0xff] %v6265
      %6394 = vst [vmem:[%s226 + $0xd8] sm:$0xff] %v6285
      %6395 = vst [vmem:[%s226 + $0xe0] sm:$0xff] %v6305
      %6396 = vst [vmem:[%s226 + $0xe8] sm:$0xff] %v6325
      %6397 = vst [vmem:[%s226 + $0xf0] sm:$0xff] %v6345
      %6398 = vst [vmem:[%s226 + $0xf8] sm:$0xff] %v6365
      %s6399 = smul.u32 32, %s16
      %p6400 = scmp.lt.s32.totalorder %s6399, 63
      %s6401 = scalar_select %p6400, %s6399, 63
      %s6402 = smul.addr %s6401, 8
      %s6403 = scalar_lea.vmem %s5, %s6402
      // Predicated region
      $region41: #{feed_forward_residual_block.1} parent=39 // pred_check
        %p6404 = pneg %p144
      $region42: #{feed_forward_residual_block.1} parent=39 // pred_check_branch
        %6406 = sbr.rel (%p6404) target = $region44
      $region43: #{feed_forward_residual_block.1} parent=39 // pred_region
        %s6407 = smul.u32 32, %s16
      $region44: #{feed_forward_residual_block.1} parent=39 // pred_fallthru
        _
    $region40: #{feed_forward_residual_block.1} parent=5 // pred_fallthru
      _
    %p6408 = scmp.le.s32.totalorder 2, %s11
    // Predicated region
    $region45: #{feed_forward_residual_block.1} parent=5 // pred_check
      %p6409 = pneg %p6408
    $region46: #{feed_forward_residual_block.1} parent=5 // pred_check_branch
      %6411 = sbr.rel (%p6409) target = $region48
    $region47: #{feed_forward_residual_block.1} parent=5 // pred_region
      %s6412 = ssub.s32 %s11, 2
      // Predicated region
      $region49: #{feed_forward_residual_block.1} parent=47 // pred_check
        %p6413 = pneg %p150
      $region50: #{feed_forward_residual_block.1} parent=47 // pred_check_branch
        %6415 = sbr.rel (%p6413) target = $region52
      $region51: #{feed_forward_residual_block.1} parent=47 // pred_region
        %s6416 = smul.u32 32, %s17
        %p6417 = scmp.lt.s32.totalorder %s6416, 63
        %s6418 = scalar_select %p6417, %s6416, 63
        %s6419 = smul.addr %s6418, 8
        %s6420 = scalar_lea.vmem %s5, %s6419
      $region52: #{feed_forward_residual_block.1} parent=47 // pred_fallthru
        _
    $region48: #{feed_forward_residual_block.1} parent=5 // pred_fallthru
      _
  $region6: #{feed_forward_residual_block.1} parent=0 // loop_footer
    %s15 = sadd.s32 1, %s11
  $region7: #{feed_forward_residual_block.1} parent=0 // loop_footer_branch
    %10 = sbr.rel target = $region3
  $region8: #{feed_forward_residual_block.1} parent=0 // loop_exit
    _

</llo_original>
